<compile_context>
chip_gen: v6e
topology: v6e:2x2x1
jax: 0.10.0
libtpu: 0.0.40
codegen_flags: <defaults>
</compile_context>

<pallas_src>
import math
import functools

import numpy as np
import jax
import jax.numpy as jnp
from jax.experimental import pallas as pl
from jax.experimental.pallas import tpu as pltpu


def _rbf_kernel(x1_ref, x2t_ref, x2flat_ref, sel_ref, expand_ref,
                kappa_ref, distsq_ref, gamma_ref, diff_ref, kgrad_ref,
                *, num_particles, act_dim):
    N = num_particles
    D = act_dim
    L = N * D

    x1 = x1_ref[...]                                     # (Bt, N, D)
    x2t = x2t_ref[...]                                   # (Bt, D, N)
    bt = x1.shape[0]

    # ------------------------------------------------------------------ dist_sq
    # Per-d lane-dense (N in the lane dim) difference planes accumulated on the
    # VPU.  Exact: same diff-based formula as torch.
    dist_sq = jnp.zeros((bt, N, N), jnp.float32)
    for d in range(D):
        diff_d = x1[:, :, d:d + 1] - x2t[:, d:d + 1, :]            # (Bt,N,N)
        dist_sq = dist_sq + diff_d * diff_d
    distsq_ref[...] = dist_sq

    # -------------------------------------------------------------- lower median
    # torch.median == k-th smallest with k = (N*N-1)//2.  dist_sq >= 0, so its
    # f32 bit pattern is order-preserving as int32 and we bisect the 31 value
    # bits MSB-first.  The per-step count #(x < test) is offloaded to the MXU
    # (0/1 mask contracted with ones -> exact counts in f32 accumulation); only
    # a small sublane reduce remains.  The final prefix is exactly the bit
    # pattern of the k-th smallest element, so it is bitcast back directly.
    d_int = pltpu.bitcast(dist_sq, jnp.int32)                       # (Bt,N,N)
    k_rank = (N * N - 1) // 2                                       # 0-indexed lower median
    ones_col = jnp.ones((bt, N, 1), jnp.float32)
    prefix = jnp.zeros((bt, 1, 1), jnp.int32)
    for bit in range(30, -1, -1):
        test = prefix | (1 << bit)                                  # (Bt,1,1)
        lt = (d_int < test).astype(jnp.float32)                     # (Bt,N,N) in {0,1}
        row_cnt = jnp.einsum('bij,bjk->bik', lt, ones_col,
                             preferred_element_type=jnp.float32)    # (Bt,N,1)  MXU
        cnt = jnp.sum(row_cnt, axis=1, keepdims=True)               # (Bt,1,1)
        prefix = jnp.where(cnt <= k_rank, test, prefix)
    median_sq = pltpu.bitcast(prefix, jnp.float32)                  # (Bt,1,1) exact

    h = median_sq / (2.0 * math.log(N + 1.0))
    sigma = jnp.sqrt(h)
    gamma = 1.0 / (1e-8 + 2.0 * sigma * sigma)                      # (Bt,1,1)
    gamma_ref[...] = gamma

    # Re-read dist_sq from its (VMEM-resident) output block: keeps the live set
    # across the 31-step loop minimal.
    dist_sq = distsq_ref[...]
    kappa = jnp.exp(-gamma * dist_sq)                               # (Bt,N,N)
    kappa_ref[...] = kappa

    # ----------------------------------------- diff / kappa_grad (interleaved)
    # Big outputs are built directly in the module's flat memory order
    # l = j*D + d (row-major (..., N, D)), so the wrapper reshape back to
    # (B, N, N, D) is free and no post-kernel transpose is needed.
    sel = sel_ref[...]                                              # (1,D,L): sel[0,d,l] = [l%D==d]
    x1_rep = jnp.zeros((bt, N, L), jnp.float32)
    for d in range(D):
        # lane-splat of x1[:, :, d] masked (exactly, via 0/1 mult) into lanes l%D==d
        x1_rep = x1_rep + x1[:, :, d:d + 1] * sel[:, d:d + 1, :]
    diff_full = x1_rep - x2flat_ref[...]                            # (Bt,N,L)
    diff_ref[...] = diff_full

    # w_rep[b,i,j*D+d] = (-2*gamma*kappa)[b,i,j]: lane expansion N -> N*D via a
    # one-hot matmul on the MXU.  w is split into bf16 hi/lo parts so the
    # replication is f32-accurate even if the MXU rounds operands to bf16.
    expand = jnp.broadcast_to(expand_ref[...], (bt, N, L))          # (Bt,N,L) one-hot
    w = (-2.0 * gamma) * kappa                                      # (Bt,N,N)
    w_hi = w.astype(jnp.bfloat16).astype(jnp.float32)
    w_lo = w - w_hi
    w_rep = (jnp.einsum('bij,bjl->bil', w_hi, expand,
                        preferred_element_type=jnp.float32)
             + jnp.einsum('bij,bjl->bil', w_lo, expand,
                          preferred_element_type=jnp.float32))      # (Bt,N,L)
    kgrad_ref[...] = diff_full * w_rep


def _vmem_limit_bytes():
    """Generation-aware scoped-VMEM request (v5e/v6e: 128 MiB phys, v7x: 64 MiB)."""
    try:
        cap = pltpu.get_tpu_info().vmem_capacity_bytes
    except Exception:
        cap = 64 * 1024 * 1024            # conservative (v7x-sized) fallback
    return max(min(int(cap * 0.85), 100 * 1024 * 1024), 24 * 1024 * 1024)


def _pick_batch_block(B, N, D, budget_bytes):
    """Largest divisor of B whose per-step working set fits the VMEM budget,
    keeping >= 2 grid steps so v7x can split the batch axis across both cores."""
    L = N * D
    io = 4 * (3 * N * D + 2 * N * N + 1 + 2 * N * L)    # pallas-managed I/O per batch elem
    scratch = 4 * (8 * N * N + 8 * N * L)               # in-kernel intermediates (generous)
    per_elem = 2 * io + scratch                         # I/O tiles are double-buffered
    bt = max(1, min(B, budget_bytes // max(per_elem, 1)))
    if B > 1:
        bt = min(bt, (B + 1) // 2)                      # >= 2 grid steps
    while B % bt:                                       # must divide B (else fall back)
        bt -= 1
    return bt


def rbf_forward(input_1, input_2):
    """Pallas RBF forward (default path). input_1, input_2: (B, N, D) float32."""
    B, N, D = input_1.shape
    assert input_2.shape == (B, N, D)
    L = N * D

    # Tiny layout-helper inputs (negligible HBM traffic, built host-side):
    x2t = jnp.transpose(input_2, (0, 2, 1))                      # (B, D, N)
    x2flat = input_2.reshape(B, 1, L)                            # free view: l = j*D + d
    l_idx = np.arange(L)
    sel = jnp.asarray((l_idx[None, :] % D) == np.arange(D)[:, None],
                      dtype=jnp.float32).reshape(1, D, L)        # one-hot over d = l % D
    expand = jnp.asarray((l_idx[None, :] // D) == np.arange(N)[:, None],
                         dtype=jnp.float32).reshape(1, N, L)     # one-hot over j = l // D

    vmem_limit = _vmem_limit_bytes()
    Bt = _pick_batch_block(B, N, D, vmem_limit // 2)
    grid = (B // Bt,)

    kernel = functools.partial(_rbf_kernel, num_particles=N, act_dim=D)

    out_shape = (
        jax.ShapeDtypeStruct((B, N, N), jnp.float32),            # kappa
        jax.ShapeDtypeStruct((B, N, N), jnp.float32),            # dist_sq
        jax.ShapeDtypeStruct((B, 1, 1), jnp.float32),            # gamma
        jax.ShapeDtypeStruct((B, N, L), jnp.float32),            # diff   (flat (N, D) order)
        jax.ShapeDtypeStruct((B, N, L), jnp.float32),            # kappa_grad (flat order)
    )

    grid_spec = pltpu.PrefetchScalarGridSpec(
        num_scalar_prefetch=0,
        grid=grid,
        in_specs=[
            pl.BlockSpec((Bt, N, D), lambda b: (b, 0, 0)),
            pl.BlockSpec((Bt, D, N), lambda b: (b, 0, 0)),
            pl.BlockSpec((Bt, 1, L), lambda b: (b, 0, 0)),
            pl.BlockSpec((1, D, L), lambda b: (0, 0, 0)),
            pl.BlockSpec((1, N, L), lambda b: (0, 0, 0)),
        ],
        out_specs=[
            pl.BlockSpec((Bt, N, N), lambda b: (b, 0, 0)),
            pl.BlockSpec((Bt, N, N), lambda b: (b, 0, 0)),
            pl.BlockSpec((Bt, 1, 1), lambda b: (b, 0, 0)),
            pl.BlockSpec((Bt, N, L), lambda b: (b, 0, 0)),
            pl.BlockSpec((Bt, N, L), lambda b: (b, 0, 0)),
        ],
    )

    kappa, dist_sq, gamma, diff_flat, kgrad_flat = pl.pallas_call(
        kernel,
        out_shape=out_shape,
        grid_spec=grid_spec,
        compiler_params=pltpu.CompilerParams(
            dimension_semantics=("parallel",),
            vmem_limit_bytes=vmem_limit,
        ),
    )(input_1, x2t, x2flat, sel, expand)

    # Free (contiguous) reshapes back to the module's (B, N, N, D) convention —
    # no data movement, unlike the previous transpose-based tail.
    diff = diff_flat.reshape(B, N, N, D)
    kappa_grad = kgrad_flat.reshape(B, N, N, D)
    return kappa, diff, dist_sq, gamma, kappa_grad


def rbf_reference(input_1, input_2):
    """Pure-JAX reference mirroring the torch default path."""
    B, N, D = input_1.shape
    diff = input_1[:, :, None, :] - input_2[:, None, :, :]
    dist_sq = jnp.sum(diff * diff, axis=-1)
    flat = dist_sq.reshape(B, N * N)
    srt = jnp.sort(flat, axis=1)
    median_sq = srt[:, (N * N - 1) // 2]                 # torch lower median
    h = median_sq / (2.0 * math.log(N + 1.0))
    sigma = jnp.sqrt(h)
    gamma = 1.0 / (1e-8 + 2.0 * sigma * sigma)           # (B,)
    g3 = gamma.reshape(B, 1, 1)
    g4 = gamma.reshape(B, 1, 1, 1)
    kappa = jnp.exp(-g3 * dist_sq)
    kappa_grad = -2.0 * (diff * g4) * kappa[..., None]
    return kappa, diff, dist_sq, g3, kappa_grad


if __name__ == "__main__":
    key = jax.random.PRNGKey(0)
    names = ("kappa", "diff", "dist_sq", "gamma", "kappa_grad")

    for (B, N, D) in ((2, 8, 4), (3, 24, 6)):
        key, k1, k2 = jax.random.split(key, 3)
        input_1 = jax.random.normal(k1, (B, N, D), dtype=jnp.float32)
        input_2 = jax.random.normal(k2, (B, N, D), dtype=jnp.float32)

        outs = jax.block_until_ready(rbf_forward(input_1, input_2))
        refs = jax.block_until_ready(rbf_reference(input_1, input_2))

        for name, o, r in zip(names, outs, refs):
            assert o.shape == r.shape, (name, o.shape, r.shape)
            assert jnp.allclose(o, r, atol=1e-4, rtol=1e-4), (name, B, N, D)

    print("KERNEL_OK")
</pallas_src>

<mosaic_0001>
module attributes {stable_mosaic.version = 11 : i64} {
  func.func @_rbf_kernel(%arg0: i32, %arg1: memref<1x8x4xf32, #tpu.memory_space<vmem>>, %arg2: memref<1x4x8xf32, #tpu.memory_space<vmem>>, %arg3: memref<1x1x32xf32, #tpu.memory_space<vmem>>, %arg4: memref<1x4x32xf32, #tpu.memory_space<vmem>>, %arg5: memref<1x8x32xf32, #tpu.memory_space<vmem>>, %arg6: memref<1x8x8xf32, #tpu.memory_space<vmem>>, %arg7: memref<1x8x8xf32, #tpu.memory_space<vmem>>, %arg8: memref<1x1x1xf32, #tpu.memory_space<vmem>>, %arg9: memref<1x8x32xf32, #tpu.memory_space<vmem>>, %arg10: memref<1x8x32xf32, #tpu.memory_space<vmem>>) attributes {dimension_semantics = [#tpu.dimension_semantics<parallel>], iteration_bounds = array<i64: 2>, scalar_prefetch = 0 : i64, scratch_operands = 0 : i64, tpu.core_type = #tpu.core_type<tc>, window_params = [{transform_indices = @transform_0, window_bounds = array<i64: 1, 8, 4>}, {transform_indices = @transform_1, window_bounds = array<i64: 1, 4, 8>}, {transform_indices = @transform_2, window_bounds = array<i64: 1, 1, 32>}, {pipeline_mode = #tpu.pipeline_mode<synchronous>, transform_indices = @transform_3, window_bounds = array<i64: 1, 4, 32>}, {pipeline_mode = #tpu.pipeline_mode<synchronous>, transform_indices = @transform_4, window_bounds = array<i64: 1, 8, 32>}, {transform_indices = @transform_5, window_bounds = array<i64: 1, 8, 8>}, {transform_indices = @transform_6, window_bounds = array<i64: 1, 8, 8>}, {transform_indices = @transform_7, window_bounds = array<i64: 1, 1, 1>}, {transform_indices = @transform_8, window_bounds = array<i64: 1, 8, 32>}, {transform_indices = @transform_9, window_bounds = array<i64: 1, 8, 32>}]} {
    %c0 = arith.constant 0 : index
    %c0_0 = arith.constant 0 : index
    %c0_1 = arith.constant 0 : index
    %0 = vector.load %arg1[%c0, %c0_0, %c0_1] : memref<1x8x4xf32, #tpu.memory_space<vmem>>, vector<1x8x4xf32>
    %c0_2 = arith.constant 0 : index
    %c0_3 = arith.constant 0 : index
    %c0_4 = arith.constant 0 : index
    %1 = vector.load %arg2[%c0_2, %c0_3, %c0_4] : memref<1x4x8xf32, #tpu.memory_space<vmem>>, vector<1x4x8xf32>
    %cst = arith.constant 0.000000e+00 : f32
    %2 = vector.broadcast %cst : f32 to vector<1x8x8xf32>
    %3 = vector.extract_strided_slice %0 {offsets = [0, 0, 0], sizes = [1, 8, 1], strides = [1, 1, 1]} : vector<1x8x4xf32> to vector<1x8x1xf32>
    %4 = vector.extract_strided_slice %1 {offsets = [0, 0, 0], sizes = [1, 1, 8], strides = [1, 1, 1]} : vector<1x4x8xf32> to vector<1x1x8xf32>
    %5 = vector.broadcast %3 : vector<1x8x1xf32> to vector<1x8x8xf32>
    %6 = vector.broadcast %4 : vector<1x1x8xf32> to vector<1x8x8xf32>
    %7 = arith.subf %5, %6 : vector<1x8x8xf32>
    %8 = arith.mulf %7, %7 : vector<1x8x8xf32>
    %9 = arith.addf %2, %8 : vector<1x8x8xf32>
    %10 = vector.extract_strided_slice %0 {offsets = [0, 0, 1], sizes = [1, 8, 1], strides = [1, 1, 1]} : vector<1x8x4xf32> to vector<1x8x1xf32>
    %11 = vector.extract_strided_slice %1 {offsets = [0, 1, 0], sizes = [1, 1, 8], strides = [1, 1, 1]} : vector<1x4x8xf32> to vector<1x1x8xf32>
    %12 = vector.broadcast %10 : vector<1x8x1xf32> to vector<1x8x8xf32>
    %13 = vector.broadcast %11 : vector<1x1x8xf32> to vector<1x8x8xf32>
    %14 = arith.subf %12, %13 : vector<1x8x8xf32>
    %15 = arith.mulf %14, %14 : vector<1x8x8xf32>
    %16 = arith.addf %9, %15 : vector<1x8x8xf32>
    %17 = vector.extract_strided_slice %0 {offsets = [0, 0, 2], sizes = [1, 8, 1], strides = [1, 1, 1]} : vector<1x8x4xf32> to vector<1x8x1xf32>
    %18 = vector.extract_strided_slice %1 {offsets = [0, 2, 0], sizes = [1, 1, 8], strides = [1, 1, 1]} : vector<1x4x8xf32> to vector<1x1x8xf32>
    %19 = vector.broadcast %17 : vector<1x8x1xf32> to vector<1x8x8xf32>
    %20 = vector.broadcast %18 : vector<1x1x8xf32> to vector<1x8x8xf32>
    %21 = arith.subf %19, %20 : vector<1x8x8xf32>
    %22 = arith.mulf %21, %21 : vector<1x8x8xf32>
    %23 = arith.addf %16, %22 : vector<1x8x8xf32>
    %24 = vector.extract_strided_slice %0 {offsets = [0, 0, 3], sizes = [1, 8, 1], strides = [1, 1, 1]} : vector<1x8x4xf32> to vector<1x8x1xf32>
    %25 = vector.extract_strided_slice %1 {offsets = [0, 3, 0], sizes = [1, 1, 8], strides = [1, 1, 1]} : vector<1x4x8xf32> to vector<1x1x8xf32>
    %26 = vector.broadcast %24 : vector<1x8x1xf32> to vector<1x8x8xf32>
    %27 = vector.broadcast %25 : vector<1x1x8xf32> to vector<1x8x8xf32>
    %28 = arith.subf %26, %27 : vector<1x8x8xf32>
    %29 = arith.mulf %28, %28 : vector<1x8x8xf32>
    %30 = arith.addf %23, %29 : vector<1x8x8xf32>
    %c0_5 = arith.constant 0 : index
    %c0_6 = arith.constant 0 : index
    %c0_7 = arith.constant 0 : index
    %31 = vector.load %arg7[%c0_5, %c0_6, %c0_7] : memref<1x8x8xf32, #tpu.memory_space<vmem>>, vector<1x8x8xf32>
    tpu.vector_store %arg7[%c0_5, %c0_6, %c0_7], %30 {strides = array<i32>} : memref<1x8x8xf32, #tpu.memory_space<vmem>>, vector<1x8x8xf32>,
    %32 = tpu.bitcast %30 : vector<1x8x8xf32> -> vector<1x8x8xi32>
    %cst_8 = arith.constant 1.000000e+00 : f32
    %33 = vector.broadcast %cst_8 : f32 to vector<1x8x1xf32>
    %c0_i32 = arith.constant 0 : i32
    %34 = vector.broadcast %c0_i32 : i32 to vector<1x1x1xi32>
    %c1073741824_i32 = arith.constant 1073741824 : i32
    %35 = vector.broadcast %c1073741824_i32 : i32 to vector<1x1x1xi32>
    %36 = arith.ori %34, %35 : vector<1x1x1xi32>
    %37 = vector.broadcast %36 : vector<1x1x1xi32> to vector<1x8x8xi32>
    %38 = arith.cmpi slt, %32, %37 : vector<1x8x8xi32>
    %39 = arith.extui %38 : vector<1x8x8xi1> to vector<1x8x8xi32>
    %40 = arith.sitofp %39 : vector<1x8x8xi32> to vector<1x8x8xf32>
    "tpu.trace_start"() <{level = 10 : i32, message = "bij,bjk->bik"}> : () -> ()
    %cst_9 = arith.constant dense<0.000000e+00> : vector<1x8x1xf32>
    %41 = tpu.matmul %40, %33, %cst_9 {dimension_numbers = #tpu.dot_dimension_numbers<[2], [1], [1], [2], [0, 0, 0, 1, 1, 2], [0], [0]>} : vector<1x8x8xf32>, vector<1x8x1xf32>, vector<1x8x1xf32> -> vector<1x8x1xf32>
    "tpu.trace_stop"() : () -> ()
    %cst_10 = arith.constant dense<0.000000e+00> : vector<1x1xf32>
    %42 = vector.multi_reduction <add>, %41, %cst_10 [1] : vector<1x8x1xf32> to vector<1x1xf32>
    %43 = vector.shape_cast %42 : vector<1x1xf32> to vector<1x1x1xf32>
    %cst_11 = arith.constant 3.100000e+01 : f32
    %44 = vector.broadcast %cst_11 : f32 to vector<1x1x1xf32>
    %45 = arith.cmpf ole, %43, %44 : vector<1x1x1xf32>
    %46 = arith.select %45, %36, %34 : vector<1x1x1xi1>, vector<1x1x1xi32>
    %c536870912_i32 = arith.constant 536870912 : i32
    %47 = vector.broadcast %c536870912_i32 : i32 to vector<1x1x1xi32>
    %48 = arith.ori %46, %47 : vector<1x1x1xi32>
    %49 = vector.broadcast %48 : vector<1x1x1xi32> to vector<1x8x8xi32>
    %50 = arith.cmpi slt, %32, %49 : vector<1x8x8xi32>
    %51 = arith.extui %50 : vector<1x8x8xi1> to vector<1x8x8xi32>
    %52 = arith.sitofp %51 : vector<1x8x8xi32> to vector<1x8x8xf32>
    "tpu.trace_start"() <{level = 10 : i32, message = "bij,bjk->bik"}> : () -> ()
    %cst_12 = arith.constant dense<0.000000e+00> : vector<1x8x1xf32>
    %53 = tpu.matmul %52, %33, %cst_12 {dimension_numbers = #tpu.dot_dimension_numbers<[2], [1], [1], [2], [0, 0, 0, 1, 1, 2], [0], [0]>} : vector<1x8x8xf32>, vector<1x8x1xf32>, vector<1x8x1xf32> -> vector<1x8x1xf32>
    "tpu.trace_stop"() : () -> ()
    %cst_13 = arith.constant dense<0.000000e+00> : vector<1x1xf32>
    %54 = vector.multi_reduction <add>, %53, %cst_13 [1] : vector<1x8x1xf32> to vector<1x1xf32>
    %55 = vector.shape_cast %54 : vector<1x1xf32> to vector<1x1x1xf32>
    %cst_14 = arith.constant 3.100000e+01 : f32
    %56 = vector.broadcast %cst_14 : f32 to vector<1x1x1xf32>
    %57 = arith.cmpf ole, %55, %56 : vector<1x1x1xf32>
    %58 = arith.select %57, %48, %46 : vector<1x1x1xi1>, vector<1x1x1xi32>
    %c268435456_i32 = arith.constant 268435456 : i32
    %59 = vector.broadcast %c268435456_i32 : i32 to vector<1x1x1xi32>
    %60 = arith.ori %58, %59 : vector<1x1x1xi32>
    %61 = vector.broadcast %60 : vector<1x1x1xi32> to vector<1x8x8xi32>
    %62 = arith.cmpi slt, %32, %61 : vector<1x8x8xi32>
    %63 = arith.extui %62 : vector<1x8x8xi1> to vector<1x8x8xi32>
    %64 = arith.sitofp %63 : vector<1x8x8xi32> to vector<1x8x8xf32>
    "tpu.trace_start"() <{level = 10 : i32, message = "bij,bjk->bik"}> : () -> ()
    %cst_15 = arith.constant dense<0.000000e+00> : vector<1x8x1xf32>
    %65 = tpu.matmul %64, %33, %cst_15 {dimension_numbers = #tpu.dot_dimension_numbers<[2], [1], [1], [2], [0, 0, 0, 1, 1, 2], [0], [0]>} : vector<1x8x8xf32>, vector<1x8x1xf32>, vector<1x8x1xf32> -> vector<1x8x1xf32>
    "tpu.trace_stop"() : () -> ()
    %cst_16 = arith.constant dense<0.000000e+00> : vector<1x1xf32>
    %66 = vector.multi_reduction <add>, %65, %cst_16 [1] : vector<1x8x1xf32> to vector<1x1xf32>
    %67 = vector.shape_cast %66 : vector<1x1xf32> to vector<1x1x1xf32>
    %cst_17 = arith.constant 3.100000e+01 : f32
    %68 = vector.broadcast %cst_17 : f32 to vector<1x1x1xf32>
    %69 = arith.cmpf ole, %67, %68 : vector<1x1x1xf32>
    %70 = arith.select %69, %60, %58 : vector<1x1x1xi1>, vector<1x1x1xi32>
    %c134217728_i32 = arith.constant 134217728 : i32
    %71 = vector.broadcast %c134217728_i32 : i32 to vector<1x1x1xi32>
    %72 = arith.ori %70, %71 : vector<1x1x1xi32>
    %73 = vector.broadcast %72 : vector<1x1x1xi32> to vector<1x8x8xi32>
    %74 = arith.cmpi slt, %32, %73 : vector<1x8x8xi32>
    %75 = arith.extui %74 : vector<1x8x8xi1> to vector<1x8x8xi32>
    %76 = arith.sitofp %75 : vector<1x8x8xi32> to vector<1x8x8xf32>
    "tpu.trace_start"() <{level = 10 : i32, message = "bij,bjk->bik"}> : () -> ()
    %cst_18 = arith.constant dense<0.000000e+00> : vector<1x8x1xf32>
    %77 = tpu.matmul %76, %33, %cst_18 {dimension_numbers = #tpu.dot_dimension_numbers<[2], [1], [1], [2], [0, 0, 0, 1, 1, 2], [0], [0]>} : vector<1x8x8xf32>, vector<1x8x1xf32>, vector<1x8x1xf32> -> vector<1x8x1xf32>
    "tpu.trace_stop"() : () -> ()
    %cst_19 = arith.constant dense<0.000000e+00> : vector<1x1xf32>
    %78 = vector.multi_reduction <add>, %77, %cst_19 [1] : vector<1x8x1xf32> to vector<1x1xf32>
    %79 = vector.shape_cast %78 : vector<1x1xf32> to vector<1x1x1xf32>
    %cst_20 = arith.constant 3.100000e+01 : f32
    %80 = vector.broadcast %cst_20 : f32 to vector<1x1x1xf32>
    %81 = arith.cmpf ole, %79, %80 : vector<1x1x1xf32>
    %82 = arith.select %81, %72, %70 : vector<1x1x1xi1>, vector<1x1x1xi32>
    %c67108864_i32 = arith.constant 67108864 : i32
    %83 = vector.broadcast %c67108864_i32 : i32 to vector<1x1x1xi32>
    %84 = arith.ori %82, %83 : vector<1x1x1xi32>
    %85 = vector.broadcast %84 : vector<1x1x1xi32> to vector<1x8x8xi32>
    %86 = arith.cmpi slt, %32, %85 : vector<1x8x8xi32>
    %87 = arith.extui %86 : vector<1x8x8xi1> to vector<1x8x8xi32>
    %88 = arith.sitofp %87 : vector<1x8x8xi32> to vector<1x8x8xf32>
    "tpu.trace_start"() <{level = 10 : i32, message = "bij,bjk->bik"}> : () -> ()
    %cst_21 = arith.constant dense<0.000000e+00> : vector<1x8x1xf32>
    %89 = tpu.matmul %88, %33, %cst_21 {dimension_numbers = #tpu.dot_dimension_numbers<[2], [1], [1], [2], [0, 0, 0, 1, 1, 2], [0], [0]>} : vector<1x8x8xf32>, vector<1x8x1xf32>, vector<1x8x1xf32> -> vector<1x8x1xf32>
    "tpu.trace_stop"() : () -> ()
    %cst_22 = arith.constant dense<0.000000e+00> : vector<1x1xf32>
    %90 = vector.multi_reduction <add>, %89, %cst_22 [1] : vector<1x8x1xf32> to vector<1x1xf32>
    %91 = vector.shape_cast %90 : vector<1x1xf32> to vector<1x1x1xf32>
    %cst_23 = arith.constant 3.100000e+01 : f32
    %92 = vector.broadcast %cst_23 : f32 to vector<1x1x1xf32>
    %93 = arith.cmpf ole, %91, %92 : vector<1x1x1xf32>
    %94 = arith.select %93, %84, %82 : vector<1x1x1xi1>, vector<1x1x1xi32>
    %c33554432_i32 = arith.constant 33554432 : i32
    %95 = vector.broadcast %c33554432_i32 : i32 to vector<1x1x1xi32>
    %96 = arith.ori %94, %95 : vector<1x1x1xi32>
    %97 = vector.broadcast %96 : vector<1x1x1xi32> to vector<1x8x8xi32>
    %98 = arith.cmpi slt, %32, %97 : vector<1x8x8xi32>
    %99 = arith.extui %98 : vector<1x8x8xi1> to vector<1x8x8xi32>
    %100 = arith.sitofp %99 : vector<1x8x8xi32> to vector<1x8x8xf32>
    "tpu.trace_start"() <{level = 10 : i32, message = "bij,bjk->bik"}> : () -> ()
    %cst_24 = arith.constant dense<0.000000e+00> : vector<1x8x1xf32>
    %101 = tpu.matmul %100, %33, %cst_24 {dimension_numbers = #tpu.dot_dimension_numbers<[2], [1], [1], [2], [0, 0, 0, 1, 1, 2], [0], [0]>} : vector<1x8x8xf32>, vector<1x8x1xf32>, vector<1x8x1xf32> -> vector<1x8x1xf32>
    "tpu.trace_stop"() : () -> ()
    %cst_25 = arith.constant dense<0.000000e+00> : vector<1x1xf32>
    %102 = vector.multi_reduction <add>, %101, %cst_25 [1] : vector<1x8x1xf32> to vector<1x1xf32>
    %103 = vector.shape_cast %102 : vector<1x1xf32> to vector<1x1x1xf32>
    %cst_26 = arith.constant 3.100000e+01 : f32
    %104 = vector.broadcast %cst_26 : f32 to vector<1x1x1xf32>
    %105 = arith.cmpf ole, %103, %104 : vector<1x1x1xf32>
    %106 = arith.select %105, %96, %94 : vector<1x1x1xi1>, vector<1x1x1xi32>
    %c16777216_i32 = arith.constant 16777216 : i32
    %107 = vector.broadcast %c16777216_i32 : i32 to vector<1x1x1xi32>
    %108 = arith.ori %106, %107 : vector<1x1x1xi32>
    %109 = vector.broadcast %108 : vector<1x1x1xi32> to vector<1x8x8xi32>
    %110 = arith.cmpi slt, %32, %109 : vector<1x8x8xi32>
    %111 = arith.extui %110 : vector<1x8x8xi1> to vector<1x8x8xi32>
    %112 = arith.sitofp %111 : vector<1x8x8xi32> to vector<1x8x8xf32>
    "tpu.trace_start"() <{level = 10 : i32, message = "bij,bjk->bik"}> : () -> ()
    %cst_27 = arith.constant dense<0.000000e+00> : vector<1x8x1xf32>
    %113 = tpu.matmul %112, %33, %cst_27 {dimension_numbers = #tpu.dot_dimension_numbers<[2], [1], [1], [2], [0, 0, 0, 1, 1, 2], [0], [0]>} : vector<1x8x8xf32>, vector<1x8x1xf32>, vector<1x8x1xf32> -> vector<1x8x1xf32>
    "tpu.trace_stop"() : () -> ()
    %cst_28 = arith.constant dense<0.000000e+00> : vector<1x1xf32>
    %114 = vector.multi_reduction <add>, %113, %cst_28 [1] : vector<1x8x1xf32> to vector<1x1xf32>
    %115 = vector.shape_cast %114 : vector<1x1xf32> to vector<1x1x1xf32>
    %cst_29 = arith.constant 3.100000e+01 : f32
    %116 = vector.broadcast %cst_29 : f32 to vector<1x1x1xf32>
    %117 = arith.cmpf ole, %115, %116 : vector<1x1x1xf32>
    %118 = arith.select %117, %108, %106 : vector<1x1x1xi1>, vector<1x1x1xi32>
    %c8388608_i32 = arith.constant 8388608 : i32
    %119 = vector.broadcast %c8388608_i32 : i32 to vector<1x1x1xi32>
    %120 = arith.ori %118, %119 : vector<1x1x1xi32>
    %121 = vector.broadcast %120 : vector<1x1x1xi32> to vector<1x8x8xi32>
    %122 = arith.cmpi slt, %32, %121 : vector<1x8x8xi32>
    %123 = arith.extui %122 : vector<1x8x8xi1> to vector<1x8x8xi32>
    %124 = arith.sitofp %123 : vector<1x8x8xi32> to vector<1x8x8xf32>
    "tpu.trace_start"() <{level = 10 : i32, message = "bij,bjk->bik"}> : () -> ()
    %cst_30 = arith.constant dense<0.000000e+00> : vector<1x8x1xf32>
    %125 = tpu.matmul %124, %33, %cst_30 {dimension_numbers = #tpu.dot_dimension_numbers<[2], [1], [1], [2], [0, 0, 0, 1, 1, 2], [0], [0]>} : vector<1x8x8xf32>, vector<1x8x1xf32>, vector<1x8x1xf32> -> vector<1x8x1xf32>
    "tpu.trace_stop"() : () -> ()
    %cst_31 = arith.constant dense<0.000000e+00> : vector<1x1xf32>
    %126 = vector.multi_reduction <add>, %125, %cst_31 [1] : vector<1x8x1xf32> to vector<1x1xf32>
    %127 = vector.shape_cast %126 : vector<1x1xf32> to vector<1x1x1xf32>
    %cst_32 = arith.constant 3.100000e+01 : f32
    %128 = vector.broadcast %cst_32 : f32 to vector<1x1x1xf32>
    %129 = arith.cmpf ole, %127, %128 : vector<1x1x1xf32>
    %130 = arith.select %129, %120, %118 : vector<1x1x1xi1>, vector<1x1x1xi32>
    %c4194304_i32 = arith.constant 4194304 : i32
    %131 = vector.broadcast %c4194304_i32 : i32 to vector<1x1x1xi32>
    %132 = arith.ori %130, %131 : vector<1x1x1xi32>
    %133 = vector.broadcast %132 : vector<1x1x1xi32> to vector<1x8x8xi32>
    %134 = arith.cmpi slt, %32, %133 : vector<1x8x8xi32>
    %135 = arith.extui %134 : vector<1x8x8xi1> to vector<1x8x8xi32>
    %136 = arith.sitofp %135 : vector<1x8x8xi32> to vector<1x8x8xf32>
    "tpu.trace_start"() <{level = 10 : i32, message = "bij,bjk->bik"}> : () -> ()
    %cst_33 = arith.constant dense<0.000000e+00> : vector<1x8x1xf32>
    %137 = tpu.matmul %136, %33, %cst_33 {dimension_numbers = #tpu.dot_dimension_numbers<[2], [1], [1], [2], [0, 0, 0, 1, 1, 2], [0], [0]>} : vector<1x8x8xf32>, vector<1x8x1xf32>, vector<1x8x1xf32> -> vector<1x8x1xf32>
    "tpu.trace_stop"() : () -> ()
    %cst_34 = arith.constant dense<0.000000e+00> : vector<1x1xf32>
    %138 = vector.multi_reduction <add>, %137, %cst_34 [1] : vector<1x8x1xf32> to vector<1x1xf32>
    %139 = vector.shape_cast %138 : vector<1x1xf32> to vector<1x1x1xf32>
    %cst_35 = arith.constant 3.100000e+01 : f32
    %140 = vector.broadcast %cst_35 : f32 to vector<1x1x1xf32>
    %141 = arith.cmpf ole, %139, %140 : vector<1x1x1xf32>
    %142 = arith.select %141, %132, %130 : vector<1x1x1xi1>, vector<1x1x1xi32>
    %c2097152_i32 = arith.constant 2097152 : i32
    %143 = vector.broadcast %c2097152_i32 : i32 to vector<1x1x1xi32>
    %144 = arith.ori %142, %143 : vector<1x1x1xi32>
    %145 = vector.broadcast %144 : vector<1x1x1xi32> to vector<1x8x8xi32>
    %146 = arith.cmpi slt, %32, %145 : vector<1x8x8xi32>
    %147 = arith.extui %146 : vector<1x8x8xi1> to vector<1x8x8xi32>
    %148 = arith.sitofp %147 : vector<1x8x8xi32> to vector<1x8x8xf32>
    "tpu.trace_start"() <{level = 10 : i32, message = "bij,bjk->bik"}> : () -> ()
    %cst_36 = arith.constant dense<0.000000e+00> : vector<1x8x1xf32>
    %149 = tpu.matmul %148, %33, %cst_36 {dimension_numbers = #tpu.dot_dimension_numbers<[2], [1], [1], [2], [0, 0, 0, 1, 1, 2], [0], [0]>} : vector<1x8x8xf32>, vector<1x8x1xf32>, vector<1x8x1xf32> -> vector<1x8x1xf32>
    "tpu.trace_stop"() : () -> ()
    %cst_37 = arith.constant dense<0.000000e+00> : vector<1x1xf32>
    %150 = vector.multi_reduction <add>, %149, %cst_37 [1] : vector<1x8x1xf32> to vector<1x1xf32>
    %151 = vector.shape_cast %150 : vector<1x1xf32> to vector<1x1x1xf32>
    %cst_38 = arith.constant 3.100000e+01 : f32
    %152 = vector.broadcast %cst_38 : f32 to vector<1x1x1xf32>
    %153 = arith.cmpf ole, %151, %152 : vector<1x1x1xf32>
    %154 = arith.select %153, %144, %142 : vector<1x1x1xi1>, vector<1x1x1xi32>
    %c1048576_i32 = arith.constant 1048576 : i32
    %155 = vector.broadcast %c1048576_i32 : i32 to vector<1x1x1xi32>
    %156 = arith.ori %154, %155 : vector<1x1x1xi32>
    %157 = vector.broadcast %156 : vector<1x1x1xi32> to vector<1x8x8xi32>
    %158 = arith.cmpi slt, %32, %157 : vector<1x8x8xi32>
    %159 = arith.extui %158 : vector<1x8x8xi1> to vector<1x8x8xi32>
    %160 = arith.sitofp %159 : vector<1x8x8xi32> to vector<1x8x8xf32>
    "tpu.trace_start"() <{level = 10 : i32, message = "bij,bjk->bik"}> : () -> ()
    %cst_39 = arith.constant dense<0.000000e+00> : vector<1x8x1xf32>
    %161 = tpu.matmul %160, %33, %cst_39 {dimension_numbers = #tpu.dot_dimension_numbers<[2], [1], [1], [2], [0, 0, 0, 1, 1, 2], [0], [0]>} : vector<1x8x8xf32>, vector<1x8x1xf32>, vector<1x8x1xf32> -> vector<1x8x1xf32>
    "tpu.trace_stop"() : () -> ()
    %cst_40 = arith.constant dense<0.000000e+00> : vector<1x1xf32>
    %162 = vector.multi_reduction <add>, %161, %cst_40 [1] : vector<1x8x1xf32> to vector<1x1xf32>
    %163 = vector.shape_cast %162 : vector<1x1xf32> to vector<1x1x1xf32>
    %cst_41 = arith.constant 3.100000e+01 : f32
    %164 = vector.broadcast %cst_41 : f32 to vector<1x1x1xf32>
    %165 = arith.cmpf ole, %163, %164 : vector<1x1x1xf32>
    %166 = arith.select %165, %156, %154 : vector<1x1x1xi1>, vector<1x1x1xi32>
    %c524288_i32 = arith.constant 524288 : i32
    %167 = vector.broadcast %c524288_i32 : i32 to vector<1x1x1xi32>
    %168 = arith.ori %166, %167 : vector<1x1x1xi32>
    %169 = vector.broadcast %168 : vector<1x1x1xi32> to vector<1x8x8xi32>
    %170 = arith.cmpi slt, %32, %169 : vector<1x8x8xi32>
    %171 = arith.extui %170 : vector<1x8x8xi1> to vector<1x8x8xi32>
    %172 = arith.sitofp %171 : vector<1x8x8xi32> to vector<1x8x8xf32>
    "tpu.trace_start"() <{level = 10 : i32, message = "bij,bjk->bik"}> : () -> ()
    %cst_42 = arith.constant dense<0.000000e+00> : vector<1x8x1xf32>
    %173 = tpu.matmul %172, %33, %cst_42 {dimension_numbers = #tpu.dot_dimension_numbers<[2], [1], [1], [2], [0, 0, 0, 1, 1, 2], [0], [0]>} : vector<1x8x8xf32>, vector<1x8x1xf32>, vector<1x8x1xf32> -> vector<1x8x1xf32>
    "tpu.trace_stop"() : () -> ()
    %cst_43 = arith.constant dense<0.000000e+00> : vector<1x1xf32>
    %174 = vector.multi_reduction <add>, %173, %cst_43 [1] : vector<1x8x1xf32> to vector<1x1xf32>
    %175 = vector.shape_cast %174 : vector<1x1xf32> to vector<1x1x1xf32>
    %cst_44 = arith.constant 3.100000e+01 : f32
    %176 = vector.broadcast %cst_44 : f32 to vector<1x1x1xf32>
    %177 = arith.cmpf ole, %175, %176 : vector<1x1x1xf32>
    %178 = arith.select %177, %168, %166 : vector<1x1x1xi1>, vector<1x1x1xi32>
    %c262144_i32 = arith.constant 262144 : i32
    %179 = vector.broadcast %c262144_i32 : i32 to vector<1x1x1xi32>
    %180 = arith.ori %178, %179 : vector<1x1x1xi32>
    %181 = vector.broadcast %180 : vector<1x1x1xi32> to vector<1x8x8xi32>
    %182 = arith.cmpi slt, %32, %181 : vector<1x8x8xi32>
    %183 = arith.extui %182 : vector<1x8x8xi1> to vector<1x8x8xi32>
    %184 = arith.sitofp %183 : vector<1x8x8xi32> to vector<1x8x8xf32>
    "tpu.trace_start"() <{level = 10 : i32, message = "bij,bjk->bik"}> : () -> ()
    %cst_45 = arith.constant dense<0.000000e+00> : vector<1x8x1xf32>
    %185 = tpu.matmul %184, %33, %cst_45 {dimension_numbers = #tpu.dot_dimension_numbers<[2], [1], [1], [2], [0, 0, 0, 1, 1, 2], [0], [0]>} : vector<1x8x8xf32>, vector<1x8x1xf32>, vector<1x8x1xf32> -> vector<1x8x1xf32>
    "tpu.trace_stop"() : () -> ()
    %cst_46 = arith.constant dense<0.000000e+00> : vector<1x1xf32>
    %186 = vector.multi_reduction <add>, %185, %cst_46 [1] : vector<1x8x1xf32> to vector<1x1xf32>
    %187 = vector.shape_cast %186 : vector<1x1xf32> to vector<1x1x1xf32>
    %cst_47 = arith.constant 3.100000e+01 : f32
    %188 = vector.broadcast %cst_47 : f32 to vector<1x1x1xf32>
    %189 = arith.cmpf ole, %187, %188 : vector<1x1x1xf32>
    %190 = arith.select %189, %180, %178 : vector<1x1x1xi1>, vector<1x1x1xi32>
    %c131072_i32 = arith.constant 131072 : i32
    %191 = vector.broadcast %c131072_i32 : i32 to vector<1x1x1xi32>
    %192 = arith.ori %190, %191 : vector<1x1x1xi32>
    %193 = vector.broadcast %192 : vector<1x1x1xi32> to vector<1x8x8xi32>
    %194 = arith.cmpi slt, %32, %193 : vector<1x8x8xi32>
    %195 = arith.extui %194 : vector<1x8x8xi1> to vector<1x8x8xi32>
    %196 = arith.sitofp %195 : vector<1x8x8xi32> to vector<1x8x8xf32>
    "tpu.trace_start"() <{level = 10 : i32, message = "bij,bjk->bik"}> : () -> ()
    %cst_48 = arith.constant dense<0.000000e+00> : vector<1x8x1xf32>
    %197 = tpu.matmul %196, %33, %cst_48 {dimension_numbers = #tpu.dot_dimension_numbers<[2], [1], [1], [2], [0, 0, 0, 1, 1, 2], [0], [0]>} : vector<1x8x8xf32>, vector<1x8x1xf32>, vector<1x8x1xf32> -> vector<1x8x1xf32>
    "tpu.trace_stop"() : () -> ()
    %cst_49 = arith.constant dense<0.000000e+00> : vector<1x1xf32>
    %198 = vector.multi_reduction <add>, %197, %cst_49 [1] : vector<1x8x1xf32> to vector<1x1xf32>
    %199 = vector.shape_cast %198 : vector<1x1xf32> to vector<1x1x1xf32>
    %cst_50 = arith.constant 3.100000e+01 : f32
    %200 = vector.broadcast %cst_50 : f32 to vector<1x1x1xf32>
    %201 = arith.cmpf ole, %199, %200 : vector<1x1x1xf32>
    %202 = arith.select %201, %192, %190 : vector<1x1x1xi1>, vector<1x1x1xi32>
    %c65536_i32 = arith.constant 65536 : i32
    %203 = vector.broadcast %c65536_i32 : i32 to vector<1x1x1xi32>
    %204 = arith.ori %202, %203 : vector<1x1x1xi32>
    %205 = vector.broadcast %204 : vector<1x1x1xi32> to vector<1x8x8xi32>
    %206 = arith.cmpi slt, %32, %205 : vector<1x8x8xi32>
    %207 = arith.extui %206 : vector<1x8x8xi1> to vector<1x8x8xi32>
    %208 = arith.sitofp %207 : vector<1x8x8xi32> to vector<1x8x8xf32>
    "tpu.trace_start"() <{level = 10 : i32, message = "bij,bjk->bik"}> : () -> ()
    %cst_51 = arith.constant dense<0.000000e+00> : vector<1x8x1xf32>
    %209 = tpu.matmul %208, %33, %cst_51 {dimension_numbers = #tpu.dot_dimension_numbers<[2], [1], [1], [2], [0, 0, 0, 1, 1, 2], [0], [0]>} : vector<1x8x8xf32>, vector<1x8x1xf32>, vector<1x8x1xf32> -> vector<1x8x1xf32>
    "tpu.trace_stop"() : () -> ()
    %cst_52 = arith.constant dense<0.000000e+00> : vector<1x1xf32>
    %210 = vector.multi_reduction <add>, %209, %cst_52 [1] : vector<1x8x1xf32> to vector<1x1xf32>
    %211 = vector.shape_cast %210 : vector<1x1xf32> to vector<1x1x1xf32>
    %cst_53 = arith.constant 3.100000e+01 : f32
    %212 = vector.broadcast %cst_53 : f32 to vector<1x1x1xf32>
    %213 = arith.cmpf ole, %211, %212 : vector<1x1x1xf32>
    %214 = arith.select %213, %204, %202 : vector<1x1x1xi1>, vector<1x1x1xi32>
    %c32768_i32 = arith.constant 32768 : i32
    %215 = vector.broadcast %c32768_i32 : i32 to vector<1x1x1xi32>
    %216 = arith.ori %214, %215 : vector<1x1x1xi32>
    %217 = vector.broadcast %216 : vector<1x1x1xi32> to vector<1x8x8xi32>
    %218 = arith.cmpi slt, %32, %217 : vector<1x8x8xi32>
    %219 = arith.extui %218 : vector<1x8x8xi1> to vector<1x8x8xi32>
    %220 = arith.sitofp %219 : vector<1x8x8xi32> to vector<1x8x8xf32>
    "tpu.trace_start"() <{level = 10 : i32, message = "bij,bjk->bik"}> : () -> ()
    %cst_54 = arith.constant dense<0.000000e+00> : vector<1x8x1xf32>
    %221 = tpu.matmul %220, %33, %cst_54 {dimension_numbers = #tpu.dot_dimension_numbers<[2], [1], [1], [2], [0, 0, 0, 1, 1, 2], [0], [0]>} : vector<1x8x8xf32>, vector<1x8x1xf32>, vector<1x8x1xf32> -> vector<1x8x1xf32>
    "tpu.trace_stop"() : () -> ()
    %cst_55 = arith.constant dense<0.000000e+00> : vector<1x1xf32>
    %222 = vector.multi_reduction <add>, %221, %cst_55 [1] : vector<1x8x1xf32> to vector<1x1xf32>
    %223 = vector.shape_cast %222 : vector<1x1xf32> to vector<1x1x1xf32>
    %cst_56 = arith.constant 3.100000e+01 : f32
    %224 = vector.broadcast %cst_56 : f32 to vector<1x1x1xf32>
    %225 = arith.cmpf ole, %223, %224 : vector<1x1x1xf32>
    %226 = arith.select %225, %216, %214 : vector<1x1x1xi1>, vector<1x1x1xi32>
    %c16384_i32 = arith.constant 16384 : i32
    %227 = vector.broadcast %c16384_i32 : i32 to vector<1x1x1xi32>
    %228 = arith.ori %226, %227 : vector<1x1x1xi32>
    %229 = vector.broadcast %228 : vector<1x1x1xi32> to vector<1x8x8xi32>
    %230 = arith.cmpi slt, %32, %229 : vector<1x8x8xi32>
    %231 = arith.extui %230 : vector<1x8x8xi1> to vector<1x8x8xi32>
    %232 = arith.sitofp %231 : vector<1x8x8xi32> to vector<1x8x8xf32>
    "tpu.trace_start"() <{level = 10 : i32, message = "bij,bjk->bik"}> : () -> ()
    %cst_57 = arith.constant dense<0.000000e+00> : vector<1x8x1xf32>
    %233 = tpu.matmul %232, %33, %cst_57 {dimension_numbers = #tpu.dot_dimension_numbers<[2], [1], [1], [2], [0, 0, 0, 1, 1, 2], [0], [0]>} : vector<1x8x8xf32>, vector<1x8x1xf32>, vector<1x8x1xf32> -> vector<1x8x1xf32>
    "tpu.trace_stop"() : () -> ()
    %cst_58 = arith.constant dense<0.000000e+00> : vector<1x1xf32>
    %234 = vector.multi_reduction <add>, %233, %cst_58 [1] : vector<1x8x1xf32> to vector<1x1xf32>
    %235 = vector.shape_cast %234 : vector<1x1xf32> to vector<1x1x1xf32>
    %cst_59 = arith.constant 3.100000e+01 : f32
    %236 = vector.broadcast %cst_59 : f32 to vector<1x1x1xf32>
    %237 = arith.cmpf ole, %235, %236 : vector<1x1x1xf32>
    %238 = arith.select %237, %228, %226 : vector<1x1x1xi1>, vector<1x1x1xi32>
    %c8192_i32 = arith.constant 8192 : i32
    %239 = vector.broadcast %c8192_i32 : i32 to vector<1x1x1xi32>
    %240 = arith.ori %238, %239 : vector<1x1x1xi32>
    %241 = vector.broadcast %240 : vector<1x1x1xi32> to vector<1x8x8xi32>
    %242 = arith.cmpi slt, %32, %241 : vector<1x8x8xi32>
    %243 = arith.extui %242 : vector<1x8x8xi1> to vector<1x8x8xi32>
    %244 = arith.sitofp %243 : vector<1x8x8xi32> to vector<1x8x8xf32>
    "tpu.trace_start"() <{level = 10 : i32, message = "bij,bjk->bik"}> : () -> ()
    %cst_60 = arith.constant dense<0.000000e+00> : vector<1x8x1xf32>
    %245 = tpu.matmul %244, %33, %cst_60 {dimension_numbers = #tpu.dot_dimension_numbers<[2], [1], [1], [2], [0, 0, 0, 1, 1, 2], [0], [0]>} : vector<1x8x8xf32>, vector<1x8x1xf32>, vector<1x8x1xf32> -> vector<1x8x1xf32>
    "tpu.trace_stop"() : () -> ()
    %cst_61 = arith.constant dense<0.000000e+00> : vector<1x1xf32>
    %246 = vector.multi_reduction <add>, %245, %cst_61 [1] : vector<1x8x1xf32> to vector<1x1xf32>
    %247 = vector.shape_cast %246 : vector<1x1xf32> to vector<1x1x1xf32>
    %cst_62 = arith.constant 3.100000e+01 : f32
    %248 = vector.broadcast %cst_62 : f32 to vector<1x1x1xf32>
    %249 = arith.cmpf ole, %247, %248 : vector<1x1x1xf32>
    %250 = arith.select %249, %240, %238 : vector<1x1x1xi1>, vector<1x1x1xi32>
    %c4096_i32 = arith.constant 4096 : i32
    %251 = vector.broadcast %c4096_i32 : i32 to vector<1x1x1xi32>
    %252 = arith.ori %250, %251 : vector<1x1x1xi32>
    %253 = vector.broadcast %252 : vector<1x1x1xi32> to vector<1x8x8xi32>
    %254 = arith.cmpi slt, %32, %253 : vector<1x8x8xi32>
    %255 = arith.extui %254 : vector<1x8x8xi1> to vector<1x8x8xi32>
    %256 = arith.sitofp %255 : vector<1x8x8xi32> to vector<1x8x8xf32>
    "tpu.trace_start"() <{level = 10 : i32, message = "bij,bjk->bik"}> : () -> ()
    %cst_63 = arith.constant dense<0.000000e+00> : vector<1x8x1xf32>
    %257 = tpu.matmul %256, %33, %cst_63 {dimension_numbers = #tpu.dot_dimension_numbers<[2], [1], [1], [2], [0, 0, 0, 1, 1, 2], [0], [0]>} : vector<1x8x8xf32>, vector<1x8x1xf32>, vector<1x8x1xf32> -> vector<1x8x1xf32>
    "tpu.trace_stop"() : () -> ()
    %cst_64 = arith.constant dense<0.000000e+00> : vector<1x1xf32>
    %258 = vector.multi_reduction <add>, %257, %cst_64 [1] : vector<1x8x1xf32> to vector<1x1xf32>
    %259 = vector.shape_cast %258 : vector<1x1xf32> to vector<1x1x1xf32>
    %cst_65 = arith.constant 3.100000e+01 : f32
    %260 = vector.broadcast %cst_65 : f32 to vector<1x1x1xf32>
    %261 = arith.cmpf ole, %259, %260 : vector<1x1x1xf32>
    %262 = arith.select %261, %252, %250 : vector<1x1x1xi1>, vector<1x1x1xi32>
    %c2048_i32 = arith.constant 2048 : i32
    %263 = vector.broadcast %c2048_i32 : i32 to vector<1x1x1xi32>
    %264 = arith.ori %262, %263 : vector<1x1x1xi32>
    %265 = vector.broadcast %264 : vector<1x1x1xi32> to vector<1x8x8xi32>
    %266 = arith.cmpi slt, %32, %265 : vector<1x8x8xi32>
    %267 = arith.extui %266 : vector<1x8x8xi1> to vector<1x8x8xi32>
    %268 = arith.sitofp %267 : vector<1x8x8xi32> to vector<1x8x8xf32>
    "tpu.trace_start"() <{level = 10 : i32, message = "bij,bjk->bik"}> : () -> ()
    %cst_66 = arith.constant dense<0.000000e+00> : vector<1x8x1xf32>
    %269 = tpu.matmul %268, %33, %cst_66 {dimension_numbers = #tpu.dot_dimension_numbers<[2], [1], [1], [2], [0, 0, 0, 1, 1, 2], [0], [0]>} : vector<1x8x8xf32>, vector<1x8x1xf32>, vector<1x8x1xf32> -> vector<1x8x1xf32>
    "tpu.trace_stop"() : () -> ()
    %cst_67 = arith.constant dense<0.000000e+00> : vector<1x1xf32>
    %270 = vector.multi_reduction <add>, %269, %cst_67 [1] : vector<1x8x1xf32> to vector<1x1xf32>
    %271 = vector.shape_cast %270 : vector<1x1xf32> to vector<1x1x1xf32>
    %cst_68 = arith.constant 3.100000e+01 : f32
    %272 = vector.broadcast %cst_68 : f32 to vector<1x1x1xf32>
    %273 = arith.cmpf ole, %271, %272 : vector<1x1x1xf32>
    %274 = arith.select %273, %264, %262 : vector<1x1x1xi1>, vector<1x1x1xi32>
    %c1024_i32 = arith.constant 1024 : i32
    %275 = vector.broadcast %c1024_i32 : i32 to vector<1x1x1xi32>
    %276 = arith.ori %274, %275 : vector<1x1x1xi32>
    %277 = vector.broadcast %276 : vector<1x1x1xi32> to vector<1x8x8xi32>
    %278 = arith.cmpi slt, %32, %277 : vector<1x8x8xi32>
    %279 = arith.extui %278 : vector<1x8x8xi1> to vector<1x8x8xi32>
    %280 = arith.sitofp %279 : vector<1x8x8xi32> to vector<1x8x8xf32>
    "tpu.trace_start"() <{level = 10 : i32, message = "bij,bjk->bik"}> : () -> ()
    %cst_69 = arith.constant dense<0.000000e+00> : vector<1x8x1xf32>
    %281 = tpu.matmul %280, %33, %cst_69 {dimension_numbers = #tpu.dot_dimension_numbers<[2], [1], [1], [2], [0, 0, 0, 1, 1, 2], [0], [0]>} : vector<1x8x8xf32>, vector<1x8x1xf32>, vector<1x8x1xf32> -> vector<1x8x1xf32>
    "tpu.trace_stop"() : () -> ()
    %cst_70 = arith.constant dense<0.000000e+00> : vector<1x1xf32>
    %282 = vector.multi_reduction <add>, %281, %cst_70 [1] : vector<1x8x1xf32> to vector<1x1xf32>
    %283 = vector.shape_cast %282 : vector<1x1xf32> to vector<1x1x1xf32>
    %cst_71 = arith.constant 3.100000e+01 : f32
    %284 = vector.broadcast %cst_71 : f32 to vector<1x1x1xf32>
    %285 = arith.cmpf ole, %283, %284 : vector<1x1x1xf32>
    %286 = arith.select %285, %276, %274 : vector<1x1x1xi1>, vector<1x1x1xi32>
    %c512_i32 = arith.constant 512 : i32
    %287 = vector.broadcast %c512_i32 : i32 to vector<1x1x1xi32>
    %288 = arith.ori %286, %287 : vector<1x1x1xi32>
    %289 = vector.broadcast %288 : vector<1x1x1xi32> to vector<1x8x8xi32>
    %290 = arith.cmpi slt, %32, %289 : vector<1x8x8xi32>
    %291 = arith.extui %290 : vector<1x8x8xi1> to vector<1x8x8xi32>
    %292 = arith.sitofp %291 : vector<1x8x8xi32> to vector<1x8x8xf32>
    "tpu.trace_start"() <{level = 10 : i32, message = "bij,bjk->bik"}> : () -> ()
    %cst_72 = arith.constant dense<0.000000e+00> : vector<1x8x1xf32>
    %293 = tpu.matmul %292, %33, %cst_72 {dimension_numbers = #tpu.dot_dimension_numbers<[2], [1], [1], [2], [0, 0, 0, 1, 1, 2], [0], [0]>} : vector<1x8x8xf32>, vector<1x8x1xf32>, vector<1x8x1xf32> -> vector<1x8x1xf32>
    "tpu.trace_stop"() : () -> ()
    %cst_73 = arith.constant dense<0.000000e+00> : vector<1x1xf32>
    %294 = vector.multi_reduction <add>, %293, %cst_73 [1] : vector<1x8x1xf32> to vector<1x1xf32>
    %295 = vector.shape_cast %294 : vector<1x1xf32> to vector<1x1x1xf32>
    %cst_74 = arith.constant 3.100000e+01 : f32
    %296 = vector.broadcast %cst_74 : f32 to vector<1x1x1xf32>
    %297 = arith.cmpf ole, %295, %296 : vector<1x1x1xf32>
    %298 = arith.select %297, %288, %286 : vector<1x1x1xi1>, vector<1x1x1xi32>
    %c256_i32 = arith.constant 256 : i32
    %299 = vector.broadcast %c256_i32 : i32 to vector<1x1x1xi32>
    %300 = arith.ori %298, %299 : vector<1x1x1xi32>
    %301 = vector.broadcast %300 : vector<1x1x1xi32> to vector<1x8x8xi32>
    %302 = arith.cmpi slt, %32, %301 : vector<1x8x8xi32>
    %303 = arith.extui %302 : vector<1x8x8xi1> to vector<1x8x8xi32>
    %304 = arith.sitofp %303 : vector<1x8x8xi32> to vector<1x8x8xf32>
    "tpu.trace_start"() <{level = 10 : i32, message = "bij,bjk->bik"}> : () -> ()
    %cst_75 = arith.constant dense<0.000000e+00> : vector<1x8x1xf32>
    %305 = tpu.matmul %304, %33, %cst_75 {dimension_numbers = #tpu.dot_dimension_numbers<[2], [1], [1], [2], [0, 0, 0, 1, 1, 2], [0], [0]>} : vector<1x8x8xf32>, vector<1x8x1xf32>, vector<1x8x1xf32> -> vector<1x8x1xf32>
    "tpu.trace_stop"() : () -> ()
    %cst_76 = arith.constant dense<0.000000e+00> : vector<1x1xf32>
    %306 = vector.multi_reduction <add>, %305, %cst_76 [1] : vector<1x8x1xf32> to vector<1x1xf32>
    %307 = vector.shape_cast %306 : vector<1x1xf32> to vector<1x1x1xf32>
    %cst_77 = arith.constant 3.100000e+01 : f32
    %308 = vector.broadcast %cst_77 : f32 to vector<1x1x1xf32>
    %309 = arith.cmpf ole, %307, %308 : vector<1x1x1xf32>
    %310 = arith.select %309, %300, %298 : vector<1x1x1xi1>, vector<1x1x1xi32>
    %c128_i32 = arith.constant 128 : i32
    %311 = vector.broadcast %c128_i32 : i32 to vector<1x1x1xi32>
    %312 = arith.ori %310, %311 : vector<1x1x1xi32>
    %313 = vector.broadcast %312 : vector<1x1x1xi32> to vector<1x8x8xi32>
    %314 = arith.cmpi slt, %32, %313 : vector<1x8x8xi32>
    %315 = arith.extui %314 : vector<1x8x8xi1> to vector<1x8x8xi32>
    %316 = arith.sitofp %315 : vector<1x8x8xi32> to vector<1x8x8xf32>
    "tpu.trace_start"() <{level = 10 : i32, message = "bij,bjk->bik"}> : () -> ()
    %cst_78 = arith.constant dense<0.000000e+00> : vector<1x8x1xf32>
    %317 = tpu.matmul %316, %33, %cst_78 {dimension_numbers = #tpu.dot_dimension_numbers<[2], [1], [1], [2], [0, 0, 0, 1, 1, 2], [0], [0]>} : vector<1x8x8xf32>, vector<1x8x1xf32>, vector<1x8x1xf32> -> vector<1x8x1xf32>
    "tpu.trace_stop"() : () -> ()
    %cst_79 = arith.constant dense<0.000000e+00> : vector<1x1xf32>
    %318 = vector.multi_reduction <add>, %317, %cst_79 [1] : vector<1x8x1xf32> to vector<1x1xf32>
    %319 = vector.shape_cast %318 : vector<1x1xf32> to vector<1x1x1xf32>
    %cst_80 = arith.constant 3.100000e+01 : f32
    %320 = vector.broadcast %cst_80 : f32 to vector<1x1x1xf32>
    %321 = arith.cmpf ole, %319, %320 : vector<1x1x1xf32>
    %322 = arith.select %321, %312, %310 : vector<1x1x1xi1>, vector<1x1x1xi32>
    %c64_i32 = arith.constant 64 : i32
    %323 = vector.broadcast %c64_i32 : i32 to vector<1x1x1xi32>
    %324 = arith.ori %322, %323 : vector<1x1x1xi32>
    %325 = vector.broadcast %324 : vector<1x1x1xi32> to vector<1x8x8xi32>
    %326 = arith.cmpi slt, %32, %325 : vector<1x8x8xi32>
    %327 = arith.extui %326 : vector<1x8x8xi1> to vector<1x8x8xi32>
    %328 = arith.sitofp %327 : vector<1x8x8xi32> to vector<1x8x8xf32>
    "tpu.trace_start"() <{level = 10 : i32, message = "bij,bjk->bik"}> : () -> ()
    %cst_81 = arith.constant dense<0.000000e+00> : vector<1x8x1xf32>
    %329 = tpu.matmul %328, %33, %cst_81 {dimension_numbers = #tpu.dot_dimension_numbers<[2], [1], [1], [2], [0, 0, 0, 1, 1, 2], [0], [0]>} : vector<1x8x8xf32>, vector<1x8x1xf32>, vector<1x8x1xf32> -> vector<1x8x1xf32>
    "tpu.trace_stop"() : () -> ()
    %cst_82 = arith.constant dense<0.000000e+00> : vector<1x1xf32>
    %330 = vector.multi_reduction <add>, %329, %cst_82 [1] : vector<1x8x1xf32> to vector<1x1xf32>
    %331 = vector.shape_cast %330 : vector<1x1xf32> to vector<1x1x1xf32>
    %cst_83 = arith.constant 3.100000e+01 : f32
    %332 = vector.broadcast %cst_83 : f32 to vector<1x1x1xf32>
    %333 = arith.cmpf ole, %331, %332 : vector<1x1x1xf32>
    %334 = arith.select %333, %324, %322 : vector<1x1x1xi1>, vector<1x1x1xi32>
    %c32_i32 = arith.constant 32 : i32
    %335 = vector.broadcast %c32_i32 : i32 to vector<1x1x1xi32>
    %336 = arith.ori %334, %335 : vector<1x1x1xi32>
    %337 = vector.broadcast %336 : vector<1x1x1xi32> to vector<1x8x8xi32>
    %338 = arith.cmpi slt, %32, %337 : vector<1x8x8xi32>
    %339 = arith.extui %338 : vector<1x8x8xi1> to vector<1x8x8xi32>
    %340 = arith.sitofp %339 : vector<1x8x8xi32> to vector<1x8x8xf32>
    "tpu.trace_start"() <{level = 10 : i32, message = "bij,bjk->bik"}> : () -> ()
    %cst_84 = arith.constant dense<0.000000e+00> : vector<1x8x1xf32>
    %341 = tpu.matmul %340, %33, %cst_84 {dimension_numbers = #tpu.dot_dimension_numbers<[2], [1], [1], [2], [0, 0, 0, 1, 1, 2], [0], [0]>} : vector<1x8x8xf32>, vector<1x8x1xf32>, vector<1x8x1xf32> -> vector<1x8x1xf32>
    "tpu.trace_stop"() : () -> ()
    %cst_85 = arith.constant dense<0.000000e+00> : vector<1x1xf32>
    %342 = vector.multi_reduction <add>, %341, %cst_85 [1] : vector<1x8x1xf32> to vector<1x1xf32>
    %343 = vector.shape_cast %342 : vector<1x1xf32> to vector<1x1x1xf32>
    %cst_86 = arith.constant 3.100000e+01 : f32
    %344 = vector.broadcast %cst_86 : f32 to vector<1x1x1xf32>
    %345 = arith.cmpf ole, %343, %344 : vector<1x1x1xf32>
    %346 = arith.select %345, %336, %334 : vector<1x1x1xi1>, vector<1x1x1xi32>
    %c16_i32 = arith.constant 16 : i32
    %347 = vector.broadcast %c16_i32 : i32 to vector<1x1x1xi32>
    %348 = arith.ori %346, %347 : vector<1x1x1xi32>
    %349 = vector.broadcast %348 : vector<1x1x1xi32> to vector<1x8x8xi32>
    %350 = arith.cmpi slt, %32, %349 : vector<1x8x8xi32>
    %351 = arith.extui %350 : vector<1x8x8xi1> to vector<1x8x8xi32>
    %352 = arith.sitofp %351 : vector<1x8x8xi32> to vector<1x8x8xf32>
    "tpu.trace_start"() <{level = 10 : i32, message = "bij,bjk->bik"}> : () -> ()
    %cst_87 = arith.constant dense<0.000000e+00> : vector<1x8x1xf32>
    %353 = tpu.matmul %352, %33, %cst_87 {dimension_numbers = #tpu.dot_dimension_numbers<[2], [1], [1], [2], [0, 0, 0, 1, 1, 2], [0], [0]>} : vector<1x8x8xf32>, vector<1x8x1xf32>, vector<1x8x1xf32> -> vector<1x8x1xf32>
    "tpu.trace_stop"() : () -> ()
    %cst_88 = arith.constant dense<0.000000e+00> : vector<1x1xf32>
    %354 = vector.multi_reduction <add>, %353, %cst_88 [1] : vector<1x8x1xf32> to vector<1x1xf32>
    %355 = vector.shape_cast %354 : vector<1x1xf32> to vector<1x1x1xf32>
    %cst_89 = arith.constant 3.100000e+01 : f32
    %356 = vector.broadcast %cst_89 : f32 to vector<1x1x1xf32>
    %357 = arith.cmpf ole, %355, %356 : vector<1x1x1xf32>
    %358 = arith.select %357, %348, %346 : vector<1x1x1xi1>, vector<1x1x1xi32>
    %c8_i32 = arith.constant 8 : i32
    %359 = vector.broadcast %c8_i32 : i32 to vector<1x1x1xi32>
    %360 = arith.ori %358, %359 : vector<1x1x1xi32>
    %361 = vector.broadcast %360 : vector<1x1x1xi32> to vector<1x8x8xi32>
    %362 = arith.cmpi slt, %32, %361 : vector<1x8x8xi32>
    %363 = arith.extui %362 : vector<1x8x8xi1> to vector<1x8x8xi32>
    %364 = arith.sitofp %363 : vector<1x8x8xi32> to vector<1x8x8xf32>
    "tpu.trace_start"() <{level = 10 : i32, message = "bij,bjk->bik"}> : () -> ()
    %cst_90 = arith.constant dense<0.000000e+00> : vector<1x8x1xf32>
    %365 = tpu.matmul %364, %33, %cst_90 {dimension_numbers = #tpu.dot_dimension_numbers<[2], [1], [1], [2], [0, 0, 0, 1, 1, 2], [0], [0]>} : vector<1x8x8xf32>, vector<1x8x1xf32>, vector<1x8x1xf32> -> vector<1x8x1xf32>
    "tpu.trace_stop"() : () -> ()
    %cst_91 = arith.constant dense<0.000000e+00> : vector<1x1xf32>
    %366 = vector.multi_reduction <add>, %365, %cst_91 [1] : vector<1x8x1xf32> to vector<1x1xf32>
    %367 = vector.shape_cast %366 : vector<1x1xf32> to vector<1x1x1xf32>
    %cst_92 = arith.constant 3.100000e+01 : f32
    %368 = vector.broadcast %cst_92 : f32 to vector<1x1x1xf32>
    %369 = arith.cmpf ole, %367, %368 : vector<1x1x1xf32>
    %370 = arith.select %369, %360, %358 : vector<1x1x1xi1>, vector<1x1x1xi32>
    %c4_i32 = arith.constant 4 : i32
    %371 = vector.broadcast %c4_i32 : i32 to vector<1x1x1xi32>
    %372 = arith.ori %370, %371 : vector<1x1x1xi32>
    %373 = vector.broadcast %372 : vector<1x1x1xi32> to vector<1x8x8xi32>
    %374 = arith.cmpi slt, %32, %373 : vector<1x8x8xi32>
    %375 = arith.extui %374 : vector<1x8x8xi1> to vector<1x8x8xi32>
    %376 = arith.sitofp %375 : vector<1x8x8xi32> to vector<1x8x8xf32>
    "tpu.trace_start"() <{level = 10 : i32, message = "bij,bjk->bik"}> : () -> ()
    %cst_93 = arith.constant dense<0.000000e+00> : vector<1x8x1xf32>
    %377 = tpu.matmul %376, %33, %cst_93 {dimension_numbers = #tpu.dot_dimension_numbers<[2], [1], [1], [2], [0, 0, 0, 1, 1, 2], [0], [0]>} : vector<1x8x8xf32>, vector<1x8x1xf32>, vector<1x8x1xf32> -> vector<1x8x1xf32>
    "tpu.trace_stop"() : () -> ()
    %cst_94 = arith.constant dense<0.000000e+00> : vector<1x1xf32>
    %378 = vector.multi_reduction <add>, %377, %cst_94 [1] : vector<1x8x1xf32> to vector<1x1xf32>
    %379 = vector.shape_cast %378 : vector<1x1xf32> to vector<1x1x1xf32>
    %cst_95 = arith.constant 3.100000e+01 : f32
    %380 = vector.broadcast %cst_95 : f32 to vector<1x1x1xf32>
    %381 = arith.cmpf ole, %379, %380 : vector<1x1x1xf32>
    %382 = arith.select %381, %372, %370 : vector<1x1x1xi1>, vector<1x1x1xi32>
    %c2_i32 = arith.constant 2 : i32
    %383 = vector.broadcast %c2_i32 : i32 to vector<1x1x1xi32>
    %384 = arith.ori %382, %383 : vector<1x1x1xi32>
    %385 = vector.broadcast %384 : vector<1x1x1xi32> to vector<1x8x8xi32>
    %386 = arith.cmpi slt, %32, %385 : vector<1x8x8xi32>
    %387 = arith.extui %386 : vector<1x8x8xi1> to vector<1x8x8xi32>
    %388 = arith.sitofp %387 : vector<1x8x8xi32> to vector<1x8x8xf32>
    "tpu.trace_start"() <{level = 10 : i32, message = "bij,bjk->bik"}> : () -> ()
    %cst_96 = arith.constant dense<0.000000e+00> : vector<1x8x1xf32>
    %389 = tpu.matmul %388, %33, %cst_96 {dimension_numbers = #tpu.dot_dimension_numbers<[2], [1], [1], [2], [0, 0, 0, 1, 1, 2], [0], [0]>} : vector<1x8x8xf32>, vector<1x8x1xf32>, vector<1x8x1xf32> -> vector<1x8x1xf32>
    "tpu.trace_stop"() : () -> ()
    %cst_97 = arith.constant dense<0.000000e+00> : vector<1x1xf32>
    %390 = vector.multi_reduction <add>, %389, %cst_97 [1] : vector<1x8x1xf32> to vector<1x1xf32>
    %391 = vector.shape_cast %390 : vector<1x1xf32> to vector<1x1x1xf32>
    %cst_98 = arith.constant 3.100000e+01 : f32
    %392 = vector.broadcast %cst_98 : f32 to vector<1x1x1xf32>
    %393 = arith.cmpf ole, %391, %392 : vector<1x1x1xf32>
    %394 = arith.select %393, %384, %382 : vector<1x1x1xi1>, vector<1x1x1xi32>
    %c1_i32 = arith.constant 1 : i32
    %395 = vector.broadcast %c1_i32 : i32 to vector<1x1x1xi32>
    %396 = arith.ori %394, %395 : vector<1x1x1xi32>
    %397 = vector.broadcast %396 : vector<1x1x1xi32> to vector<1x8x8xi32>
    %398 = arith.cmpi slt, %32, %397 : vector<1x8x8xi32>
    %399 = arith.extui %398 : vector<1x8x8xi1> to vector<1x8x8xi32>
    %400 = arith.sitofp %399 : vector<1x8x8xi32> to vector<1x8x8xf32>
    "tpu.trace_start"() <{level = 10 : i32, message = "bij,bjk->bik"}> : () -> ()
    %cst_99 = arith.constant dense<0.000000e+00> : vector<1x8x1xf32>
    %401 = tpu.matmul %400, %33, %cst_99 {dimension_numbers = #tpu.dot_dimension_numbers<[2], [1], [1], [2], [0, 0, 0, 1, 1, 2], [0], [0]>} : vector<1x8x8xf32>, vector<1x8x1xf32>, vector<1x8x1xf32> -> vector<1x8x1xf32>
    "tpu.trace_stop"() : () -> ()
    %cst_100 = arith.constant dense<0.000000e+00> : vector<1x1xf32>
    %402 = vector.multi_reduction <add>, %401, %cst_100 [1] : vector<1x8x1xf32> to vector<1x1xf32>
    %403 = vector.shape_cast %402 : vector<1x1xf32> to vector<1x1x1xf32>
    %cst_101 = arith.constant 3.100000e+01 : f32
    %404 = vector.broadcast %cst_101 : f32 to vector<1x1x1xf32>
    %405 = arith.cmpf ole, %403, %404 : vector<1x1x1xf32>
    %406 = arith.select %405, %396, %394 : vector<1x1x1xi1>, vector<1x1x1xi32>
    %407 = tpu.bitcast %406 : vector<1x1x1xi32> -> vector<1x1x1xf32>
    %cst_102 = arith.constant 4.39444923 : f32
    %408 = vector.broadcast %cst_102 : f32 to vector<1x1x1xf32>
    %409 = arith.divf %407, %408 : vector<1x1x1xf32>
    %410 = math.sqrt %409 : vector<1x1x1xf32>
    %cst_103 = arith.constant 2.000000e+00 : f32
    %411 = vector.broadcast %cst_103 : f32 to vector<1x1x1xf32>
    %412 = arith.mulf %411, %410 : vector<1x1x1xf32>
    %413 = arith.mulf %412, %410 : vector<1x1x1xf32>
    %cst_104 = arith.constant 9.99999993E-9 : f32
    %414 = vector.broadcast %cst_104 : f32 to vector<1x1x1xf32>
    %415 = arith.addf %414, %413 : vector<1x1x1xf32>
    %cst_105 = arith.constant 1.000000e+00 : f32
    %416 = vector.broadcast %cst_105 : f32 to vector<1x1x1xf32>
    %417 = arith.divf %416, %415 : vector<1x1x1xf32>
    %c0_106 = arith.constant 0 : index
    %c0_107 = arith.constant 0 : index
    %c0_108 = arith.constant 0 : index
    %418 = vector.load %arg8[%c0_106, %c0_107, %c0_108] : memref<1x1x1xf32, #tpu.memory_space<vmem>>, vector<1x1x1xf32>
    tpu.vector_store %arg8[%c0_106, %c0_107, %c0_108], %417 {strides = array<i32>} : memref<1x1x1xf32, #tpu.memory_space<vmem>>, vector<1x1x1xf32>,
    %c0_109 = arith.constant 0 : index
    %c0_110 = arith.constant 0 : index
    %c0_111 = arith.constant 0 : index
    %419 = vector.load %arg7[%c0_109, %c0_110, %c0_111] : memref<1x8x8xf32, #tpu.memory_space<vmem>>, vector<1x8x8xf32>
    %cst_112 = arith.constant 0.000000e+00 : f32
    %420 = vector.broadcast %cst_112 : f32 to vector<1x1x1xf32>
    %421 = arith.subf %420, %417 : vector<1x1x1xf32>
    %422 = vector.broadcast %421 : vector<1x1x1xf32> to vector<1x8x8xf32>
    %423 = arith.mulf %422, %419 : vector<1x8x8xf32>
    %424 = math.exp %423 : vector<1x8x8xf32>
    %c0_113 = arith.constant 0 : index
    %c0_114 = arith.constant 0 : index
    %c0_115 = arith.constant 0 : index
    %425 = vector.load %arg6[%c0_113, %c0_114, %c0_115] : memref<1x8x8xf32, #tpu.memory_space<vmem>>, vector<1x8x8xf32>
    tpu.vector_store %arg6[%c0_113, %c0_114, %c0_115], %424 {strides = array<i32>} : memref<1x8x8xf32, #tpu.memory_space<vmem>>, vector<1x8x8xf32>,
    %c0_116 = arith.constant 0 : index
    %c0_117 = arith.constant 0 : index
    %c0_118 = arith.constant 0 : index
    %426 = vector.load %arg4[%c0_116, %c0_117, %c0_118] : memref<1x4x32xf32, #tpu.memory_space<vmem>>, vector<1x4x32xf32>
    %cst_119 = arith.constant 0.000000e+00 : f32
    %427 = vector.broadcast %cst_119 : f32 to vector<1x8x32xf32>
    %428 = vector.extract_strided_slice %0 {offsets = [0, 0, 0], sizes = [1, 8, 1], strides = [1, 1, 1]} : vector<1x8x4xf32> to vector<1x8x1xf32>
    %429 = vector.extract_strided_slice %426 {offsets = [0, 0, 0], sizes = [1, 1, 32], strides = [1, 1, 1]} : vector<1x4x32xf32> to vector<1x1x32xf32>
    %430 = vector.broadcast %428 : vector<1x8x1xf32> to vector<1x8x32xf32>
    %431 = vector.broadcast %429 : vector<1x1x32xf32> to vector<1x8x32xf32>
    %432 = arith.mulf %430, %431 : vector<1x8x32xf32>
    %433 = arith.addf %427, %432 : vector<1x8x32xf32>
    %434 = vector.extract_strided_slice %0 {offsets = [0, 0, 1], sizes = [1, 8, 1], strides = [1, 1, 1]} : vector<1x8x4xf32> to vector<1x8x1xf32>
    %435 = vector.extract_strided_slice %426 {offsets = [0, 1, 0], sizes = [1, 1, 32], strides = [1, 1, 1]} : vector<1x4x32xf32> to vector<1x1x32xf32>
    %436 = vector.broadcast %434 : vector<1x8x1xf32> to vector<1x8x32xf32>
    %437 = vector.broadcast %435 : vector<1x1x32xf32> to vector<1x8x32xf32>
    %438 = arith.mulf %436, %437 : vector<1x8x32xf32>
    %439 = arith.addf %433, %438 : vector<1x8x32xf32>
    %440 = vector.extract_strided_slice %0 {offsets = [0, 0, 2], sizes = [1, 8, 1], strides = [1, 1, 1]} : vector<1x8x4xf32> to vector<1x8x1xf32>
    %441 = vector.extract_strided_slice %426 {offsets = [0, 2, 0], sizes = [1, 1, 32], strides = [1, 1, 1]} : vector<1x4x32xf32> to vector<1x1x32xf32>
    %442 = vector.broadcast %440 : vector<1x8x1xf32> to vector<1x8x32xf32>
    %443 = vector.broadcast %441 : vector<1x1x32xf32> to vector<1x8x32xf32>
    %444 = arith.mulf %442, %443 : vector<1x8x32xf32>
    %445 = arith.addf %439, %444 : vector<1x8x32xf32>
    %446 = vector.extract_strided_slice %0 {offsets = [0, 0, 3], sizes = [1, 8, 1], strides = [1, 1, 1]} : vector<1x8x4xf32> to vector<1x8x1xf32>
    %447 = vector.extract_strided_slice %426 {offsets = [0, 3, 0], sizes = [1, 1, 32], strides = [1, 1, 1]} : vector<1x4x32xf32> to vector<1x1x32xf32>
    %448 = vector.broadcast %446 : vector<1x8x1xf32> to vector<1x8x32xf32>
    %449 = vector.broadcast %447 : vector<1x1x32xf32> to vector<1x8x32xf32>
    %450 = arith.mulf %448, %449 : vector<1x8x32xf32>
    %451 = arith.addf %445, %450 : vector<1x8x32xf32>
    %c0_120 = arith.constant 0 : index
    %c0_121 = arith.constant 0 : index
    %c0_122 = arith.constant 0 : index
    %452 = vector.load %arg3[%c0_120, %c0_121, %c0_122] : memref<1x1x32xf32, #tpu.memory_space<vmem>>, vector<1x1x32xf32>
    %453 = vector.broadcast %452 : vector<1x1x32xf32> to vector<1x8x32xf32>
    %454 = arith.subf %451, %453 : vector<1x8x32xf32>
    %c0_123 = arith.constant 0 : index
    %c0_124 = arith.constant 0 : index
    %c0_125 = arith.constant 0 : index
    %455 = vector.load %arg9[%c0_123, %c0_124, %c0_125] : memref<1x8x32xf32, #tpu.memory_space<vmem>>, vector<1x8x32xf32>
    tpu.vector_store %arg9[%c0_123, %c0_124, %c0_125], %454 {strides = array<i32>} : memref<1x8x32xf32, #tpu.memory_space<vmem>>, vector<1x8x32xf32>,
    %c0_126 = arith.constant 0 : index
    %c0_127 = arith.constant 0 : index
    %c0_128 = arith.constant 0 : index
    %456 = vector.load %arg5[%c0_126, %c0_127, %c0_128] : memref<1x8x32xf32, #tpu.memory_space<vmem>>, vector<1x8x32xf32>
    %cst_129 = arith.constant -2.000000e+00 : f32
    %457 = vector.broadcast %cst_129 : f32 to vector<1x1x1xf32>
    %458 = arith.mulf %457, %417 : vector<1x1x1xf32>
    %459 = vector.broadcast %458 : vector<1x1x1xf32> to vector<1x8x8xf32>
    %460 = arith.mulf %459, %424 : vector<1x8x8xf32>
    %461 = arith.truncf %460 : vector<1x8x8xf32> to vector<1x8x8xbf16>
    %462 = arith.extf %461 : vector<1x8x8xbf16> to vector<1x8x8xf32>
    %463 = arith.subf %460, %462 : vector<1x8x8xf32>
    "tpu.trace_start"() <{level = 10 : i32, message = "bij,bjl->bil"}> : () -> ()
    %cst_130 = arith.constant dense<0.000000e+00> : vector<1x8x32xf32>
    %464 = tpu.matmul %462, %456, %cst_130 {dimension_numbers = #tpu.dot_dimension_numbers<[2], [1], [1], [2], [0, 0, 0, 1, 1, 2], [0], [0]>} : vector<1x8x8xf32>, vector<1x8x32xf32>, vector<1x8x32xf32> -> vector<1x8x32xf32>
    %cst_131 = arith.constant dense<0.000000e+00> : vector<1x8x32xf32>
    %465 = tpu.matmul %463, %456, %cst_131 {dimension_numbers = #tpu.dot_dimension_numbers<[2], [1], [1], [2], [0, 0, 0, 1, 1, 2], [0], [0]>} : vector<1x8x8xf32>, vector<1x8x32xf32>, vector<1x8x32xf32> -> vector<1x8x32xf32>
    "tpu.trace_stop"() : () -> ()
    %466 = arith.addf %464, %465 : vector<1x8x32xf32>
    %467 = arith.mulf %454, %466 : vector<1x8x32xf32>
    %c0_132 = arith.constant 0 : index
    %c0_133 = arith.constant 0 : index
    %c0_134 = arith.constant 0 : index
    %468 = vector.load %arg10[%c0_132, %c0_133, %c0_134] : memref<1x8x32xf32, #tpu.memory_space<vmem>>, vector<1x8x32xf32>
    tpu.vector_store %arg10[%c0_132, %c0_133, %c0_134], %467 {strides = array<i32>} : memref<1x8x32xf32, #tpu.memory_space<vmem>>, vector<1x8x32xf32>,
    return
  }
  func.func @transform_0(%arg0: i32) -> (i32, i32, i32) {
    %c0_i32 = arith.constant 0 : i32
    %c0_i32_0 = arith.constant 0 : i32
    %c0_i32_1 = arith.constant 0 : i32
    return %arg0, %c0_i32, %c0_i32_0 : i32, i32, i32
  }
  func.func @transform_1(%arg0: i32) -> (i32, i32, i32) {
    %c0_i32 = arith.constant 0 : i32
    %c0_i32_0 = arith.constant 0 : i32
    %c0_i32_1 = arith.constant 0 : i32
    return %arg0, %c0_i32, %c0_i32_0 : i32, i32, i32
  }
  func.func @transform_2(%arg0: i32) -> (i32, i32, i32) {
    %c0_i32 = arith.constant 0 : i32
    %c0_i32_0 = arith.constant 0 : i32
    %c0_i32_1 = arith.constant 0 : i32
    return %arg0, %c0_i32, %c0_i32_0 : i32, i32, i32
  }
  func.func @transform_3(%arg0: i32) -> (i32, i32, i32) {
    %c0_i32 = arith.constant 0 : i32
    %c0_i32_0 = arith.constant 0 : i32
    %c0_i32_1 = arith.constant 0 : i32
    %c0_i32_2 = arith.constant 0 : i32
    return %c0_i32, %c0_i32_0, %c0_i32_1 : i32, i32, i32
  }
  func.func @transform_4(%arg0: i32) -> (i32, i32, i32) {
    %c0_i32 = arith.constant 0 : i32
    %c0_i32_0 = arith.constant 0 : i32
    %c0_i32_1 = arith.constant 0 : i32
    %c0_i32_2 = arith.constant 0 : i32
    return %c0_i32, %c0_i32_0, %c0_i32_1 : i32, i32, i32
  }
  func.func @transform_5(%arg0: i32) -> (i32, i32, i32) {
    %c0_i32 = arith.constant 0 : i32
    %c0_i32_0 = arith.constant 0 : i32
    %c0_i32_1 = arith.constant 0 : i32
    return %arg0, %c0_i32, %c0_i32_0 : i32, i32, i32
  }
  func.func @transform_6(%arg0: i32) -> (i32, i32, i32) {
    %c0_i32 = arith.constant 0 : i32
    %c0_i32_0 = arith.constant 0 : i32
    %c0_i32_1 = arith.constant 0 : i32
    return %arg0, %c0_i32, %c0_i32_0 : i32, i32, i32
  }
  func.func @transform_7(%arg0: i32) -> (i32, i32, i32) {
    %c0_i32 = arith.constant 0 : i32
    %c0_i32_0 = arith.constant 0 : i32
    %c0_i32_1 = arith.constant 0 : i32
    return %arg0, %c0_i32, %c0_i32_0 : i32, i32, i32
  }
  func.func @transform_8(%arg0: i32) -> (i32, i32, i32) {
    %c0_i32 = arith.constant 0 : i32
    %c0_i32_0 = arith.constant 0 : i32
    %c0_i32_1 = arith.constant 0 : i32
    return %arg0, %c0_i32, %c0_i32_0 : i32, i32, i32
  }
  func.func @transform_9(%arg0: i32) -> (i32, i32, i32) {
    %c0_i32 = arith.constant 0 : i32
    %c0_i32_0 = arith.constant 0 : i32
    %c0_i32_1 = arith.constant 0 : i32
    return %arg0, %c0_i32, %c0_i32_0 : i32, i32, i32
  }
}

</mosaic_0001>

<llo_original>
// kernel: tpu_custom_call.1
$region0: #{tpu_custom_call.1}
  #allocation0 [shape = 'u32[]', space=smem, size = 0x4, offset = 0x4, fixed_abs, tag = 'smem constant byte address 0x4 - core index']
  #allocation1 [shape = 'u32[144,128]{1,0:T(1,128)}', space=vmem, size = 0x12000, scoped, tag = 'internal scratch']
  %s0 = inlined_call_operand.vmem [shape: f32[2,8,4], index: 0, kind: input, shape index: {}]
  %s1 = inlined_call_operand.vmem [shape: f32[2,4,8], index: 1, kind: input, shape index: {}]
  %s2 = inlined_call_operand.vmem [shape: f32[2,1,32], index: 2, kind: input, shape index: {}]
  %s3 = inlined_call_operand.vmem [shape: f32[1,4,32], index: 3, kind: input, shape index: {}]
  %s4 = inlined_call_operand.vmem [shape: f32[1,8,32], index: 4, kind: input, shape index: {}]
  %s5 = inlined_call_operand.hbm [shape: f32[2,8,8], index: 5, kind: output, shape index: {0}]
  %s6 = inlined_call_operand.hbm [shape: f32[2,8,8], index: 6, kind: output, shape index: {1}]
  %s7 = inlined_call_operand.vmem [shape: f32[2,1,1], index: 7, kind: output, shape index: {2}]
  %s8 = inlined_call_operand.hbm [shape: f32[2,8,32], index: 8, kind: output, shape index: {3}]
  %s9 = inlined_call_operand.hbm [shape: f32[2,8,32], index: 9, kind: output, shape index: {4}]
  %10 = xla_tuple %s5, %s6, %s7, %s8, %s9
  %s11 = sld [smem:[#allocation0]]
  $region85: #{tpu_custom_call.1} parent=0
    _
  %s13 = ssub.s32 1, %s11
  %s14 = scalar_select 0, %s13, %s11
  $region1: #{tpu_custom_call.1} parent=0
    #allocation2 [shape = 'u8[8192]{0}', space=vmem, size = 0x2000, scoped, tag = 'output window, operand 0']
    #allocation3 [shape = 's32[2]{0}', space=sflag, size = 0x8, scoped, tag = 'scoped memory for tpu_custom_call.1']
    #allocation4 [shape = 'u8[8192]{0}', space=vmem, size = 0x2000, scoped, tag = 'output window, operand 1']
    #allocation5 [shape = 's32[2]{0}', space=sflag, size = 0x8, scoped, tag = 'scoped memory for tpu_custom_call.1']
    #allocation6 [shape = 'u8[8192]{0}', space=vmem, size = 0x2000, scoped, tag = 'output window, operand 3']
    #allocation7 [shape = 'u8[8192]{0}', space=vmem, size = 0x2000, scoped, tag = 'output window, operand 4']
    #allocation8 [shape = 's32[2]{0}', space=sflag, size = 0x8, scoped, tag = 'scoped memory for tpu_custom_call.1']
    %15 = vsyncpa [#allocation3], 0
    %s16 = scalar_lea.sflag [#allocation3], 1
    %17 = vsyncpa %s16, 0
    %18 = vsyncpa [#allocation5], 0
    %s19 = scalar_lea.sflag [#allocation5], 1
    %20 = vsyncpa %s19, 0
    %21 = vsyncpa [#allocation8], 0
    %s22 = scalar_lea.sflag [#allocation8], 1
    %23 = vsyncpa %s22, 0
    loop: start=0, step=1, limit=4
    $region2: #{tpu_custom_call.1} parent=1 // loop_pre_header
      _
    $region3: #{tpu_custom_call.1} parent=1 // loop_header
      %s25 = sphi 0, %s29
      %p26 = scmp.ge.s32.totalorder %s25, 4
      %s35 = sphi 0, %s37
      %s38 = sphi 0, %s35
      %s39 = sphi 0, %s38
      %s55 = sphi 0, %s39
      %s61 = sphi 0, %s63
      %s64 = sphi 0, %s61
      %s65 = sphi 0, %s64
      %s81 = sphi 0, %s65
      %s87 = sphi 0, %s89
      %s90 = sphi 0, %s87
      %s91 = sphi 0, %s90
      %s107 = sphi 0, %s91
      %s111 = sphi 0, %s111
      %s113 = sphi 0, %s111
      %s114 = sphi 0, %s113
      %s128 = sphi 0, %s114
      %s132 = sphi 0, %s132
      %s134 = sphi 0, %s132
      %s135 = sphi 0, %s134
      %s149 = sphi 0, %s135
      %s155 = sphi 0, %s157
      %s158 = sphi 0, %s155
      %s159 = sphi 0, %s158
      %s175 = sphi 0, %s159
      %s181 = sphi 0, %s183
      %s184 = sphi 0, %s181
      %s185 = sphi 0, %s184
      %s201 = sphi 0, %s185
      %s207 = sphi 0, %s209
      %s210 = sphi 0, %s207
      %s211 = sphi 0, %s210
      %s227 = sphi 0, %s211
      %s233 = sphi 0, %s235
      %s236 = sphi 0, %s233
      %s237 = sphi 0, %s236
      %s253 = sphi 0, %s237
      %s259 = sphi 0, %s261
      %s262 = sphi 0, %s259
      %s263 = sphi 0, %s262
      %s279 = sphi 0, %s263
    $region4: #{tpu_custom_call.1} parent=1 // loop_header_branch
      %28 = sbr.rel (%p26) target = $region8
    $region5: #{tpu_custom_call.1} parent=1 // loop_body
      %s30 = ssub.s32 %s25, 1
      %s31 = ssub.s32 %s25, 2
      %s32 = sadd.s32 %s25, 1
      %s33 = ssub.s32 %s25, %s32
      %p34 = scmp.eq.s32.totalorder %s33, 0
      %s36 = sadd.s32 %s35, 1
      %s37 = scalar_select %p34, %s35, %s36
      %p40 = pneg %p34
      %p41 = scmp.eq.s32.totalorder %s25, 1
      %p42 = por %p40, %p41
      %p43 = scmp.ne.s32.totalorder %s35, %s38
      %p44 = scmp.eq.s32.totalorder %s25, 0
      %p45 = por %p43, %p44
      %p46 = scmp.ne.s32.totalorder %s35, %s38
      %p47 = scmp.eq.s32.totalorder %s30, 1
      %p48 = por %p46, %p47
      %p49 = scmp.ne.s32.totalorder %s38, %s39
      %p50 = scmp.eq.s32.totalorder %s30, 0
      %p51 = por %p49, %p50
      %p52 = scmp.ne.s32.totalorder %s38, %s39
      %p53 = scmp.eq.s32.totalorder %s31, 1
      %p54 = por %p52, %p53
      %p56 = scmp.ne.s32.totalorder %s39, %s55
      %p57 = scmp.eq.s32.totalorder %s31, 0
      %p58 = por %p56, %p57
      %s59 = ssub.s32 %s25, %s32
      %p60 = scmp.eq.s32.totalorder %s59, 0
      %s62 = sadd.s32 %s61, 1
      %s63 = scalar_select %p60, %s61, %s62
      %p66 = pneg %p60
      %p67 = scmp.eq.s32.totalorder %s25, 1
      %p68 = por %p66, %p67
      %p69 = scmp.ne.s32.totalorder %s61, %s64
      %p70 = scmp.eq.s32.totalorder %s25, 0
      %p71 = por %p69, %p70
      %p72 = scmp.ne.s32.totalorder %s61, %s64
      %p73 = scmp.eq.s32.totalorder %s30, 1
      %p74 = por %p72, %p73
      %p75 = scmp.ne.s32.totalorder %s64, %s65
      %p76 = scmp.eq.s32.totalorder %s30, 0
      %p77 = por %p75, %p76
      %p78 = scmp.ne.s32.totalorder %s64, %s65
      %p79 = scmp.eq.s32.totalorder %s31, 1
      %p80 = por %p78, %p79
      %p82 = scmp.ne.s32.totalorder %s65, %s81
      %p83 = scmp.eq.s32.totalorder %s31, 0
      %p84 = por %p82, %p83
      %s85 = ssub.s32 %s25, %s32
      %p86 = scmp.eq.s32.totalorder %s85, 0
      %s88 = sadd.s32 %s87, 1
      %s89 = scalar_select %p86, %s87, %s88
      %p92 = pneg %p86
      %p93 = scmp.eq.s32.totalorder %s25, 1
      %p94 = por %p92, %p93
      %p95 = scmp.ne.s32.totalorder %s87, %s90
      %p96 = scmp.eq.s32.totalorder %s25, 0
      %p97 = por %p95, %p96
      %p98 = scmp.ne.s32.totalorder %s87, %s90
      %p99 = scmp.eq.s32.totalorder %s30, 1
      %p100 = por %p98, %p99
      %p101 = scmp.ne.s32.totalorder %s90, %s91
      %p102 = scmp.eq.s32.totalorder %s30, 0
      %p103 = por %p101, %p102
      %p104 = scmp.ne.s32.totalorder %s90, %s91
      %p105 = scmp.eq.s32.totalorder %s31, 1
      %p106 = por %p104, %p105
      %p108 = scmp.ne.s32.totalorder %s91, %s107
      %p109 = scmp.eq.s32.totalorder %s31, 0
      %p110 = por %p108, %p109
      %s112 = sadd.s32 %s111, 1
      %p115 = scmp.eq.s32.totalorder %s25, 1
      %p116 = scmp.ne.s32.totalorder %s111, %s113
      %p117 = scmp.eq.s32.totalorder %s25, 0
      %p118 = por %p116, %p117
      %p119 = scmp.ne.s32.totalorder %s111, %s113
      %p120 = scmp.eq.s32.totalorder %s30, 1
      %p121 = por %p119, %p120
      %p122 = scmp.ne.s32.totalorder %s113, %s114
      %p123 = scmp.eq.s32.totalorder %s30, 0
      %p124 = por %p122, %p123
      %p125 = scmp.ne.s32.totalorder %s113, %s114
      %p126 = scmp.eq.s32.totalorder %s31, 1
      %p127 = por %p125, %p126
      %p129 = scmp.ne.s32.totalorder %s114, %s128
      %p130 = scmp.eq.s32.totalorder %s31, 0
      %p131 = por %p129, %p130
      %s133 = sadd.s32 %s132, 1
      %p136 = scmp.eq.s32.totalorder %s25, 1
      %p137 = scmp.ne.s32.totalorder %s132, %s134
      %p138 = scmp.eq.s32.totalorder %s25, 0
      %p139 = por %p137, %p138
      %p140 = scmp.ne.s32.totalorder %s132, %s134
      %p141 = scmp.eq.s32.totalorder %s30, 1
      %p142 = por %p140, %p141
      %p143 = scmp.ne.s32.totalorder %s134, %s135
      %p144 = scmp.eq.s32.totalorder %s30, 0
      %p145 = por %p143, %p144
      %p146 = scmp.ne.s32.totalorder %s134, %s135
      %p147 = scmp.eq.s32.totalorder %s31, 1
      %p148 = por %p146, %p147
      %p150 = scmp.ne.s32.totalorder %s135, %s149
      %p151 = scmp.eq.s32.totalorder %s31, 0
      %p152 = por %p150, %p151
      %s153 = ssub.s32 %s25, %s32
      %p154 = scmp.eq.s32.totalorder %s153, 0
      %s156 = sadd.s32 %s155, 1
      %s157 = scalar_select %p154, %s155, %s156
      %p160 = pneg %p154
      %p161 = scmp.eq.s32.totalorder %s25, 1
      %p162 = por %p160, %p161
      %p163 = scmp.ne.s32.totalorder %s155, %s158
      %p164 = scmp.eq.s32.totalorder %s25, 0
      %p165 = por %p163, %p164
      %p166 = scmp.ne.s32.totalorder %s155, %s158
      %p167 = scmp.eq.s32.totalorder %s30, 1
      %p168 = por %p166, %p167
      %p169 = scmp.ne.s32.totalorder %s158, %s159
      %p170 = scmp.eq.s32.totalorder %s30, 0
      %p171 = por %p169, %p170
      %p172 = scmp.ne.s32.totalorder %s158, %s159
      %p173 = scmp.eq.s32.totalorder %s31, 1
      %p174 = por %p172, %p173
      %p176 = scmp.ne.s32.totalorder %s159, %s175
      %p177 = scmp.eq.s32.totalorder %s31, 0
      %p178 = por %p176, %p177
      %s179 = ssub.s32 %s25, %s32
      %p180 = scmp.eq.s32.totalorder %s179, 0
      %s182 = sadd.s32 %s181, 1
      %s183 = scalar_select %p180, %s181, %s182
      %p186 = pneg %p180
      %p187 = scmp.eq.s32.totalorder %s25, 1
      %p188 = por %p186, %p187
      %p189 = scmp.ne.s32.totalorder %s181, %s184
      %p190 = scmp.eq.s32.totalorder %s25, 0
      %p191 = por %p189, %p190
      %p192 = scmp.ne.s32.totalorder %s181, %s184
      %p193 = scmp.eq.s32.totalorder %s30, 1
      %p194 = por %p192, %p193
      %p195 = scmp.ne.s32.totalorder %s184, %s185
      %p196 = scmp.eq.s32.totalorder %s30, 0
      %p197 = por %p195, %p196
      %p198 = scmp.ne.s32.totalorder %s184, %s185
      %p199 = scmp.eq.s32.totalorder %s31, 1
      %p200 = por %p198, %p199
      %p202 = scmp.ne.s32.totalorder %s185, %s201
      %p203 = scmp.eq.s32.totalorder %s31, 0
      %p204 = por %p202, %p203
      %s205 = ssub.s32 %s25, %s32
      %p206 = scmp.eq.s32.totalorder %s205, 0
      %s208 = sadd.s32 %s207, 1
      %s209 = scalar_select %p206, %s207, %s208
      %p212 = pneg %p206
      %p213 = scmp.eq.s32.totalorder %s25, 1
      %p214 = por %p212, %p213
      %p215 = scmp.ne.s32.totalorder %s207, %s210
      %p216 = scmp.eq.s32.totalorder %s25, 0
      %p217 = por %p215, %p216
      %p218 = scmp.ne.s32.totalorder %s207, %s210
      %p219 = scmp.eq.s32.totalorder %s30, 1
      %p220 = por %p218, %p219
      %p221 = scmp.ne.s32.totalorder %s210, %s211
      %p222 = scmp.eq.s32.totalorder %s30, 0
      %p223 = por %p221, %p222
      %p224 = scmp.ne.s32.totalorder %s210, %s211
      %p225 = scmp.eq.s32.totalorder %s31, 1
      %p226 = por %p224, %p225
      %p228 = scmp.ne.s32.totalorder %s211, %s227
      %p229 = scmp.eq.s32.totalorder %s31, 0
      %p230 = por %p228, %p229
      %s231 = ssub.s32 %s25, %s32
      %p232 = scmp.eq.s32.totalorder %s231, 0
      %s234 = sadd.s32 %s233, 1
      %s235 = scalar_select %p232, %s233, %s234
      %p238 = pneg %p232
      %p239 = scmp.eq.s32.totalorder %s25, 1
      %p240 = por %p238, %p239
      %p241 = scmp.ne.s32.totalorder %s233, %s236
      %p242 = scmp.eq.s32.totalorder %s25, 0
      %p243 = por %p241, %p242
      %p244 = scmp.ne.s32.totalorder %s233, %s236
      %p245 = scmp.eq.s32.totalorder %s30, 1
      %p246 = por %p244, %p245
      %p247 = scmp.ne.s32.totalorder %s236, %s237
      %p248 = scmp.eq.s32.totalorder %s30, 0
      %p249 = por %p247, %p248
      %p250 = scmp.ne.s32.totalorder %s236, %s237
      %p251 = scmp.eq.s32.totalorder %s31, 1
      %p252 = por %p250, %p251
      %p254 = scmp.ne.s32.totalorder %s237, %s253
      %p255 = scmp.eq.s32.totalorder %s31, 0
      %p256 = por %p254, %p255
      %s257 = ssub.s32 %s25, %s32
      %p258 = scmp.eq.s32.totalorder %s257, 0
      %s260 = sadd.s32 %s259, 1
      %s261 = scalar_select %p258, %s259, %s260
      %p264 = pneg %p258
      %p265 = scmp.eq.s32.totalorder %s25, 1
      %p266 = por %p264, %p265
      %p267 = scmp.ne.s32.totalorder %s259, %s262
      %p268 = scmp.eq.s32.totalorder %s25, 0
      %p269 = por %p267, %p268
      %p270 = scmp.ne.s32.totalorder %s259, %s262
      %p271 = scmp.eq.s32.totalorder %s30, 1
      %p272 = por %p270, %p271
      %p273 = scmp.ne.s32.totalorder %s262, %s263
      %p274 = scmp.eq.s32.totalorder %s30, 0
      %p275 = por %p273, %p274
      %p276 = scmp.ne.s32.totalorder %s262, %s263
      %p277 = scmp.eq.s32.totalorder %s31, 1
      %p278 = por %p276, %p277
      %p280 = scmp.ne.s32.totalorder %s263, %s279
      %p281 = scmp.eq.s32.totalorder %s31, 0
      %p282 = por %p280, %p281
      %p283 = scmp.le.s32.totalorder 1, %s25
      %p284 = scmp.lt.s32.totalorder %s25, 3
      %p285 = pnand %p283, %p284
      %p286 = pneg %p285
      // Predicated region
      $region9: #{tpu_custom_call.1} parent=5 // pred_check
        _
      $region10: #{tpu_custom_call.1} parent=5 // pred_check_branch
        %288 = sbr.rel (%p285) target = $region12
      $region11: #{tpu_custom_call.1} parent=5 // pred_region
        %s289 = ssub.s32 %s25, 1
        // Predicated region
        $region13: #{tpu_custom_call.1} parent=11 // pred_check
          %p290 = pneg %p124
        $region14: #{tpu_custom_call.1} parent=11 // pred_check_branch
          %292 = sbr.rel (%p290) target = $region16
        $region15: #{tpu_custom_call.1} parent=11 // pred_region
          _
        $region16: #{tpu_custom_call.1} parent=11 // pred_fallthru
          _
        // Predicated region
        $region17: #{tpu_custom_call.1} parent=11 // pred_check
          %p293 = pneg %p145
        $region18: #{tpu_custom_call.1} parent=11 // pred_check_branch
          %295 = sbr.rel (%p293) target = $region20
        $region19: #{tpu_custom_call.1} parent=11 // pred_region
          _
        $region20: #{tpu_custom_call.1} parent=11 // pred_fallthru
          _
      $region12: #{tpu_custom_call.1} parent=5 // pred_fallthru
        _
      %p296 = scmp.lt.s32.totalorder %s25, 2
      // Predicated region
      $region21: #{tpu_custom_call.1} parent=5 // pred_check
        %p297 = pneg %p296
      $region22: #{tpu_custom_call.1} parent=5 // pred_check_branch
        %299 = sbr.rel (%p297) target = $region24
      $region23: #{tpu_custom_call.1} parent=5 // pred_region
        // Predicated region
        $region25: #{tpu_custom_call.1} parent=23 // pred_check
          %p300 = pneg %p45
        $region26: #{tpu_custom_call.1} parent=23 // pred_check_branch
          %302 = sbr.rel (%p300) target = $region28
        $region27: #{tpu_custom_call.1} parent=23 // pred_region
          %p303 = scmp.lt.s32.totalorder %s25, 1
          %s304 = scalar_select %p303, %s25, 1
          %s305 = smul.addr %s304, 8
          %s306 = scalar_lea.vmem %s0, %s305
        $region28: #{tpu_custom_call.1} parent=23 // pred_fallthru
          _
        // Predicated region
        $region29: #{tpu_custom_call.1} parent=23 // pred_check
          %p307 = pneg %p71
        $region30: #{tpu_custom_call.1} parent=23 // pred_check_branch
          %309 = sbr.rel (%p307) target = $region32
        $region31: #{tpu_custom_call.1} parent=23 // pred_region
          %p310 = scmp.lt.s32.totalorder %s25, 1
          %s311 = scalar_select %p310, %s25, 1
          %s312 = smul.addr %s311, 4
          %s313 = scalar_lea.vmem %s1, %s312
        $region32: #{tpu_custom_call.1} parent=23 // pred_fallthru
          _
        // Predicated region
        $region33: #{tpu_custom_call.1} parent=23 // pred_check
          %p314 = pneg %p97
        $region34: #{tpu_custom_call.1} parent=23 // pred_check_branch
          %316 = sbr.rel (%p314) target = $region36
        $region35: #{tpu_custom_call.1} parent=23 // pred_region
          %p317 = scmp.lt.s32.totalorder %s25, 1
          %s318 = scalar_select %p317, %s25, 1
          %s319 = scalar_lea.vmem %s2, %s318
        $region36: #{tpu_custom_call.1} parent=23 // pred_fallthru
          _
      $region24: #{tpu_custom_call.1} parent=5 // pred_fallthru
        _
      %p320 = scmp.le.s32.totalorder 1, %s25
      %p321 = scmp.lt.s32.totalorder %s25, 3
      %p322 = pnand %p320, %p321
      %p323 = pneg %p322
      // Predicated region
      $region37: #{tpu_custom_call.1} parent=5 // pred_check
        _
      $region38: #{tpu_custom_call.1} parent=5 // pred_check_branch
        %325 = sbr.rel (%p322) target = $region40
      $region39: #{tpu_custom_call.1} parent=5 // pred_region
        %s326 = ssub.s32 %s25, 1
        %p327 = scmp.lt.s32.totalorder %s30, 1
        %s328 = scalar_select %p327, %s30, 1
        %s329 = smul.addr %s328, 8
        %s330 = scalar_lea.vmem %s0, %s329
        %p331 = pneg %p51
        %p332 = pneg %p48
        %p333 = scmp.lt.s32.totalorder %s30, 1
        %s334 = scalar_select %p333, %s30, 1
        %s335 = smul.addr %s334, 4
        %s336 = scalar_lea.vmem %s1, %s335
        %p337 = pneg %p77
        %p338 = pneg %p74
        %p339 = scmp.lt.s32.totalorder %s30, 1
        %s340 = scalar_select %p339, %s30, 1
        %s341 = scalar_lea.vmem %s2, %s340
        %p342 = pneg %p103
        %p343 = pneg %p100
        %p344 = pneg %p124
        %p345 = pneg %p121
        %p346 = pneg %p145
        %p347 = pneg %p142
        %p348 = pneg %p171
        %p349 = pneg %p168
        %s350 = sand.u32 %s158, 1
        %s351 = scalar_lea.sflag [#allocation3], %s350
        %s352 = sand.u32 %s158, 1
        %s353 = smul.addr %s352, 8
        %s354 = scalar_lea.vmem [#allocation2], %s353
        %p355 = pneg %p197
        %p356 = pneg %p194
        %s357 = sand.u32 %s30, 1
        %s358 = scalar_lea.sflag [#allocation5], %s357
        %s359 = sand.u32 %s184, 1
        %s360 = smul.addr %s359, 8
        %s361 = scalar_lea.vmem [#allocation4], %s360
        %p362 = pneg %p223
        %p363 = pneg %p220
        %p364 = scmp.lt.s32.totalorder %s30, 1
        %s365 = scalar_select %p364, %s30, 1
        %s366 = scalar_lea.vmem %s7, %s365
        %p367 = pneg %p249
        %p368 = pneg %p246
        %s369 = sand.u32 %s30, 1
        %s370 = scalar_lea.sflag [#allocation5], %s369
        %s371 = sand.u32 %s236, 1
        %s372 = smul.addr %s371, 8
        %s373 = scalar_lea.vmem [#allocation6], %s372
        %p374 = pneg %p275
        %p375 = pneg %p272
        %s376 = sand.u32 %s262, 1
        %s377 = scalar_lea.sflag [#allocation8], %s376
        %s378 = sand.u32 %s262, 1
        %s379 = smul.addr %s378, 8
        %s380 = scalar_lea.vmem [#allocation7], %s379
        %p381 = scmp.lt.s32.totalorder %s30, 1
        %s382 = scalar_select %p381, %s30, 1
        %s383 = smul.addr %s382, 8
        %s384 = scalar_lea.vmem %s0, %s383
        %p385 = scmp.lt.s32.totalorder %s30, 1
        %s386 = scalar_select %p385, %s30, 1
        %s387 = smul.addr %s386, 4
        %s388 = scalar_lea.vmem %s1, %s387
        %p389 = scmp.lt.s32.totalorder %s30, 1
        %s390 = scalar_select %p389, %s30, 1
        %s391 = scalar_lea.vmem %s2, %s390
        %p392 = scmp.lt.s32.totalorder %s30, 1
        %s393 = scalar_select %p392, %s30, 1
        %s394 = scalar_lea.vmem %s7, %s393
        %v395 = vld [vmem:[%s384] sm:$0xff]
        %v396 = vld [vmem:[%s388] sm:$0xf]
        %398 = vset.pattern.permute.xlu0 0
        %399 = vperm.xlu0 %398, %v395
        %v400 = vpop.permute.xlu0 %399
        %v402 = vlaneseq
        %v403 = vshrl.u32 %v402, 7
        %v404 = vsub.s32 0, %v403
        %v405 = vrot.slane %v396, %v404
        %v406 = vsub.f32 %v400, %v405
        %v407 = vmul.f32 %v406, %v406
        %v408 = vadd.f32 %v407, 0.0
        %409 = vset.pattern.permute.xlu0 1
        %410 = vperm.xlu0 %409, %v395
        %v411 = vpop.permute.xlu0 %410
        %v413 = vlaneseq
        %v414 = vshrl.u32 %v413, 7
        %v415 = vsub.s32 1, %v414
        %v416 = vrot.slane %v396, %v415
        %v417 = vsub.f32 %v411, %v416
        %v418 = vmul.f32 %v417, %v417
        %v419 = vadd.f32 %v408, %v418
        %420 = vset.pattern.permute.xlu0 2
        %421 = vperm.xlu0 %420, %v395
        %v422 = vpop.permute.xlu0 %421
        %v424 = vlaneseq
        %v425 = vshrl.u32 %v424, 7
        %v426 = vsub.s32 2, %v425
        %v427 = vrot.slane %v396, %v426
        %v428 = vsub.f32 %v422, %v427
        %v429 = vmul.f32 %v428, %v428
        %v430 = vadd.f32 %v419, %v429
        %431 = vset.pattern.permute.xlu0 3
        %432 = vperm.xlu0 %431, %v395
        %v433 = vpop.permute.xlu0 %432
        %v435 = vlaneseq
        %v436 = vshrl.u32 %v435, 7
        %v437 = vsub.s32 3, %v436
        %v438 = vrot.slane %v396, %v437
        %v439 = vsub.f32 %v433, %v438
        %v440 = vmul.f32 %v439, %v439
        %v441 = vadd.f32 %v430, %v440
        %vm442 = vcmask 64512
        %443 = vst.msk [vmem:[%s361] sm:$0xff] %vm442, %v441
        %vm445 = vcmp.lt.s32.totalorder %v441, 1073741824
        %v446 = vsel %vm445, 1, 0
        %v447 = vcvt.s32.f32 %v446
        %v449 = vsel %vm442, %v447, 0
        %451 = vmatprep.subr.mxu0 0.0
        %452 = vmatpush1.msra.mxu0 0.0
        %453 = vmatprep.subr.mxu0 0.0
        %454 = vmatpush1.msra.mxu0 0.0
        %455 = vmatprep.subr.mxu0 0.0
        %456 = vmatpush1.msra.mxu0 0.0
        %457 = vmatprep.subr.mxu0 0.0
        %458 = vmatpush1.msra.mxu0 0.0
        %459 = vmatprep.subr.mxu0 0.0
        %460 = vmatpush1.msra.mxu0 0.0
        %461 = vmatprep.subr.mxu0 0.0
        %462 = vmatpush1.msra.mxu0 0.0
        %463 = vmatprep.subr.mxu0 0.0
        %464 = vmatpush1.msra.mxu0 0.0
        %465 = vmatprep.subr.mxu0 0.0
        %466 = vmatpush1.msra.mxu0 0.0
        %467 = vmatprep.subr.mxu0 0.0
        %468 = vmatpush1.msra.mxu0 0.0
        %469 = vmatprep.subr.mxu0 0.0
        %470 = vmatpush1.msra.mxu0 0.0
        %471 = vmatprep.subr.mxu0 0.0
        %472 = vmatpush1.msra.mxu0 0.0
        %473 = vmatprep.subr.mxu0 0.0
        %474 = vmatpush1.msra.mxu0 0.0
        %475 = vmatprep.subr.mxu0 0.0
        %476 = vmatpush1.msra.mxu0 0.0
        %477 = vmatprep.subr.mxu0 0.0
        %478 = vmatpush1.msra.mxu0 0.0
        %479 = vmatprep.subr.mxu0 0.0
        %480 = vmatpush1.msra.mxu0 0.0
        %481 = vmatprep.subr.mxu0 0.0
        %482 = vmatpush1.msra.mxu0 1.0
        %483 = vmatprep.subr.mxu0 0.0
        %484 = vmatpush2.msra.mxu0 0.0
        %485 = vmatprep.subr.mxu0 0.0
        %486 = vmatpush2.msra.mxu0 0.0
        %487 = vmatprep.subr.mxu0 0.0
        %488 = vmatpush2.msra.mxu0 0.0
        %489 = vmatprep.subr.mxu0 0.0
        %490 = vmatpush2.msra.mxu0 0.0
        %491 = vmatprep.subr.mxu0 0.0
        %492 = vmatpush2.msra.mxu0 0.0
        %493 = vmatprep.subr.mxu0 0.0
        %494 = vmatpush2.msra.mxu0 0.0
        %495 = vmatprep.subr.mxu0 0.0
        %496 = vmatpush2.msra.mxu0 0.0
        %497 = vmatprep.subr.mxu0 0.0
        %498 = vmatpush2.msra.mxu0 0.0
        %499 = vmatprep.subr.mxu0 0.0
        %500 = vmatpush2.msra.mxu0 0.0
        %501 = vmatprep.subr.mxu0 0.0
        %502 = vmatpush2.msra.mxu0 0.0
        %503 = vmatprep.subr.mxu0 0.0
        %504 = vmatpush2.msra.mxu0 0.0
        %505 = vmatprep.subr.mxu0 0.0
        %506 = vmatpush2.msra.mxu0 0.0
        %507 = vmatprep.subr.mxu0 0.0
        %508 = vmatpush2.msra.mxu0 0.0
        %509 = vmatprep.subr.mxu0 0.0
        %510 = vmatpush2.msra.mxu0 0.0
        %511 = vmatprep.subr.mxu0 0.0
        %512 = vmatpush2.msra.mxu0 0.0
        %513 = vmatprep.subr.mxu0 0.0
        %514 = vmatpush2.msra.mxu0 0.0
        %515 = vmatprep.mubr.f32.mxu0 0.0
        %516 = vmatmul.mubr.f32.gmra.mxu0 %v449
        %v517 = vpop.f32.mrf.mxu0
        %v518 = vadd.f32 0.0, %v517
        %v519 = vpop.f32.mrf.mxu0
        %520 = vdwg.mxu0
        %vm521 = vcmask 7168
        %v522 = vsel %vm521, %v518, 0.0
        %v523 = vrot.slane %v522, 4
        %v524 = vadd.f32 %v522, %v523
        %v525 = vrot.slane %v524, 2
        %v526 = vadd.f32 %v524, %v525
        %v527 = vrot.slane %v526, 1
        %v528 = vadd.f32 %v526, %v527
        %vm529 = vcmp.le.f32.partialorder %v528, 31.0
        %v530 = vsel %vm529, 1073741824, 0
        %v531 = vor.u32 %v530, 536870912
        %532 = vset.pattern.permute.xlu0 0
        %533 = vperm.xlu0 %532, %v531
        %v534 = vpop.permute.xlu0 %533
        %vm535 = vcmp.lt.s32.totalorder %v441, %v534
        %v536 = vsel %vm535, 1, 0
        %v537 = vcvt.s32.f32 %v536
        %v539 = vsel %vm442, %v537, 0
        %541 = vmatprep.subr.mxu0 0.0
        %542 = vmatpush1.msra.mxu0 0.0
        %543 = vmatprep.subr.mxu0 0.0
        %544 = vmatpush1.msra.mxu0 0.0
        %545 = vmatprep.subr.mxu0 0.0
        %546 = vmatpush1.msra.mxu0 0.0
        %547 = vmatprep.subr.mxu0 0.0
        %548 = vmatpush1.msra.mxu0 0.0
        %549 = vmatprep.subr.mxu0 0.0
        %550 = vmatpush1.msra.mxu0 0.0
        %551 = vmatprep.subr.mxu0 0.0
        %552 = vmatpush1.msra.mxu0 0.0
        %553 = vmatprep.subr.mxu0 0.0
        %554 = vmatpush1.msra.mxu0 0.0
        %555 = vmatprep.subr.mxu0 0.0
        %556 = vmatpush1.msra.mxu0 0.0
        %557 = vmatprep.subr.mxu0 0.0
        %558 = vmatpush1.msra.mxu0 0.0
        %559 = vmatprep.subr.mxu0 0.0
        %560 = vmatpush1.msra.mxu0 0.0
        %561 = vmatprep.subr.mxu0 0.0
        %562 = vmatpush1.msra.mxu0 0.0
        %563 = vmatprep.subr.mxu0 0.0
        %564 = vmatpush1.msra.mxu0 0.0
        %565 = vmatprep.subr.mxu0 0.0
        %566 = vmatpush1.msra.mxu0 0.0
        %567 = vmatprep.subr.mxu0 0.0
        %568 = vmatpush1.msra.mxu0 0.0
        %569 = vmatprep.subr.mxu0 0.0
        %570 = vmatpush1.msra.mxu0 0.0
        %571 = vmatprep.subr.mxu0 0.0
        %572 = vmatpush1.msra.mxu0 1.0
        %573 = vmatprep.subr.mxu0 0.0
        %574 = vmatpush2.msra.mxu0 0.0
        %575 = vmatprep.subr.mxu0 0.0
        %576 = vmatpush2.msra.mxu0 0.0
        %577 = vmatprep.subr.mxu0 0.0
        %578 = vmatpush2.msra.mxu0 0.0
        %579 = vmatprep.subr.mxu0 0.0
        %580 = vmatpush2.msra.mxu0 0.0
        %581 = vmatprep.subr.mxu0 0.0
        %582 = vmatpush2.msra.mxu0 0.0
        %583 = vmatprep.subr.mxu0 0.0
        %584 = vmatpush2.msra.mxu0 0.0
        %585 = vmatprep.subr.mxu0 0.0
        %586 = vmatpush2.msra.mxu0 0.0
        %587 = vmatprep.subr.mxu0 0.0
        %588 = vmatpush2.msra.mxu0 0.0
        %589 = vmatprep.subr.mxu0 0.0
        %590 = vmatpush2.msra.mxu0 0.0
        %591 = vmatprep.subr.mxu0 0.0
        %592 = vmatpush2.msra.mxu0 0.0
        %593 = vmatprep.subr.mxu0 0.0
        %594 = vmatpush2.msra.mxu0 0.0
        %595 = vmatprep.subr.mxu0 0.0
        %596 = vmatpush2.msra.mxu0 0.0
        %597 = vmatprep.subr.mxu0 0.0
        %598 = vmatpush2.msra.mxu0 0.0
        %599 = vmatprep.subr.mxu0 0.0
        %600 = vmatpush2.msra.mxu0 0.0
        %601 = vmatprep.subr.mxu0 0.0
        %602 = vmatpush2.msra.mxu0 0.0
        %603 = vmatprep.subr.mxu0 0.0
        %604 = vmatpush2.msra.mxu0 0.0
        %605 = vmatprep.mubr.f32.mxu0 0.0
        %606 = vmatmul.mubr.f32.gmra.mxu0 %v539
        %v607 = vpop.f32.mrf.mxu0
        %v608 = vadd.f32 0.0, %v607
        %v609 = vpop.f32.mrf.mxu0
        %610 = vdwg.mxu0
        %v611 = vsel %vm521, %v608, 0.0
        %v612 = vrot.slane %v611, 4
        %v613 = vadd.f32 %v611, %v612
        %v614 = vrot.slane %v613, 2
        %v615 = vadd.f32 %v613, %v614
        %v616 = vrot.slane %v615, 1
        %v617 = vadd.f32 %v615, %v616
        %vm618 = vcmp.le.f32.partialorder %v617, 31.0
        %v619 = vsel %vm618, %v531, %v530
        %v620 = vor.u32 %v619, 268435456
        %621 = vset.pattern.permute.xlu0 0
        %622 = vperm.xlu0 %621, %v620
        %v623 = vpop.permute.xlu0 %622
        %vm624 = vcmp.lt.s32.totalorder %v441, %v623
        %v625 = vsel %vm624, 1, 0
        %v626 = vcvt.s32.f32 %v625
        %v628 = vsel %vm442, %v626, 0
        %630 = vmatprep.subr.mxu0 0.0
        %631 = vmatpush1.msra.mxu0 0.0
        %632 = vmatprep.subr.mxu0 0.0
        %633 = vmatpush1.msra.mxu0 0.0
        %634 = vmatprep.subr.mxu0 0.0
        %635 = vmatpush1.msra.mxu0 0.0
        %636 = vmatprep.subr.mxu0 0.0
        %637 = vmatpush1.msra.mxu0 0.0
        %638 = vmatprep.subr.mxu0 0.0
        %639 = vmatpush1.msra.mxu0 0.0
        %640 = vmatprep.subr.mxu0 0.0
        %641 = vmatpush1.msra.mxu0 0.0
        %642 = vmatprep.subr.mxu0 0.0
        %643 = vmatpush1.msra.mxu0 0.0
        %644 = vmatprep.subr.mxu0 0.0
        %645 = vmatpush1.msra.mxu0 0.0
        %646 = vmatprep.subr.mxu0 0.0
        %647 = vmatpush1.msra.mxu0 0.0
        %648 = vmatprep.subr.mxu0 0.0
        %649 = vmatpush1.msra.mxu0 0.0
        %650 = vmatprep.subr.mxu0 0.0
        %651 = vmatpush1.msra.mxu0 0.0
        %652 = vmatprep.subr.mxu0 0.0
        %653 = vmatpush1.msra.mxu0 0.0
        %654 = vmatprep.subr.mxu0 0.0
        %655 = vmatpush1.msra.mxu0 0.0
        %656 = vmatprep.subr.mxu0 0.0
        %657 = vmatpush1.msra.mxu0 0.0
        %658 = vmatprep.subr.mxu0 0.0
        %659 = vmatpush1.msra.mxu0 0.0
        %660 = vmatprep.subr.mxu0 0.0
        %661 = vmatpush1.msra.mxu0 1.0
        %662 = vmatprep.subr.mxu0 0.0
        %663 = vmatpush2.msra.mxu0 0.0
        %664 = vmatprep.subr.mxu0 0.0
        %665 = vmatpush2.msra.mxu0 0.0
        %666 = vmatprep.subr.mxu0 0.0
        %667 = vmatpush2.msra.mxu0 0.0
        %668 = vmatprep.subr.mxu0 0.0
        %669 = vmatpush2.msra.mxu0 0.0
        %670 = vmatprep.subr.mxu0 0.0
        %671 = vmatpush2.msra.mxu0 0.0
        %672 = vmatprep.subr.mxu0 0.0
        %673 = vmatpush2.msra.mxu0 0.0
        %674 = vmatprep.subr.mxu0 0.0
        %675 = vmatpush2.msra.mxu0 0.0
        %676 = vmatprep.subr.mxu0 0.0
        %677 = vmatpush2.msra.mxu0 0.0
        %678 = vmatprep.subr.mxu0 0.0
        %679 = vmatpush2.msra.mxu0 0.0
        %680 = vmatprep.subr.mxu0 0.0
        %681 = vmatpush2.msra.mxu0 0.0
        %682 = vmatprep.subr.mxu0 0.0
        %683 = vmatpush2.msra.mxu0 0.0
        %684 = vmatprep.subr.mxu0 0.0
        %685 = vmatpush2.msra.mxu0 0.0
        %686 = vmatprep.subr.mxu0 0.0
        %687 = vmatpush2.msra.mxu0 0.0
        %688 = vmatprep.subr.mxu0 0.0
        %689 = vmatpush2.msra.mxu0 0.0
        %690 = vmatprep.subr.mxu0 0.0
        %691 = vmatpush2.msra.mxu0 0.0
        %692 = vmatprep.subr.mxu0 0.0
        %693 = vmatpush2.msra.mxu0 0.0
        %694 = vmatprep.mubr.f32.mxu0 0.0
        %695 = vmatmul.mubr.f32.gmra.mxu0 %v628
        %v696 = vpop.f32.mrf.mxu0
        %v697 = vadd.f32 0.0, %v696
        %v698 = vpop.f32.mrf.mxu0
        %699 = vdwg.mxu0
        %v700 = vsel %vm521, %v697, 0.0
        %v701 = vrot.slane %v700, 4
        %v702 = vadd.f32 %v700, %v701
        %v703 = vrot.slane %v702, 2
        %v704 = vadd.f32 %v702, %v703
        %v705 = vrot.slane %v704, 1
        %v706 = vadd.f32 %v704, %v705
        %vm707 = vcmp.le.f32.partialorder %v706, 31.0
        %v708 = vsel %vm707, %v620, %v619
        %v709 = vor.u32 %v708, 134217728
        %710 = vset.pattern.permute.xlu0 0
        %711 = vperm.xlu0 %710, %v709
        %v712 = vpop.permute.xlu0 %711
        %vm713 = vcmp.lt.s32.totalorder %v441, %v712
        %v714 = vsel %vm713, 1, 0
        %v715 = vcvt.s32.f32 %v714
        %v717 = vsel %vm442, %v715, 0
        %719 = vmatprep.subr.mxu0 0.0
        %720 = vmatpush1.msra.mxu0 0.0
        %721 = vmatprep.subr.mxu0 0.0
        %722 = vmatpush1.msra.mxu0 0.0
        %723 = vmatprep.subr.mxu0 0.0
        %724 = vmatpush1.msra.mxu0 0.0
        %725 = vmatprep.subr.mxu0 0.0
        %726 = vmatpush1.msra.mxu0 0.0
        %727 = vmatprep.subr.mxu0 0.0
        %728 = vmatpush1.msra.mxu0 0.0
        %729 = vmatprep.subr.mxu0 0.0
        %730 = vmatpush1.msra.mxu0 0.0
        %731 = vmatprep.subr.mxu0 0.0
        %732 = vmatpush1.msra.mxu0 0.0
        %733 = vmatprep.subr.mxu0 0.0
        %734 = vmatpush1.msra.mxu0 0.0
        %735 = vmatprep.subr.mxu0 0.0
        %736 = vmatpush1.msra.mxu0 0.0
        %737 = vmatprep.subr.mxu0 0.0
        %738 = vmatpush1.msra.mxu0 0.0
        %739 = vmatprep.subr.mxu0 0.0
        %740 = vmatpush1.msra.mxu0 0.0
        %741 = vmatprep.subr.mxu0 0.0
        %742 = vmatpush1.msra.mxu0 0.0
        %743 = vmatprep.subr.mxu0 0.0
        %744 = vmatpush1.msra.mxu0 0.0
        %745 = vmatprep.subr.mxu0 0.0
        %746 = vmatpush1.msra.mxu0 0.0
        %747 = vmatprep.subr.mxu0 0.0
        %748 = vmatpush1.msra.mxu0 0.0
        %749 = vmatprep.subr.mxu0 0.0
        %750 = vmatpush1.msra.mxu0 1.0
        %751 = vmatprep.subr.mxu0 0.0
        %752 = vmatpush2.msra.mxu0 0.0
        %753 = vmatprep.subr.mxu0 0.0
        %754 = vmatpush2.msra.mxu0 0.0
        %755 = vmatprep.subr.mxu0 0.0
        %756 = vmatpush2.msra.mxu0 0.0
        %757 = vmatprep.subr.mxu0 0.0
        %758 = vmatpush2.msra.mxu0 0.0
        %759 = vmatprep.subr.mxu0 0.0
        %760 = vmatpush2.msra.mxu0 0.0
        %761 = vmatprep.subr.mxu0 0.0
        %762 = vmatpush2.msra.mxu0 0.0
        %763 = vmatprep.subr.mxu0 0.0
        %764 = vmatpush2.msra.mxu0 0.0
        %765 = vmatprep.subr.mxu0 0.0
        %766 = vmatpush2.msra.mxu0 0.0
        %767 = vmatprep.subr.mxu0 0.0
        %768 = vmatpush2.msra.mxu0 0.0
        %769 = vmatprep.subr.mxu0 0.0
        %770 = vmatpush2.msra.mxu0 0.0
        %771 = vmatprep.subr.mxu0 0.0
        %772 = vmatpush2.msra.mxu0 0.0
        %773 = vmatprep.subr.mxu0 0.0
        %774 = vmatpush2.msra.mxu0 0.0
        %775 = vmatprep.subr.mxu0 0.0
        %776 = vmatpush2.msra.mxu0 0.0
        %777 = vmatprep.subr.mxu0 0.0
        %778 = vmatpush2.msra.mxu0 0.0
        %779 = vmatprep.subr.mxu0 0.0
        %780 = vmatpush2.msra.mxu0 0.0
        %781 = vmatprep.subr.mxu0 0.0
        %782 = vmatpush2.msra.mxu0 0.0
        %783 = vmatprep.mubr.f32.mxu0 0.0
        %784 = vmatmul.mubr.f32.gmra.mxu0 %v717
        %v785 = vpop.f32.mrf.mxu0
        %v786 = vadd.f32 0.0, %v785
        %v787 = vpop.f32.mrf.mxu0
        %788 = vdwg.mxu0
        %v789 = vsel %vm521, %v786, 0.0
        %v790 = vrot.slane %v789, 4
        %v791 = vadd.f32 %v789, %v790
        %v792 = vrot.slane %v791, 2
        %v793 = vadd.f32 %v791, %v792
        %v794 = vrot.slane %v793, 1
        %v795 = vadd.f32 %v793, %v794
        %vm796 = vcmp.le.f32.partialorder %v795, 31.0
        %v797 = vsel %vm796, %v709, %v708
        %v798 = vor.u32 %v797, 67108864
        %799 = vset.pattern.permute.xlu0 0
        %800 = vperm.xlu0 %799, %v798
        %v801 = vpop.permute.xlu0 %800
        %vm802 = vcmp.lt.s32.totalorder %v441, %v801
        %v803 = vsel %vm802, 1, 0
        %v804 = vcvt.s32.f32 %v803
        %v806 = vsel %vm442, %v804, 0
        %808 = vmatprep.subr.mxu0 0.0
        %809 = vmatpush1.msra.mxu0 0.0
        %810 = vmatprep.subr.mxu0 0.0
        %811 = vmatpush1.msra.mxu0 0.0
        %812 = vmatprep.subr.mxu0 0.0
        %813 = vmatpush1.msra.mxu0 0.0
        %814 = vmatprep.subr.mxu0 0.0
        %815 = vmatpush1.msra.mxu0 0.0
        %816 = vmatprep.subr.mxu0 0.0
        %817 = vmatpush1.msra.mxu0 0.0
        %818 = vmatprep.subr.mxu0 0.0
        %819 = vmatpush1.msra.mxu0 0.0
        %820 = vmatprep.subr.mxu0 0.0
        %821 = vmatpush1.msra.mxu0 0.0
        %822 = vmatprep.subr.mxu0 0.0
        %823 = vmatpush1.msra.mxu0 0.0
        %824 = vmatprep.subr.mxu0 0.0
        %825 = vmatpush1.msra.mxu0 0.0
        %826 = vmatprep.subr.mxu0 0.0
        %827 = vmatpush1.msra.mxu0 0.0
        %828 = vmatprep.subr.mxu0 0.0
        %829 = vmatpush1.msra.mxu0 0.0
        %830 = vmatprep.subr.mxu0 0.0
        %831 = vmatpush1.msra.mxu0 0.0
        %832 = vmatprep.subr.mxu0 0.0
        %833 = vmatpush1.msra.mxu0 0.0
        %834 = vmatprep.subr.mxu0 0.0
        %835 = vmatpush1.msra.mxu0 0.0
        %836 = vmatprep.subr.mxu0 0.0
        %837 = vmatpush1.msra.mxu0 0.0
        %838 = vmatprep.subr.mxu0 0.0
        %839 = vmatpush1.msra.mxu0 1.0
        %840 = vmatprep.subr.mxu0 0.0
        %841 = vmatpush2.msra.mxu0 0.0
        %842 = vmatprep.subr.mxu0 0.0
        %843 = vmatpush2.msra.mxu0 0.0
        %844 = vmatprep.subr.mxu0 0.0
        %845 = vmatpush2.msra.mxu0 0.0
        %846 = vmatprep.subr.mxu0 0.0
        %847 = vmatpush2.msra.mxu0 0.0
        %848 = vmatprep.subr.mxu0 0.0
        %849 = vmatpush2.msra.mxu0 0.0
        %850 = vmatprep.subr.mxu0 0.0
        %851 = vmatpush2.msra.mxu0 0.0
        %852 = vmatprep.subr.mxu0 0.0
        %853 = vmatpush2.msra.mxu0 0.0
        %854 = vmatprep.subr.mxu0 0.0
        %855 = vmatpush2.msra.mxu0 0.0
        %856 = vmatprep.subr.mxu0 0.0
        %857 = vmatpush2.msra.mxu0 0.0
        %858 = vmatprep.subr.mxu0 0.0
        %859 = vmatpush2.msra.mxu0 0.0
        %860 = vmatprep.subr.mxu0 0.0
        %861 = vmatpush2.msra.mxu0 0.0
        %862 = vmatprep.subr.mxu0 0.0
        %863 = vmatpush2.msra.mxu0 0.0
        %864 = vmatprep.subr.mxu0 0.0
        %865 = vmatpush2.msra.mxu0 0.0
        %866 = vmatprep.subr.mxu0 0.0
        %867 = vmatpush2.msra.mxu0 0.0
        %868 = vmatprep.subr.mxu0 0.0
        %869 = vmatpush2.msra.mxu0 0.0
        %870 = vmatprep.subr.mxu0 0.0
        %871 = vmatpush2.msra.mxu0 0.0
        %872 = vmatprep.mubr.f32.mxu0 0.0
        %873 = vmatmul.mubr.f32.gmra.mxu0 %v806
        %v874 = vpop.f32.mrf.mxu0
        %v875 = vadd.f32 0.0, %v874
        %v876 = vpop.f32.mrf.mxu0
        %877 = vdwg.mxu0
        %v878 = vsel %vm521, %v875, 0.0
        %v879 = vrot.slane %v878, 4
        %v880 = vadd.f32 %v878, %v879
        %v881 = vrot.slane %v880, 2
        %v882 = vadd.f32 %v880, %v881
        %v883 = vrot.slane %v882, 1
        %v884 = vadd.f32 %v882, %v883
        %vm885 = vcmp.le.f32.partialorder %v884, 31.0
        %v886 = vsel %vm885, %v798, %v797
        %v887 = vor.u32 %v886, 33554432
        %888 = vset.pattern.permute.xlu0 0
        %889 = vperm.xlu0 %888, %v887
        %v890 = vpop.permute.xlu0 %889
        %vm891 = vcmp.lt.s32.totalorder %v441, %v890
        %v892 = vsel %vm891, 1, 0
        %v893 = vcvt.s32.f32 %v892
        %v895 = vsel %vm442, %v893, 0
        %897 = vmatprep.subr.mxu0 0.0
        %898 = vmatpush1.msra.mxu0 0.0
        %899 = vmatprep.subr.mxu0 0.0
        %900 = vmatpush1.msra.mxu0 0.0
        %901 = vmatprep.subr.mxu0 0.0
        %902 = vmatpush1.msra.mxu0 0.0
        %903 = vmatprep.subr.mxu0 0.0
        %904 = vmatpush1.msra.mxu0 0.0
        %905 = vmatprep.subr.mxu0 0.0
        %906 = vmatpush1.msra.mxu0 0.0
        %907 = vmatprep.subr.mxu0 0.0
        %908 = vmatpush1.msra.mxu0 0.0
        %909 = vmatprep.subr.mxu0 0.0
        %910 = vmatpush1.msra.mxu0 0.0
        %911 = vmatprep.subr.mxu0 0.0
        %912 = vmatpush1.msra.mxu0 0.0
        %913 = vmatprep.subr.mxu0 0.0
        %914 = vmatpush1.msra.mxu0 0.0
        %915 = vmatprep.subr.mxu0 0.0
        %916 = vmatpush1.msra.mxu0 0.0
        %917 = vmatprep.subr.mxu0 0.0
        %918 = vmatpush1.msra.mxu0 0.0
        %919 = vmatprep.subr.mxu0 0.0
        %920 = vmatpush1.msra.mxu0 0.0
        %921 = vmatprep.subr.mxu0 0.0
        %922 = vmatpush1.msra.mxu0 0.0
        %923 = vmatprep.subr.mxu0 0.0
        %924 = vmatpush1.msra.mxu0 0.0
        %925 = vmatprep.subr.mxu0 0.0
        %926 = vmatpush1.msra.mxu0 0.0
        %927 = vmatprep.subr.mxu0 0.0
        %928 = vmatpush1.msra.mxu0 1.0
        %929 = vmatprep.subr.mxu0 0.0
        %930 = vmatpush2.msra.mxu0 0.0
        %931 = vmatprep.subr.mxu0 0.0
        %932 = vmatpush2.msra.mxu0 0.0
        %933 = vmatprep.subr.mxu0 0.0
        %934 = vmatpush2.msra.mxu0 0.0
        %935 = vmatprep.subr.mxu0 0.0
        %936 = vmatpush2.msra.mxu0 0.0
        %937 = vmatprep.subr.mxu0 0.0
        %938 = vmatpush2.msra.mxu0 0.0
        %939 = vmatprep.subr.mxu0 0.0
        %940 = vmatpush2.msra.mxu0 0.0
        %941 = vmatprep.subr.mxu0 0.0
        %942 = vmatpush2.msra.mxu0 0.0
        %943 = vmatprep.subr.mxu0 0.0
        %944 = vmatpush2.msra.mxu0 0.0
        %945 = vmatprep.subr.mxu0 0.0
        %946 = vmatpush2.msra.mxu0 0.0
        %947 = vmatprep.subr.mxu0 0.0
        %948 = vmatpush2.msra.mxu0 0.0
        %949 = vmatprep.subr.mxu0 0.0
        %950 = vmatpush2.msra.mxu0 0.0
        %951 = vmatprep.subr.mxu0 0.0
        %952 = vmatpush2.msra.mxu0 0.0
        %953 = vmatprep.subr.mxu0 0.0
        %954 = vmatpush2.msra.mxu0 0.0
        %955 = vmatprep.subr.mxu0 0.0
        %956 = vmatpush2.msra.mxu0 0.0
        %957 = vmatprep.subr.mxu0 0.0
        %958 = vmatpush2.msra.mxu0 0.0
        %959 = vmatprep.subr.mxu0 0.0
        %960 = vmatpush2.msra.mxu0 0.0
        %961 = vmatprep.mubr.f32.mxu0 0.0
        %962 = vmatmul.mubr.f32.gmra.mxu0 %v895
        %v963 = vpop.f32.mrf.mxu0
        %v964 = vadd.f32 0.0, %v963
        %v965 = vpop.f32.mrf.mxu0
        %966 = vdwg.mxu0
        %v967 = vsel %vm521, %v964, 0.0
        %v968 = vrot.slane %v967, 4
        %v969 = vadd.f32 %v967, %v968
        %v970 = vrot.slane %v969, 2
        %v971 = vadd.f32 %v969, %v970
        %v972 = vrot.slane %v971, 1
        %v973 = vadd.f32 %v971, %v972
        %vm974 = vcmp.le.f32.partialorder %v973, 31.0
        %v975 = vsel %vm974, %v887, %v886
        %v976 = vor.u32 %v975, 16777216
        %977 = vset.pattern.permute.xlu0 0
        %978 = vperm.xlu0 %977, %v976
        %v979 = vpop.permute.xlu0 %978
        %vm980 = vcmp.lt.s32.totalorder %v441, %v979
        %v981 = vsel %vm980, 1, 0
        %v982 = vcvt.s32.f32 %v981
        %v984 = vsel %vm442, %v982, 0
        %986 = vmatprep.subr.mxu0 0.0
        %987 = vmatpush1.msra.mxu0 0.0
        %988 = vmatprep.subr.mxu0 0.0
        %989 = vmatpush1.msra.mxu0 0.0
        %990 = vmatprep.subr.mxu0 0.0
        %991 = vmatpush1.msra.mxu0 0.0
        %992 = vmatprep.subr.mxu0 0.0
        %993 = vmatpush1.msra.mxu0 0.0
        %994 = vmatprep.subr.mxu0 0.0
        %995 = vmatpush1.msra.mxu0 0.0
        %996 = vmatprep.subr.mxu0 0.0
        %997 = vmatpush1.msra.mxu0 0.0
        %998 = vmatprep.subr.mxu0 0.0
        %999 = vmatpush1.msra.mxu0 0.0
        %1000 = vmatprep.subr.mxu0 0.0
        %1001 = vmatpush1.msra.mxu0 0.0
        %1002 = vmatprep.subr.mxu0 0.0
        %1003 = vmatpush1.msra.mxu0 0.0
        %1004 = vmatprep.subr.mxu0 0.0
        %1005 = vmatpush1.msra.mxu0 0.0
        %1006 = vmatprep.subr.mxu0 0.0
        %1007 = vmatpush1.msra.mxu0 0.0
        %1008 = vmatprep.subr.mxu0 0.0
        %1009 = vmatpush1.msra.mxu0 0.0
        %1010 = vmatprep.subr.mxu0 0.0
        %1011 = vmatpush1.msra.mxu0 0.0
        %1012 = vmatprep.subr.mxu0 0.0
        %1013 = vmatpush1.msra.mxu0 0.0
        %1014 = vmatprep.subr.mxu0 0.0
        %1015 = vmatpush1.msra.mxu0 0.0
        %1016 = vmatprep.subr.mxu0 0.0
        %1017 = vmatpush1.msra.mxu0 1.0
        %1018 = vmatprep.subr.mxu0 0.0
        %1019 = vmatpush2.msra.mxu0 0.0
        %1020 = vmatprep.subr.mxu0 0.0
        %1021 = vmatpush2.msra.mxu0 0.0
        %1022 = vmatprep.subr.mxu0 0.0
        %1023 = vmatpush2.msra.mxu0 0.0
        %1024 = vmatprep.subr.mxu0 0.0
        %1025 = vmatpush2.msra.mxu0 0.0
        %1026 = vmatprep.subr.mxu0 0.0
        %1027 = vmatpush2.msra.mxu0 0.0
        %1028 = vmatprep.subr.mxu0 0.0
        %1029 = vmatpush2.msra.mxu0 0.0
        %1030 = vmatprep.subr.mxu0 0.0
        %1031 = vmatpush2.msra.mxu0 0.0
        %1032 = vmatprep.subr.mxu0 0.0
        %1033 = vmatpush2.msra.mxu0 0.0
        %1034 = vmatprep.subr.mxu0 0.0
        %1035 = vmatpush2.msra.mxu0 0.0
        %1036 = vmatprep.subr.mxu0 0.0
        %1037 = vmatpush2.msra.mxu0 0.0
        %1038 = vmatprep.subr.mxu0 0.0
        %1039 = vmatpush2.msra.mxu0 0.0
        %1040 = vmatprep.subr.mxu0 0.0
        %1041 = vmatpush2.msra.mxu0 0.0
        %1042 = vmatprep.subr.mxu0 0.0
        %1043 = vmatpush2.msra.mxu0 0.0
        %1044 = vmatprep.subr.mxu0 0.0
        %1045 = vmatpush2.msra.mxu0 0.0
        %1046 = vmatprep.subr.mxu0 0.0
        %1047 = vmatpush2.msra.mxu0 0.0
        %1048 = vmatprep.subr.mxu0 0.0
        %1049 = vmatpush2.msra.mxu0 0.0
        %1050 = vmatprep.mubr.f32.mxu0 0.0
        %1051 = vmatmul.mubr.f32.gmra.mxu0 %v984
        %v1052 = vpop.f32.mrf.mxu0
        %v1053 = vadd.f32 0.0, %v1052
        %v1054 = vpop.f32.mrf.mxu0
        %1055 = vdwg.mxu0
        %v1056 = vsel %vm521, %v1053, 0.0
        %v1057 = vrot.slane %v1056, 4
        %v1058 = vadd.f32 %v1056, %v1057
        %v1059 = vrot.slane %v1058, 2
        %v1060 = vadd.f32 %v1058, %v1059
        %v1061 = vrot.slane %v1060, 1
        %v1062 = vadd.f32 %v1060, %v1061
        %vm1063 = vcmp.le.f32.partialorder %v1062, 31.0
        %v1064 = vsel %vm1063, %v976, %v975
        %v1065 = vor.u32 %v1064, 8388608
        %1066 = vset.pattern.permute.xlu0 0
        %1067 = vperm.xlu0 %1066, %v1065
        %v1068 = vpop.permute.xlu0 %1067
        %vm1069 = vcmp.lt.s32.totalorder %v441, %v1068
        %v1070 = vsel %vm1069, 1, 0
        %v1071 = vcvt.s32.f32 %v1070
        %v1073 = vsel %vm442, %v1071, 0
        %1075 = vmatprep.subr.mxu0 0.0
        %1076 = vmatpush1.msra.mxu0 0.0
        %1077 = vmatprep.subr.mxu0 0.0
        %1078 = vmatpush1.msra.mxu0 0.0
        %1079 = vmatprep.subr.mxu0 0.0
        %1080 = vmatpush1.msra.mxu0 0.0
        %1081 = vmatprep.subr.mxu0 0.0
        %1082 = vmatpush1.msra.mxu0 0.0
        %1083 = vmatprep.subr.mxu0 0.0
        %1084 = vmatpush1.msra.mxu0 0.0
        %1085 = vmatprep.subr.mxu0 0.0
        %1086 = vmatpush1.msra.mxu0 0.0
        %1087 = vmatprep.subr.mxu0 0.0
        %1088 = vmatpush1.msra.mxu0 0.0
        %1089 = vmatprep.subr.mxu0 0.0
        %1090 = vmatpush1.msra.mxu0 0.0
        %1091 = vmatprep.subr.mxu0 0.0
        %1092 = vmatpush1.msra.mxu0 0.0
        %1093 = vmatprep.subr.mxu0 0.0
        %1094 = vmatpush1.msra.mxu0 0.0
        %1095 = vmatprep.subr.mxu0 0.0
        %1096 = vmatpush1.msra.mxu0 0.0
        %1097 = vmatprep.subr.mxu0 0.0
        %1098 = vmatpush1.msra.mxu0 0.0
        %1099 = vmatprep.subr.mxu0 0.0
        %1100 = vmatpush1.msra.mxu0 0.0
        %1101 = vmatprep.subr.mxu0 0.0
        %1102 = vmatpush1.msra.mxu0 0.0
        %1103 = vmatprep.subr.mxu0 0.0
        %1104 = vmatpush1.msra.mxu0 0.0
        %1105 = vmatprep.subr.mxu0 0.0
        %1106 = vmatpush1.msra.mxu0 1.0
        %1107 = vmatprep.subr.mxu0 0.0
        %1108 = vmatpush2.msra.mxu0 0.0
        %1109 = vmatprep.subr.mxu0 0.0
        %1110 = vmatpush2.msra.mxu0 0.0
        %1111 = vmatprep.subr.mxu0 0.0
        %1112 = vmatpush2.msra.mxu0 0.0
        %1113 = vmatprep.subr.mxu0 0.0
        %1114 = vmatpush2.msra.mxu0 0.0
        %1115 = vmatprep.subr.mxu0 0.0
        %1116 = vmatpush2.msra.mxu0 0.0
        %1117 = vmatprep.subr.mxu0 0.0
        %1118 = vmatpush2.msra.mxu0 0.0
        %1119 = vmatprep.subr.mxu0 0.0
        %1120 = vmatpush2.msra.mxu0 0.0
        %1121 = vmatprep.subr.mxu0 0.0
        %1122 = vmatpush2.msra.mxu0 0.0
        %1123 = vmatprep.subr.mxu0 0.0
        %1124 = vmatpush2.msra.mxu0 0.0
        %1125 = vmatprep.subr.mxu0 0.0
        %1126 = vmatpush2.msra.mxu0 0.0
        %1127 = vmatprep.subr.mxu0 0.0
        %1128 = vmatpush2.msra.mxu0 0.0
        %1129 = vmatprep.subr.mxu0 0.0
        %1130 = vmatpush2.msra.mxu0 0.0
        %1131 = vmatprep.subr.mxu0 0.0
        %1132 = vmatpush2.msra.mxu0 0.0
        %1133 = vmatprep.subr.mxu0 0.0
        %1134 = vmatpush2.msra.mxu0 0.0
        %1135 = vmatprep.subr.mxu0 0.0
        %1136 = vmatpush2.msra.mxu0 0.0
        %1137 = vmatprep.subr.mxu0 0.0
        %1138 = vmatpush2.msra.mxu0 0.0
        %1139 = vmatprep.mubr.f32.mxu0 0.0
        %1140 = vmatmul.mubr.f32.gmra.mxu0 %v1073
        %v1141 = vpop.f32.mrf.mxu0
        %v1142 = vadd.f32 0.0, %v1141
        %v1143 = vpop.f32.mrf.mxu0
        %1144 = vdwg.mxu0
        %v1145 = vsel %vm521, %v1142, 0.0
        %v1146 = vrot.slane %v1145, 4
        %v1147 = vadd.f32 %v1145, %v1146
        %v1148 = vrot.slane %v1147, 2
        %v1149 = vadd.f32 %v1147, %v1148
        %v1150 = vrot.slane %v1149, 1
        %v1151 = vadd.f32 %v1149, %v1150
        %vm1152 = vcmp.le.f32.partialorder %v1151, 31.0
        %v1153 = vsel %vm1152, %v1065, %v1064
        %v1154 = vor.u32 %v1153, 4194304
        %1155 = vset.pattern.permute.xlu0 0
        %1156 = vperm.xlu0 %1155, %v1154
        %v1157 = vpop.permute.xlu0 %1156
        %vm1158 = vcmp.lt.s32.totalorder %v441, %v1157
        %v1159 = vsel %vm1158, 1, 0
        %v1160 = vcvt.s32.f32 %v1159
        %v1162 = vsel %vm442, %v1160, 0
        %1164 = vmatprep.subr.mxu0 0.0
        %1165 = vmatpush1.msra.mxu0 0.0
        %1166 = vmatprep.subr.mxu0 0.0
        %1167 = vmatpush1.msra.mxu0 0.0
        %1168 = vmatprep.subr.mxu0 0.0
        %1169 = vmatpush1.msra.mxu0 0.0
        %1170 = vmatprep.subr.mxu0 0.0
        %1171 = vmatpush1.msra.mxu0 0.0
        %1172 = vmatprep.subr.mxu0 0.0
        %1173 = vmatpush1.msra.mxu0 0.0
        %1174 = vmatprep.subr.mxu0 0.0
        %1175 = vmatpush1.msra.mxu0 0.0
        %1176 = vmatprep.subr.mxu0 0.0
        %1177 = vmatpush1.msra.mxu0 0.0
        %1178 = vmatprep.subr.mxu0 0.0
        %1179 = vmatpush1.msra.mxu0 0.0
        %1180 = vmatprep.subr.mxu0 0.0
        %1181 = vmatpush1.msra.mxu0 0.0
        %1182 = vmatprep.subr.mxu0 0.0
        %1183 = vmatpush1.msra.mxu0 0.0
        %1184 = vmatprep.subr.mxu0 0.0
        %1185 = vmatpush1.msra.mxu0 0.0
        %1186 = vmatprep.subr.mxu0 0.0
        %1187 = vmatpush1.msra.mxu0 0.0
        %1188 = vmatprep.subr.mxu0 0.0
        %1189 = vmatpush1.msra.mxu0 0.0
        %1190 = vmatprep.subr.mxu0 0.0
        %1191 = vmatpush1.msra.mxu0 0.0
        %1192 = vmatprep.subr.mxu0 0.0
        %1193 = vmatpush1.msra.mxu0 0.0
        %1194 = vmatprep.subr.mxu0 0.0
        %1195 = vmatpush1.msra.mxu0 1.0
        %1196 = vmatprep.subr.mxu0 0.0
        %1197 = vmatpush2.msra.mxu0 0.0
        %1198 = vmatprep.subr.mxu0 0.0
        %1199 = vmatpush2.msra.mxu0 0.0
        %1200 = vmatprep.subr.mxu0 0.0
        %1201 = vmatpush2.msra.mxu0 0.0
        %1202 = vmatprep.subr.mxu0 0.0
        %1203 = vmatpush2.msra.mxu0 0.0
        %1204 = vmatprep.subr.mxu0 0.0
        %1205 = vmatpush2.msra.mxu0 0.0
        %1206 = vmatprep.subr.mxu0 0.0
        %1207 = vmatpush2.msra.mxu0 0.0
        %1208 = vmatprep.subr.mxu0 0.0
        %1209 = vmatpush2.msra.mxu0 0.0
        %1210 = vmatprep.subr.mxu0 0.0
        %1211 = vmatpush2.msra.mxu0 0.0
        %1212 = vmatprep.subr.mxu0 0.0
        %1213 = vmatpush2.msra.mxu0 0.0
        %1214 = vmatprep.subr.mxu0 0.0
        %1215 = vmatpush2.msra.mxu0 0.0
        %1216 = vmatprep.subr.mxu0 0.0
        %1217 = vmatpush2.msra.mxu0 0.0
        %1218 = vmatprep.subr.mxu0 0.0
        %1219 = vmatpush2.msra.mxu0 0.0
        %1220 = vmatprep.subr.mxu0 0.0
        %1221 = vmatpush2.msra.mxu0 0.0
        %1222 = vmatprep.subr.mxu0 0.0
        %1223 = vmatpush2.msra.mxu0 0.0
        %1224 = vmatprep.subr.mxu0 0.0
        %1225 = vmatpush2.msra.mxu0 0.0
        %1226 = vmatprep.subr.mxu0 0.0
        %1227 = vmatpush2.msra.mxu0 0.0
        %1228 = vmatprep.mubr.f32.mxu0 0.0
        %1229 = vmatmul.mubr.f32.gmra.mxu0 %v1162
        %v1230 = vpop.f32.mrf.mxu0
        %v1231 = vadd.f32 0.0, %v1230
        %v1232 = vpop.f32.mrf.mxu0
        %1233 = vdwg.mxu0
        %v1234 = vsel %vm521, %v1231, 0.0
        %v1235 = vrot.slane %v1234, 4
        %v1236 = vadd.f32 %v1234, %v1235
        %v1237 = vrot.slane %v1236, 2
        %v1238 = vadd.f32 %v1236, %v1237
        %v1239 = vrot.slane %v1238, 1
        %v1240 = vadd.f32 %v1238, %v1239
        %vm1241 = vcmp.le.f32.partialorder %v1240, 31.0
        %v1242 = vsel %vm1241, %v1154, %v1153
        %v1243 = vor.u32 %v1242, 2097152
        %1244 = vset.pattern.permute.xlu0 0
        %1245 = vperm.xlu0 %1244, %v1243
        %v1246 = vpop.permute.xlu0 %1245
        %vm1247 = vcmp.lt.s32.totalorder %v441, %v1246
        %v1248 = vsel %vm1247, 1, 0
        %v1249 = vcvt.s32.f32 %v1248
        %v1251 = vsel %vm442, %v1249, 0
        %1253 = vmatprep.subr.mxu0 0.0
        %1254 = vmatpush1.msra.mxu0 0.0
        %1255 = vmatprep.subr.mxu0 0.0
        %1256 = vmatpush1.msra.mxu0 0.0
        %1257 = vmatprep.subr.mxu0 0.0
        %1258 = vmatpush1.msra.mxu0 0.0
        %1259 = vmatprep.subr.mxu0 0.0
        %1260 = vmatpush1.msra.mxu0 0.0
        %1261 = vmatprep.subr.mxu0 0.0
        %1262 = vmatpush1.msra.mxu0 0.0
        %1263 = vmatprep.subr.mxu0 0.0
        %1264 = vmatpush1.msra.mxu0 0.0
        %1265 = vmatprep.subr.mxu0 0.0
        %1266 = vmatpush1.msra.mxu0 0.0
        %1267 = vmatprep.subr.mxu0 0.0
        %1268 = vmatpush1.msra.mxu0 0.0
        %1269 = vmatprep.subr.mxu0 0.0
        %1270 = vmatpush1.msra.mxu0 0.0
        %1271 = vmatprep.subr.mxu0 0.0
        %1272 = vmatpush1.msra.mxu0 0.0
        %1273 = vmatprep.subr.mxu0 0.0
        %1274 = vmatpush1.msra.mxu0 0.0
        %1275 = vmatprep.subr.mxu0 0.0
        %1276 = vmatpush1.msra.mxu0 0.0
        %1277 = vmatprep.subr.mxu0 0.0
        %1278 = vmatpush1.msra.mxu0 0.0
        %1279 = vmatprep.subr.mxu0 0.0
        %1280 = vmatpush1.msra.mxu0 0.0
        %1281 = vmatprep.subr.mxu0 0.0
        %1282 = vmatpush1.msra.mxu0 0.0
        %1283 = vmatprep.subr.mxu0 0.0
        %1284 = vmatpush1.msra.mxu0 1.0
        %1285 = vmatprep.subr.mxu0 0.0
        %1286 = vmatpush2.msra.mxu0 0.0
        %1287 = vmatprep.subr.mxu0 0.0
        %1288 = vmatpush2.msra.mxu0 0.0
        %1289 = vmatprep.subr.mxu0 0.0
        %1290 = vmatpush2.msra.mxu0 0.0
        %1291 = vmatprep.subr.mxu0 0.0
        %1292 = vmatpush2.msra.mxu0 0.0
        %1293 = vmatprep.subr.mxu0 0.0
        %1294 = vmatpush2.msra.mxu0 0.0
        %1295 = vmatprep.subr.mxu0 0.0
        %1296 = vmatpush2.msra.mxu0 0.0
        %1297 = vmatprep.subr.mxu0 0.0
        %1298 = vmatpush2.msra.mxu0 0.0
        %1299 = vmatprep.subr.mxu0 0.0
        %1300 = vmatpush2.msra.mxu0 0.0
        %1301 = vmatprep.subr.mxu0 0.0
        %1302 = vmatpush2.msra.mxu0 0.0
        %1303 = vmatprep.subr.mxu0 0.0
        %1304 = vmatpush2.msra.mxu0 0.0
        %1305 = vmatprep.subr.mxu0 0.0
        %1306 = vmatpush2.msra.mxu0 0.0
        %1307 = vmatprep.subr.mxu0 0.0
        %1308 = vmatpush2.msra.mxu0 0.0
        %1309 = vmatprep.subr.mxu0 0.0
        %1310 = vmatpush2.msra.mxu0 0.0
        %1311 = vmatprep.subr.mxu0 0.0
        %1312 = vmatpush2.msra.mxu0 0.0
        %1313 = vmatprep.subr.mxu0 0.0
        %1314 = vmatpush2.msra.mxu0 0.0
        %1315 = vmatprep.subr.mxu0 0.0
        %1316 = vmatpush2.msra.mxu0 0.0
        %1317 = vmatprep.mubr.f32.mxu0 0.0
        %1318 = vmatmul.mubr.f32.gmra.mxu0 %v1251
        %v1319 = vpop.f32.mrf.mxu0
        %v1320 = vadd.f32 0.0, %v1319
        %v1321 = vpop.f32.mrf.mxu0
        %1322 = vdwg.mxu0
        %v1323 = vsel %vm521, %v1320, 0.0
        %v1324 = vrot.slane %v1323, 4
        %v1325 = vadd.f32 %v1323, %v1324
        %v1326 = vrot.slane %v1325, 2
        %v1327 = vadd.f32 %v1325, %v1326
        %v1328 = vrot.slane %v1327, 1
        %v1329 = vadd.f32 %v1327, %v1328
        %vm1330 = vcmp.le.f32.partialorder %v1329, 31.0
        %v1331 = vsel %vm1330, %v1243, %v1242
        %v1332 = vor.u32 %v1331, 1048576
        %1333 = vset.pattern.permute.xlu0 0
        %1334 = vperm.xlu0 %1333, %v1332
        %v1335 = vpop.permute.xlu0 %1334
        %vm1336 = vcmp.lt.s32.totalorder %v441, %v1335
        %v1337 = vsel %vm1336, 1, 0
        %v1338 = vcvt.s32.f32 %v1337
        %v1340 = vsel %vm442, %v1338, 0
        %1342 = vmatprep.subr.mxu0 0.0
        %1343 = vmatpush1.msra.mxu0 0.0
        %1344 = vmatprep.subr.mxu0 0.0
        %1345 = vmatpush1.msra.mxu0 0.0
        %1346 = vmatprep.subr.mxu0 0.0
        %1347 = vmatpush1.msra.mxu0 0.0
        %1348 = vmatprep.subr.mxu0 0.0
        %1349 = vmatpush1.msra.mxu0 0.0
        %1350 = vmatprep.subr.mxu0 0.0
        %1351 = vmatpush1.msra.mxu0 0.0
        %1352 = vmatprep.subr.mxu0 0.0
        %1353 = vmatpush1.msra.mxu0 0.0
        %1354 = vmatprep.subr.mxu0 0.0
        %1355 = vmatpush1.msra.mxu0 0.0
        %1356 = vmatprep.subr.mxu0 0.0
        %1357 = vmatpush1.msra.mxu0 0.0
        %1358 = vmatprep.subr.mxu0 0.0
        %1359 = vmatpush1.msra.mxu0 0.0
        %1360 = vmatprep.subr.mxu0 0.0
        %1361 = vmatpush1.msra.mxu0 0.0
        %1362 = vmatprep.subr.mxu0 0.0
        %1363 = vmatpush1.msra.mxu0 0.0
        %1364 = vmatprep.subr.mxu0 0.0
        %1365 = vmatpush1.msra.mxu0 0.0
        %1366 = vmatprep.subr.mxu0 0.0
        %1367 = vmatpush1.msra.mxu0 0.0
        %1368 = vmatprep.subr.mxu0 0.0
        %1369 = vmatpush1.msra.mxu0 0.0
        %1370 = vmatprep.subr.mxu0 0.0
        %1371 = vmatpush1.msra.mxu0 0.0
        %1372 = vmatprep.subr.mxu0 0.0
        %1373 = vmatpush1.msra.mxu0 1.0
        %1374 = vmatprep.subr.mxu0 0.0
        %1375 = vmatpush2.msra.mxu0 0.0
        %1376 = vmatprep.subr.mxu0 0.0
        %1377 = vmatpush2.msra.mxu0 0.0
        %1378 = vmatprep.subr.mxu0 0.0
        %1379 = vmatpush2.msra.mxu0 0.0
        %1380 = vmatprep.subr.mxu0 0.0
        %1381 = vmatpush2.msra.mxu0 0.0
        %1382 = vmatprep.subr.mxu0 0.0
        %1383 = vmatpush2.msra.mxu0 0.0
        %1384 = vmatprep.subr.mxu0 0.0
        %1385 = vmatpush2.msra.mxu0 0.0
        %1386 = vmatprep.subr.mxu0 0.0
        %1387 = vmatpush2.msra.mxu0 0.0
        %1388 = vmatprep.subr.mxu0 0.0
        %1389 = vmatpush2.msra.mxu0 0.0
        %1390 = vmatprep.subr.mxu0 0.0
        %1391 = vmatpush2.msra.mxu0 0.0
        %1392 = vmatprep.subr.mxu0 0.0
        %1393 = vmatpush2.msra.mxu0 0.0
        %1394 = vmatprep.subr.mxu0 0.0
        %1395 = vmatpush2.msra.mxu0 0.0
        %1396 = vmatprep.subr.mxu0 0.0
        %1397 = vmatpush2.msra.mxu0 0.0
        %1398 = vmatprep.subr.mxu0 0.0
        %1399 = vmatpush2.msra.mxu0 0.0
        %1400 = vmatprep.subr.mxu0 0.0
        %1401 = vmatpush2.msra.mxu0 0.0
        %1402 = vmatprep.subr.mxu0 0.0
        %1403 = vmatpush2.msra.mxu0 0.0
        %1404 = vmatprep.subr.mxu0 0.0
        %1405 = vmatpush2.msra.mxu0 0.0
        %1406 = vmatprep.mubr.f32.mxu0 0.0
        %1407 = vmatmul.mubr.f32.gmra.mxu0 %v1340
        %v1408 = vpop.f32.mrf.mxu0
        %v1409 = vadd.f32 0.0, %v1408
        %v1410 = vpop.f32.mrf.mxu0
        %1411 = vdwg.mxu0
        %v1412 = vsel %vm521, %v1409, 0.0
        %v1413 = vrot.slane %v1412, 4
        %v1414 = vadd.f32 %v1412, %v1413
        %v1415 = vrot.slane %v1414, 2
        %v1416 = vadd.f32 %v1414, %v1415
        %v1417 = vrot.slane %v1416, 1
        %v1418 = vadd.f32 %v1416, %v1417
        %vm1419 = vcmp.le.f32.partialorder %v1418, 31.0
        %v1420 = vsel %vm1419, %v1332, %v1331
        %v1421 = vor.u32 %v1420, 524288
        %1422 = vset.pattern.permute.xlu0 0
        %1423 = vperm.xlu0 %1422, %v1421
        %v1424 = vpop.permute.xlu0 %1423
        %vm1425 = vcmp.lt.s32.totalorder %v441, %v1424
        %v1426 = vsel %vm1425, 1, 0
        %v1427 = vcvt.s32.f32 %v1426
        %v1429 = vsel %vm442, %v1427, 0
        %1431 = vmatprep.subr.mxu0 0.0
        %1432 = vmatpush1.msra.mxu0 0.0
        %1433 = vmatprep.subr.mxu0 0.0
        %1434 = vmatpush1.msra.mxu0 0.0
        %1435 = vmatprep.subr.mxu0 0.0
        %1436 = vmatpush1.msra.mxu0 0.0
        %1437 = vmatprep.subr.mxu0 0.0
        %1438 = vmatpush1.msra.mxu0 0.0
        %1439 = vmatprep.subr.mxu0 0.0
        %1440 = vmatpush1.msra.mxu0 0.0
        %1441 = vmatprep.subr.mxu0 0.0
        %1442 = vmatpush1.msra.mxu0 0.0
        %1443 = vmatprep.subr.mxu0 0.0
        %1444 = vmatpush1.msra.mxu0 0.0
        %1445 = vmatprep.subr.mxu0 0.0
        %1446 = vmatpush1.msra.mxu0 0.0
        %1447 = vmatprep.subr.mxu0 0.0
        %1448 = vmatpush1.msra.mxu0 0.0
        %1449 = vmatprep.subr.mxu0 0.0
        %1450 = vmatpush1.msra.mxu0 0.0
        %1451 = vmatprep.subr.mxu0 0.0
        %1452 = vmatpush1.msra.mxu0 0.0
        %1453 = vmatprep.subr.mxu0 0.0
        %1454 = vmatpush1.msra.mxu0 0.0
        %1455 = vmatprep.subr.mxu0 0.0
        %1456 = vmatpush1.msra.mxu0 0.0
        %1457 = vmatprep.subr.mxu0 0.0
        %1458 = vmatpush1.msra.mxu0 0.0
        %1459 = vmatprep.subr.mxu0 0.0
        %1460 = vmatpush1.msra.mxu0 0.0
        %1461 = vmatprep.subr.mxu0 0.0
        %1462 = vmatpush1.msra.mxu0 1.0
        %1463 = vmatprep.subr.mxu0 0.0
        %1464 = vmatpush2.msra.mxu0 0.0
        %1465 = vmatprep.subr.mxu0 0.0
        %1466 = vmatpush2.msra.mxu0 0.0
        %1467 = vmatprep.subr.mxu0 0.0
        %1468 = vmatpush2.msra.mxu0 0.0
        %1469 = vmatprep.subr.mxu0 0.0
        %1470 = vmatpush2.msra.mxu0 0.0
        %1471 = vmatprep.subr.mxu0 0.0
        %1472 = vmatpush2.msra.mxu0 0.0
        %1473 = vmatprep.subr.mxu0 0.0
        %1474 = vmatpush2.msra.mxu0 0.0
        %1475 = vmatprep.subr.mxu0 0.0
        %1476 = vmatpush2.msra.mxu0 0.0
        %1477 = vmatprep.subr.mxu0 0.0
        %1478 = vmatpush2.msra.mxu0 0.0
        %1479 = vmatprep.subr.mxu0 0.0
        %1480 = vmatpush2.msra.mxu0 0.0
        %1481 = vmatprep.subr.mxu0 0.0
        %1482 = vmatpush2.msra.mxu0 0.0
        %1483 = vmatprep.subr.mxu0 0.0
        %1484 = vmatpush2.msra.mxu0 0.0
        %1485 = vmatprep.subr.mxu0 0.0
        %1486 = vmatpush2.msra.mxu0 0.0
        %1487 = vmatprep.subr.mxu0 0.0
        %1488 = vmatpush2.msra.mxu0 0.0
        %1489 = vmatprep.subr.mxu0 0.0
        %1490 = vmatpush2.msra.mxu0 0.0
        %1491 = vmatprep.subr.mxu0 0.0
        %1492 = vmatpush2.msra.mxu0 0.0
        %1493 = vmatprep.subr.mxu0 0.0
        %1494 = vmatpush2.msra.mxu0 0.0
        %1495 = vmatprep.mubr.f32.mxu0 0.0
        %1496 = vmatmul.mubr.f32.gmra.mxu0 %v1429
        %v1497 = vpop.f32.mrf.mxu0
        %v1498 = vadd.f32 0.0, %v1497
        %v1499 = vpop.f32.mrf.mxu0
        %1500 = vdwg.mxu0
        %v1501 = vsel %vm521, %v1498, 0.0
        %v1502 = vrot.slane %v1501, 4
        %v1503 = vadd.f32 %v1501, %v1502
        %v1504 = vrot.slane %v1503, 2
        %v1505 = vadd.f32 %v1503, %v1504
        %v1506 = vrot.slane %v1505, 1
        %v1507 = vadd.f32 %v1505, %v1506
        %vm1508 = vcmp.le.f32.partialorder %v1507, 31.0
        %v1509 = vsel %vm1508, %v1421, %v1420
        %v1510 = vor.u32 %v1509, 262144
        %1511 = vset.pattern.permute.xlu0 0
        %1512 = vperm.xlu0 %1511, %v1510
        %v1513 = vpop.permute.xlu0 %1512
        %vm1514 = vcmp.lt.s32.totalorder %v441, %v1513
        %v1515 = vsel %vm1514, 1, 0
        %v1516 = vcvt.s32.f32 %v1515
        %v1518 = vsel %vm442, %v1516, 0
        %1520 = vmatprep.subr.mxu0 0.0
        %1521 = vmatpush1.msra.mxu0 0.0
        %1522 = vmatprep.subr.mxu0 0.0
        %1523 = vmatpush1.msra.mxu0 0.0
        %1524 = vmatprep.subr.mxu0 0.0
        %1525 = vmatpush1.msra.mxu0 0.0
        %1526 = vmatprep.subr.mxu0 0.0
        %1527 = vmatpush1.msra.mxu0 0.0
        %1528 = vmatprep.subr.mxu0 0.0
        %1529 = vmatpush1.msra.mxu0 0.0
        %1530 = vmatprep.subr.mxu0 0.0
        %1531 = vmatpush1.msra.mxu0 0.0
        %1532 = vmatprep.subr.mxu0 0.0
        %1533 = vmatpush1.msra.mxu0 0.0
        %1534 = vmatprep.subr.mxu0 0.0
        %1535 = vmatpush1.msra.mxu0 0.0
        %1536 = vmatprep.subr.mxu0 0.0
        %1537 = vmatpush1.msra.mxu0 0.0
        %1538 = vmatprep.subr.mxu0 0.0
        %1539 = vmatpush1.msra.mxu0 0.0
        %1540 = vmatprep.subr.mxu0 0.0
        %1541 = vmatpush1.msra.mxu0 0.0
        %1542 = vmatprep.subr.mxu0 0.0
        %1543 = vmatpush1.msra.mxu0 0.0
        %1544 = vmatprep.subr.mxu0 0.0
        %1545 = vmatpush1.msra.mxu0 0.0
        %1546 = vmatprep.subr.mxu0 0.0
        %1547 = vmatpush1.msra.mxu0 0.0
        %1548 = vmatprep.subr.mxu0 0.0
        %1549 = vmatpush1.msra.mxu0 0.0
        %1550 = vmatprep.subr.mxu0 0.0
        %1551 = vmatpush1.msra.mxu0 1.0
        %1552 = vmatprep.subr.mxu0 0.0
        %1553 = vmatpush2.msra.mxu0 0.0
        %1554 = vmatprep.subr.mxu0 0.0
        %1555 = vmatpush2.msra.mxu0 0.0
        %1556 = vmatprep.subr.mxu0 0.0
        %1557 = vmatpush2.msra.mxu0 0.0
        %1558 = vmatprep.subr.mxu0 0.0
        %1559 = vmatpush2.msra.mxu0 0.0
        %1560 = vmatprep.subr.mxu0 0.0
        %1561 = vmatpush2.msra.mxu0 0.0
        %1562 = vmatprep.subr.mxu0 0.0
        %1563 = vmatpush2.msra.mxu0 0.0
        %1564 = vmatprep.subr.mxu0 0.0
        %1565 = vmatpush2.msra.mxu0 0.0
        %1566 = vmatprep.subr.mxu0 0.0
        %1567 = vmatpush2.msra.mxu0 0.0
        %1568 = vmatprep.subr.mxu0 0.0
        %1569 = vmatpush2.msra.mxu0 0.0
        %1570 = vmatprep.subr.mxu0 0.0
        %1571 = vmatpush2.msra.mxu0 0.0
        %1572 = vmatprep.subr.mxu0 0.0
        %1573 = vmatpush2.msra.mxu0 0.0
        %1574 = vmatprep.subr.mxu0 0.0
        %1575 = vmatpush2.msra.mxu0 0.0
        %1576 = vmatprep.subr.mxu0 0.0
        %1577 = vmatpush2.msra.mxu0 0.0
        %1578 = vmatprep.subr.mxu0 0.0
        %1579 = vmatpush2.msra.mxu0 0.0
        %1580 = vmatprep.subr.mxu0 0.0
        %1581 = vmatpush2.msra.mxu0 0.0
        %1582 = vmatprep.subr.mxu0 0.0
        %1583 = vmatpush2.msra.mxu0 0.0
        %1584 = vmatprep.mubr.f32.mxu0 0.0
        %1585 = vmatmul.mubr.f32.gmra.mxu0 %v1518
        %v1586 = vpop.f32.mrf.mxu0
        %v1587 = vadd.f32 0.0, %v1586
        %v1588 = vpop.f32.mrf.mxu0
        %1589 = vdwg.mxu0
        %v1590 = vsel %vm521, %v1587, 0.0
        %v1591 = vrot.slane %v1590, 4
        %v1592 = vadd.f32 %v1590, %v1591
        %v1593 = vrot.slane %v1592, 2
        %v1594 = vadd.f32 %v1592, %v1593
        %v1595 = vrot.slane %v1594, 1
        %v1596 = vadd.f32 %v1594, %v1595
        %vm1597 = vcmp.le.f32.partialorder %v1596, 31.0
        %v1598 = vsel %vm1597, %v1510, %v1509
        %v1599 = vor.u32 %v1598, 131072
        %1600 = vset.pattern.permute.xlu0 0
        %1601 = vperm.xlu0 %1600, %v1599
        %v1602 = vpop.permute.xlu0 %1601
        %vm1603 = vcmp.lt.s32.totalorder %v441, %v1602
        %v1604 = vsel %vm1603, 1, 0
        %v1605 = vcvt.s32.f32 %v1604
        %v1607 = vsel %vm442, %v1605, 0
        %1609 = vmatprep.subr.mxu0 0.0
        %1610 = vmatpush1.msra.mxu0 0.0
        %1611 = vmatprep.subr.mxu0 0.0
        %1612 = vmatpush1.msra.mxu0 0.0
        %1613 = vmatprep.subr.mxu0 0.0
        %1614 = vmatpush1.msra.mxu0 0.0
        %1615 = vmatprep.subr.mxu0 0.0
        %1616 = vmatpush1.msra.mxu0 0.0
        %1617 = vmatprep.subr.mxu0 0.0
        %1618 = vmatpush1.msra.mxu0 0.0
        %1619 = vmatprep.subr.mxu0 0.0
        %1620 = vmatpush1.msra.mxu0 0.0
        %1621 = vmatprep.subr.mxu0 0.0
        %1622 = vmatpush1.msra.mxu0 0.0
        %1623 = vmatprep.subr.mxu0 0.0
        %1624 = vmatpush1.msra.mxu0 0.0
        %1625 = vmatprep.subr.mxu0 0.0
        %1626 = vmatpush1.msra.mxu0 0.0
        %1627 = vmatprep.subr.mxu0 0.0
        %1628 = vmatpush1.msra.mxu0 0.0
        %1629 = vmatprep.subr.mxu0 0.0
        %1630 = vmatpush1.msra.mxu0 0.0
        %1631 = vmatprep.subr.mxu0 0.0
        %1632 = vmatpush1.msra.mxu0 0.0
        %1633 = vmatprep.subr.mxu0 0.0
        %1634 = vmatpush1.msra.mxu0 0.0
        %1635 = vmatprep.subr.mxu0 0.0
        %1636 = vmatpush1.msra.mxu0 0.0
        %1637 = vmatprep.subr.mxu0 0.0
        %1638 = vmatpush1.msra.mxu0 0.0
        %1639 = vmatprep.subr.mxu0 0.0
        %1640 = vmatpush1.msra.mxu0 1.0
        %1641 = vmatprep.subr.mxu0 0.0
        %1642 = vmatpush2.msra.mxu0 0.0
        %1643 = vmatprep.subr.mxu0 0.0
        %1644 = vmatpush2.msra.mxu0 0.0
        %1645 = vmatprep.subr.mxu0 0.0
        %1646 = vmatpush2.msra.mxu0 0.0
        %1647 = vmatprep.subr.mxu0 0.0
        %1648 = vmatpush2.msra.mxu0 0.0
        %1649 = vmatprep.subr.mxu0 0.0
        %1650 = vmatpush2.msra.mxu0 0.0
        %1651 = vmatprep.subr.mxu0 0.0
        %1652 = vmatpush2.msra.mxu0 0.0
        %1653 = vmatprep.subr.mxu0 0.0
        %1654 = vmatpush2.msra.mxu0 0.0
        %1655 = vmatprep.subr.mxu0 0.0
        %1656 = vmatpush2.msra.mxu0 0.0
        %1657 = vmatprep.subr.mxu0 0.0
        %1658 = vmatpush2.msra.mxu0 0.0
        %1659 = vmatprep.subr.mxu0 0.0
        %1660 = vmatpush2.msra.mxu0 0.0
        %1661 = vmatprep.subr.mxu0 0.0
        %1662 = vmatpush2.msra.mxu0 0.0
        %1663 = vmatprep.subr.mxu0 0.0
        %1664 = vmatpush2.msra.mxu0 0.0
        %1665 = vmatprep.subr.mxu0 0.0
        %1666 = vmatpush2.msra.mxu0 0.0
        %1667 = vmatprep.subr.mxu0 0.0
        %1668 = vmatpush2.msra.mxu0 0.0
        %1669 = vmatprep.subr.mxu0 0.0
        %1670 = vmatpush2.msra.mxu0 0.0
        %1671 = vmatprep.subr.mxu0 0.0
        %1672 = vmatpush2.msra.mxu0 0.0
        %1673 = vmatprep.mubr.f32.mxu0 0.0
        %1674 = vmatmul.mubr.f32.gmra.mxu0 %v1607
        %v1675 = vpop.f32.mrf.mxu0
        %v1676 = vadd.f32 0.0, %v1675
        %v1677 = vpop.f32.mrf.mxu0
        %1678 = vdwg.mxu0
        %v1679 = vsel %vm521, %v1676, 0.0
        %v1680 = vrot.slane %v1679, 4
        %v1681 = vadd.f32 %v1679, %v1680
        %v1682 = vrot.slane %v1681, 2
        %v1683 = vadd.f32 %v1681, %v1682
        %v1684 = vrot.slane %v1683, 1
        %v1685 = vadd.f32 %v1683, %v1684
        %vm1686 = vcmp.le.f32.partialorder %v1685, 31.0
        %v1687 = vsel %vm1686, %v1599, %v1598
        %v1688 = vor.u32 %v1687, 65536
        %1689 = vset.pattern.permute.xlu0 0
        %1690 = vperm.xlu0 %1689, %v1688
        %v1691 = vpop.permute.xlu0 %1690
        %vm1692 = vcmp.lt.s32.totalorder %v441, %v1691
        %v1693 = vsel %vm1692, 1, 0
        %v1694 = vcvt.s32.f32 %v1693
        %v1696 = vsel %vm442, %v1694, 0
        %1698 = vmatprep.subr.mxu0 0.0
        %1699 = vmatpush1.msra.mxu0 0.0
        %1700 = vmatprep.subr.mxu0 0.0
        %1701 = vmatpush1.msra.mxu0 0.0
        %1702 = vmatprep.subr.mxu0 0.0
        %1703 = vmatpush1.msra.mxu0 0.0
        %1704 = vmatprep.subr.mxu0 0.0
        %1705 = vmatpush1.msra.mxu0 0.0
        %1706 = vmatprep.subr.mxu0 0.0
        %1707 = vmatpush1.msra.mxu0 0.0
        %1708 = vmatprep.subr.mxu0 0.0
        %1709 = vmatpush1.msra.mxu0 0.0
        %1710 = vmatprep.subr.mxu0 0.0
        %1711 = vmatpush1.msra.mxu0 0.0
        %1712 = vmatprep.subr.mxu0 0.0
        %1713 = vmatpush1.msra.mxu0 0.0
        %1714 = vmatprep.subr.mxu0 0.0
        %1715 = vmatpush1.msra.mxu0 0.0
        %1716 = vmatprep.subr.mxu0 0.0
        %1717 = vmatpush1.msra.mxu0 0.0
        %1718 = vmatprep.subr.mxu0 0.0
        %1719 = vmatpush1.msra.mxu0 0.0
        %1720 = vmatprep.subr.mxu0 0.0
        %1721 = vmatpush1.msra.mxu0 0.0
        %1722 = vmatprep.subr.mxu0 0.0
        %1723 = vmatpush1.msra.mxu0 0.0
        %1724 = vmatprep.subr.mxu0 0.0
        %1725 = vmatpush1.msra.mxu0 0.0
        %1726 = vmatprep.subr.mxu0 0.0
        %1727 = vmatpush1.msra.mxu0 0.0
        %1728 = vmatprep.subr.mxu0 0.0
        %1729 = vmatpush1.msra.mxu0 1.0
        %1730 = vmatprep.subr.mxu0 0.0
        %1731 = vmatpush2.msra.mxu0 0.0
        %1732 = vmatprep.subr.mxu0 0.0
        %1733 = vmatpush2.msra.mxu0 0.0
        %1734 = vmatprep.subr.mxu0 0.0
        %1735 = vmatpush2.msra.mxu0 0.0
        %1736 = vmatprep.subr.mxu0 0.0
        %1737 = vmatpush2.msra.mxu0 0.0
        %1738 = vmatprep.subr.mxu0 0.0
        %1739 = vmatpush2.msra.mxu0 0.0
        %1740 = vmatprep.subr.mxu0 0.0
        %1741 = vmatpush2.msra.mxu0 0.0
        %1742 = vmatprep.subr.mxu0 0.0
        %1743 = vmatpush2.msra.mxu0 0.0
        %1744 = vmatprep.subr.mxu0 0.0
        %1745 = vmatpush2.msra.mxu0 0.0
        %1746 = vmatprep.subr.mxu0 0.0
        %1747 = vmatpush2.msra.mxu0 0.0
        %1748 = vmatprep.subr.mxu0 0.0
        %1749 = vmatpush2.msra.mxu0 0.0
        %1750 = vmatprep.subr.mxu0 0.0
        %1751 = vmatpush2.msra.mxu0 0.0
        %1752 = vmatprep.subr.mxu0 0.0
        %1753 = vmatpush2.msra.mxu0 0.0
        %1754 = vmatprep.subr.mxu0 0.0
        %1755 = vmatpush2.msra.mxu0 0.0
        %1756 = vmatprep.subr.mxu0 0.0
        %1757 = vmatpush2.msra.mxu0 0.0
        %1758 = vmatprep.subr.mxu0 0.0
        %1759 = vmatpush2.msra.mxu0 0.0
        %1760 = vmatprep.subr.mxu0 0.0
        %1761 = vmatpush2.msra.mxu0 0.0
        %1762 = vmatprep.mubr.f32.mxu0 0.0
        %1763 = vmatmul.mubr.f32.gmra.mxu0 %v1696
        %v1764 = vpop.f32.mrf.mxu0
        %v1765 = vadd.f32 0.0, %v1764
        %v1766 = vpop.f32.mrf.mxu0
        %1767 = vdwg.mxu0
        %v1768 = vsel %vm521, %v1765, 0.0
        %v1769 = vrot.slane %v1768, 4
        %v1770 = vadd.f32 %v1768, %v1769
        %v1771 = vrot.slane %v1770, 2
        %v1772 = vadd.f32 %v1770, %v1771
        %v1773 = vrot.slane %v1772, 1
        %v1774 = vadd.f32 %v1772, %v1773
        %vm1775 = vcmp.le.f32.partialorder %v1774, 31.0
        %v1776 = vsel %vm1775, %v1688, %v1687
        %v1777 = vor.u32 %v1776, 32768
        %1778 = vset.pattern.permute.xlu0 0
        %1779 = vperm.xlu0 %1778, %v1777
        %v1780 = vpop.permute.xlu0 %1779
        %vm1781 = vcmp.lt.s32.totalorder %v441, %v1780
        %v1782 = vsel %vm1781, 1, 0
        %v1783 = vcvt.s32.f32 %v1782
        %v1785 = vsel %vm442, %v1783, 0
        %1787 = vmatprep.subr.mxu0 0.0
        %1788 = vmatpush1.msra.mxu0 0.0
        %1789 = vmatprep.subr.mxu0 0.0
        %1790 = vmatpush1.msra.mxu0 0.0
        %1791 = vmatprep.subr.mxu0 0.0
        %1792 = vmatpush1.msra.mxu0 0.0
        %1793 = vmatprep.subr.mxu0 0.0
        %1794 = vmatpush1.msra.mxu0 0.0
        %1795 = vmatprep.subr.mxu0 0.0
        %1796 = vmatpush1.msra.mxu0 0.0
        %1797 = vmatprep.subr.mxu0 0.0
        %1798 = vmatpush1.msra.mxu0 0.0
        %1799 = vmatprep.subr.mxu0 0.0
        %1800 = vmatpush1.msra.mxu0 0.0
        %1801 = vmatprep.subr.mxu0 0.0
        %1802 = vmatpush1.msra.mxu0 0.0
        %1803 = vmatprep.subr.mxu0 0.0
        %1804 = vmatpush1.msra.mxu0 0.0
        %1805 = vmatprep.subr.mxu0 0.0
        %1806 = vmatpush1.msra.mxu0 0.0
        %1807 = vmatprep.subr.mxu0 0.0
        %1808 = vmatpush1.msra.mxu0 0.0
        %1809 = vmatprep.subr.mxu0 0.0
        %1810 = vmatpush1.msra.mxu0 0.0
        %1811 = vmatprep.subr.mxu0 0.0
        %1812 = vmatpush1.msra.mxu0 0.0
        %1813 = vmatprep.subr.mxu0 0.0
        %1814 = vmatpush1.msra.mxu0 0.0
        %1815 = vmatprep.subr.mxu0 0.0
        %1816 = vmatpush1.msra.mxu0 0.0
        %1817 = vmatprep.subr.mxu0 0.0
        %1818 = vmatpush1.msra.mxu0 1.0
        %1819 = vmatprep.subr.mxu0 0.0
        %1820 = vmatpush2.msra.mxu0 0.0
        %1821 = vmatprep.subr.mxu0 0.0
        %1822 = vmatpush2.msra.mxu0 0.0
        %1823 = vmatprep.subr.mxu0 0.0
        %1824 = vmatpush2.msra.mxu0 0.0
        %1825 = vmatprep.subr.mxu0 0.0
        %1826 = vmatpush2.msra.mxu0 0.0
        %1827 = vmatprep.subr.mxu0 0.0
        %1828 = vmatpush2.msra.mxu0 0.0
        %1829 = vmatprep.subr.mxu0 0.0
        %1830 = vmatpush2.msra.mxu0 0.0
        %1831 = vmatprep.subr.mxu0 0.0
        %1832 = vmatpush2.msra.mxu0 0.0
        %1833 = vmatprep.subr.mxu0 0.0
        %1834 = vmatpush2.msra.mxu0 0.0
        %1835 = vmatprep.subr.mxu0 0.0
        %1836 = vmatpush2.msra.mxu0 0.0
        %1837 = vmatprep.subr.mxu0 0.0
        %1838 = vmatpush2.msra.mxu0 0.0
        %1839 = vmatprep.subr.mxu0 0.0
        %1840 = vmatpush2.msra.mxu0 0.0
        %1841 = vmatprep.subr.mxu0 0.0
        %1842 = vmatpush2.msra.mxu0 0.0
        %1843 = vmatprep.subr.mxu0 0.0
        %1844 = vmatpush2.msra.mxu0 0.0
        %1845 = vmatprep.subr.mxu0 0.0
        %1846 = vmatpush2.msra.mxu0 0.0
        %1847 = vmatprep.subr.mxu0 0.0
        %1848 = vmatpush2.msra.mxu0 0.0
        %1849 = vmatprep.subr.mxu0 0.0
        %1850 = vmatpush2.msra.mxu0 0.0
        %1851 = vmatprep.mubr.f32.mxu0 0.0
        %1852 = vmatmul.mubr.f32.gmra.mxu0 %v1785
        %v1853 = vpop.f32.mrf.mxu0
        %v1854 = vadd.f32 0.0, %v1853
        %v1855 = vpop.f32.mrf.mxu0
        %1856 = vdwg.mxu0
        %v1857 = vsel %vm521, %v1854, 0.0
        %v1858 = vrot.slane %v1857, 4
        %v1859 = vadd.f32 %v1857, %v1858
        %v1860 = vrot.slane %v1859, 2
        %v1861 = vadd.f32 %v1859, %v1860
        %v1862 = vrot.slane %v1861, 1
        %v1863 = vadd.f32 %v1861, %v1862
        %vm1864 = vcmp.le.f32.partialorder %v1863, 31.0
        %v1865 = vsel %vm1864, %v1777, %v1776
        %v1866 = vor.u32 %v1865, 16384
        %1867 = vset.pattern.permute.xlu0 0
        %1868 = vperm.xlu0 %1867, %v1866
        %v1869 = vpop.permute.xlu0 %1868
        %vm1870 = vcmp.lt.s32.totalorder %v441, %v1869
        %v1871 = vsel %vm1870, 1, 0
        %v1872 = vcvt.s32.f32 %v1871
        %v1874 = vsel %vm442, %v1872, 0
        %1876 = vmatprep.subr.mxu0 0.0
        %1877 = vmatpush1.msra.mxu0 0.0
        %1878 = vmatprep.subr.mxu0 0.0
        %1879 = vmatpush1.msra.mxu0 0.0
        %1880 = vmatprep.subr.mxu0 0.0
        %1881 = vmatpush1.msra.mxu0 0.0
        %1882 = vmatprep.subr.mxu0 0.0
        %1883 = vmatpush1.msra.mxu0 0.0
        %1884 = vmatprep.subr.mxu0 0.0
        %1885 = vmatpush1.msra.mxu0 0.0
        %1886 = vmatprep.subr.mxu0 0.0
        %1887 = vmatpush1.msra.mxu0 0.0
        %1888 = vmatprep.subr.mxu0 0.0
        %1889 = vmatpush1.msra.mxu0 0.0
        %1890 = vmatprep.subr.mxu0 0.0
        %1891 = vmatpush1.msra.mxu0 0.0
        %1892 = vmatprep.subr.mxu0 0.0
        %1893 = vmatpush1.msra.mxu0 0.0
        %1894 = vmatprep.subr.mxu0 0.0
        %1895 = vmatpush1.msra.mxu0 0.0
        %1896 = vmatprep.subr.mxu0 0.0
        %1897 = vmatpush1.msra.mxu0 0.0
        %1898 = vmatprep.subr.mxu0 0.0
        %1899 = vmatpush1.msra.mxu0 0.0
        %1900 = vmatprep.subr.mxu0 0.0
        %1901 = vmatpush1.msra.mxu0 0.0
        %1902 = vmatprep.subr.mxu0 0.0
        %1903 = vmatpush1.msra.mxu0 0.0
        %1904 = vmatprep.subr.mxu0 0.0
        %1905 = vmatpush1.msra.mxu0 0.0
        %1906 = vmatprep.subr.mxu0 0.0
        %1907 = vmatpush1.msra.mxu0 1.0
        %1908 = vmatprep.subr.mxu0 0.0
        %1909 = vmatpush2.msra.mxu0 0.0
        %1910 = vmatprep.subr.mxu0 0.0
        %1911 = vmatpush2.msra.mxu0 0.0
        %1912 = vmatprep.subr.mxu0 0.0
        %1913 = vmatpush2.msra.mxu0 0.0
        %1914 = vmatprep.subr.mxu0 0.0
        %1915 = vmatpush2.msra.mxu0 0.0
        %1916 = vmatprep.subr.mxu0 0.0
        %1917 = vmatpush2.msra.mxu0 0.0
        %1918 = vmatprep.subr.mxu0 0.0
        %1919 = vmatpush2.msra.mxu0 0.0
        %1920 = vmatprep.subr.mxu0 0.0
        %1921 = vmatpush2.msra.mxu0 0.0
        %1922 = vmatprep.subr.mxu0 0.0
        %1923 = vmatpush2.msra.mxu0 0.0
        %1924 = vmatprep.subr.mxu0 0.0
        %1925 = vmatpush2.msra.mxu0 0.0
        %1926 = vmatprep.subr.mxu0 0.0
        %1927 = vmatpush2.msra.mxu0 0.0
        %1928 = vmatprep.subr.mxu0 0.0
        %1929 = vmatpush2.msra.mxu0 0.0
        %1930 = vmatprep.subr.mxu0 0.0
        %1931 = vmatpush2.msra.mxu0 0.0
        %1932 = vmatprep.subr.mxu0 0.0
        %1933 = vmatpush2.msra.mxu0 0.0
        %1934 = vmatprep.subr.mxu0 0.0
        %1935 = vmatpush2.msra.mxu0 0.0
        %1936 = vmatprep.subr.mxu0 0.0
        %1937 = vmatpush2.msra.mxu0 0.0
        %1938 = vmatprep.subr.mxu0 0.0
        %1939 = vmatpush2.msra.mxu0 0.0
        %1940 = vmatprep.mubr.f32.mxu0 0.0
        %1941 = vmatmul.mubr.f32.gmra.mxu0 %v1874
        %v1942 = vpop.f32.mrf.mxu0
        %v1943 = vadd.f32 0.0, %v1942
        %v1944 = vpop.f32.mrf.mxu0
        %1945 = vdwg.mxu0
        %v1946 = vsel %vm521, %v1943, 0.0
        %v1947 = vrot.slane %v1946, 4
        %v1948 = vadd.f32 %v1946, %v1947
        %v1949 = vrot.slane %v1948, 2
        %v1950 = vadd.f32 %v1948, %v1949
        %v1951 = vrot.slane %v1950, 1
        %v1952 = vadd.f32 %v1950, %v1951
        %vm1953 = vcmp.le.f32.partialorder %v1952, 31.0
        %v1954 = vsel %vm1953, %v1866, %v1865
        %v1955 = vor.u32 %v1954, 8192
        %1956 = vset.pattern.permute.xlu0 0
        %1957 = vperm.xlu0 %1956, %v1955
        %v1958 = vpop.permute.xlu0 %1957
        %vm1959 = vcmp.lt.s32.totalorder %v441, %v1958
        %v1960 = vsel %vm1959, 1, 0
        %v1961 = vcvt.s32.f32 %v1960
        %v1963 = vsel %vm442, %v1961, 0
        %1965 = vmatprep.subr.mxu0 0.0
        %1966 = vmatpush1.msra.mxu0 0.0
        %1967 = vmatprep.subr.mxu0 0.0
        %1968 = vmatpush1.msra.mxu0 0.0
        %1969 = vmatprep.subr.mxu0 0.0
        %1970 = vmatpush1.msra.mxu0 0.0
        %1971 = vmatprep.subr.mxu0 0.0
        %1972 = vmatpush1.msra.mxu0 0.0
        %1973 = vmatprep.subr.mxu0 0.0
        %1974 = vmatpush1.msra.mxu0 0.0
        %1975 = vmatprep.subr.mxu0 0.0
        %1976 = vmatpush1.msra.mxu0 0.0
        %1977 = vmatprep.subr.mxu0 0.0
        %1978 = vmatpush1.msra.mxu0 0.0
        %1979 = vmatprep.subr.mxu0 0.0
        %1980 = vmatpush1.msra.mxu0 0.0
        %1981 = vmatprep.subr.mxu0 0.0
        %1982 = vmatpush1.msra.mxu0 0.0
        %1983 = vmatprep.subr.mxu0 0.0
        %1984 = vmatpush1.msra.mxu0 0.0
        %1985 = vmatprep.subr.mxu0 0.0
        %1986 = vmatpush1.msra.mxu0 0.0
        %1987 = vmatprep.subr.mxu0 0.0
        %1988 = vmatpush1.msra.mxu0 0.0
        %1989 = vmatprep.subr.mxu0 0.0
        %1990 = vmatpush1.msra.mxu0 0.0
        %1991 = vmatprep.subr.mxu0 0.0
        %1992 = vmatpush1.msra.mxu0 0.0
        %1993 = vmatprep.subr.mxu0 0.0
        %1994 = vmatpush1.msra.mxu0 0.0
        %1995 = vmatprep.subr.mxu0 0.0
        %1996 = vmatpush1.msra.mxu0 1.0
        %1997 = vmatprep.subr.mxu0 0.0
        %1998 = vmatpush2.msra.mxu0 0.0
        %1999 = vmatprep.subr.mxu0 0.0
        %2000 = vmatpush2.msra.mxu0 0.0
        %2001 = vmatprep.subr.mxu0 0.0
        %2002 = vmatpush2.msra.mxu0 0.0
        %2003 = vmatprep.subr.mxu0 0.0
        %2004 = vmatpush2.msra.mxu0 0.0
        %2005 = vmatprep.subr.mxu0 0.0
        %2006 = vmatpush2.msra.mxu0 0.0
        %2007 = vmatprep.subr.mxu0 0.0
        %2008 = vmatpush2.msra.mxu0 0.0
        %2009 = vmatprep.subr.mxu0 0.0
        %2010 = vmatpush2.msra.mxu0 0.0
        %2011 = vmatprep.subr.mxu0 0.0
        %2012 = vmatpush2.msra.mxu0 0.0
        %2013 = vmatprep.subr.mxu0 0.0
        %2014 = vmatpush2.msra.mxu0 0.0
        %2015 = vmatprep.subr.mxu0 0.0
        %2016 = vmatpush2.msra.mxu0 0.0
        %2017 = vmatprep.subr.mxu0 0.0
        %2018 = vmatpush2.msra.mxu0 0.0
        %2019 = vmatprep.subr.mxu0 0.0
        %2020 = vmatpush2.msra.mxu0 0.0
        %2021 = vmatprep.subr.mxu0 0.0
        %2022 = vmatpush2.msra.mxu0 0.0
        %2023 = vmatprep.subr.mxu0 0.0
        %2024 = vmatpush2.msra.mxu0 0.0
        %2025 = vmatprep.subr.mxu0 0.0
        %2026 = vmatpush2.msra.mxu0 0.0
        %2027 = vmatprep.subr.mxu0 0.0
        %2028 = vmatpush2.msra.mxu0 0.0
        %2029 = vmatprep.mubr.f32.mxu0 0.0
        %2030 = vmatmul.mubr.f32.gmra.mxu0 %v1963
        %v2031 = vpop.f32.mrf.mxu0
        %v2032 = vadd.f32 0.0, %v2031
        %v2033 = vpop.f32.mrf.mxu0
        %2034 = vdwg.mxu0
        %v2035 = vsel %vm521, %v2032, 0.0
        %v2036 = vrot.slane %v2035, 4
        %v2037 = vadd.f32 %v2035, %v2036
        %v2038 = vrot.slane %v2037, 2
        %v2039 = vadd.f32 %v2037, %v2038
        %v2040 = vrot.slane %v2039, 1
        %v2041 = vadd.f32 %v2039, %v2040
        %vm2042 = vcmp.le.f32.partialorder %v2041, 31.0
        %v2043 = vsel %vm2042, %v1955, %v1954
        %v2044 = vor.u32 %v2043, 4096
        %2045 = vset.pattern.permute.xlu0 0
        %2046 = vperm.xlu0 %2045, %v2044
        %v2047 = vpop.permute.xlu0 %2046
        %vm2048 = vcmp.lt.s32.totalorder %v441, %v2047
        %v2049 = vsel %vm2048, 1, 0
        %v2050 = vcvt.s32.f32 %v2049
        %v2052 = vsel %vm442, %v2050, 0
        %2054 = vmatprep.subr.mxu0 0.0
        %2055 = vmatpush1.msra.mxu0 0.0
        %2056 = vmatprep.subr.mxu0 0.0
        %2057 = vmatpush1.msra.mxu0 0.0
        %2058 = vmatprep.subr.mxu0 0.0
        %2059 = vmatpush1.msra.mxu0 0.0
        %2060 = vmatprep.subr.mxu0 0.0
        %2061 = vmatpush1.msra.mxu0 0.0
        %2062 = vmatprep.subr.mxu0 0.0
        %2063 = vmatpush1.msra.mxu0 0.0
        %2064 = vmatprep.subr.mxu0 0.0
        %2065 = vmatpush1.msra.mxu0 0.0
        %2066 = vmatprep.subr.mxu0 0.0
        %2067 = vmatpush1.msra.mxu0 0.0
        %2068 = vmatprep.subr.mxu0 0.0
        %2069 = vmatpush1.msra.mxu0 0.0
        %2070 = vmatprep.subr.mxu0 0.0
        %2071 = vmatpush1.msra.mxu0 0.0
        %2072 = vmatprep.subr.mxu0 0.0
        %2073 = vmatpush1.msra.mxu0 0.0
        %2074 = vmatprep.subr.mxu0 0.0
        %2075 = vmatpush1.msra.mxu0 0.0
        %2076 = vmatprep.subr.mxu0 0.0
        %2077 = vmatpush1.msra.mxu0 0.0
        %2078 = vmatprep.subr.mxu0 0.0
        %2079 = vmatpush1.msra.mxu0 0.0
        %2080 = vmatprep.subr.mxu0 0.0
        %2081 = vmatpush1.msra.mxu0 0.0
        %2082 = vmatprep.subr.mxu0 0.0
        %2083 = vmatpush1.msra.mxu0 0.0
        %2084 = vmatprep.subr.mxu0 0.0
        %2085 = vmatpush1.msra.mxu0 1.0
        %2086 = vmatprep.subr.mxu0 0.0
        %2087 = vmatpush2.msra.mxu0 0.0
        %2088 = vmatprep.subr.mxu0 0.0
        %2089 = vmatpush2.msra.mxu0 0.0
        %2090 = vmatprep.subr.mxu0 0.0
        %2091 = vmatpush2.msra.mxu0 0.0
        %2092 = vmatprep.subr.mxu0 0.0
        %2093 = vmatpush2.msra.mxu0 0.0
        %2094 = vmatprep.subr.mxu0 0.0
        %2095 = vmatpush2.msra.mxu0 0.0
        %2096 = vmatprep.subr.mxu0 0.0
        %2097 = vmatpush2.msra.mxu0 0.0
        %2098 = vmatprep.subr.mxu0 0.0
        %2099 = vmatpush2.msra.mxu0 0.0
        %2100 = vmatprep.subr.mxu0 0.0
        %2101 = vmatpush2.msra.mxu0 0.0
        %2102 = vmatprep.subr.mxu0 0.0
        %2103 = vmatpush2.msra.mxu0 0.0
        %2104 = vmatprep.subr.mxu0 0.0
        %2105 = vmatpush2.msra.mxu0 0.0
        %2106 = vmatprep.subr.mxu0 0.0
        %2107 = vmatpush2.msra.mxu0 0.0
        %2108 = vmatprep.subr.mxu0 0.0
        %2109 = vmatpush2.msra.mxu0 0.0
        %2110 = vmatprep.subr.mxu0 0.0
        %2111 = vmatpush2.msra.mxu0 0.0
        %2112 = vmatprep.subr.mxu0 0.0
        %2113 = vmatpush2.msra.mxu0 0.0
        %2114 = vmatprep.subr.mxu0 0.0
        %2115 = vmatpush2.msra.mxu0 0.0
        %2116 = vmatprep.subr.mxu0 0.0
        %2117 = vmatpush2.msra.mxu0 0.0
        %2118 = vmatprep.mubr.f32.mxu0 0.0
        %2119 = vmatmul.mubr.f32.gmra.mxu0 %v2052
        %v2120 = vpop.f32.mrf.mxu0
        %v2121 = vadd.f32 0.0, %v2120
        %v2122 = vpop.f32.mrf.mxu0
        %2123 = vdwg.mxu0
        %v2124 = vsel %vm521, %v2121, 0.0
        %v2125 = vrot.slane %v2124, 4
        %v2126 = vadd.f32 %v2124, %v2125
        %v2127 = vrot.slane %v2126, 2
        %v2128 = vadd.f32 %v2126, %v2127
        %v2129 = vrot.slane %v2128, 1
        %v2130 = vadd.f32 %v2128, %v2129
        %vm2131 = vcmp.le.f32.partialorder %v2130, 31.0
        %v2132 = vsel %vm2131, %v2044, %v2043
        %v2133 = vor.u32 %v2132, 2048
        %2134 = vset.pattern.permute.xlu0 0
        %2135 = vperm.xlu0 %2134, %v2133
        %v2136 = vpop.permute.xlu0 %2135
        %vm2137 = vcmp.lt.s32.totalorder %v441, %v2136
        %v2138 = vsel %vm2137, 1, 0
        %v2139 = vcvt.s32.f32 %v2138
        %v2141 = vsel %vm442, %v2139, 0
        %2143 = vmatprep.subr.mxu0 0.0
        %2144 = vmatpush1.msra.mxu0 0.0
        %2145 = vmatprep.subr.mxu0 0.0
        %2146 = vmatpush1.msra.mxu0 0.0
        %2147 = vmatprep.subr.mxu0 0.0
        %2148 = vmatpush1.msra.mxu0 0.0
        %2149 = vmatprep.subr.mxu0 0.0
        %2150 = vmatpush1.msra.mxu0 0.0
        %2151 = vmatprep.subr.mxu0 0.0
        %2152 = vmatpush1.msra.mxu0 0.0
        %2153 = vmatprep.subr.mxu0 0.0
        %2154 = vmatpush1.msra.mxu0 0.0
        %2155 = vmatprep.subr.mxu0 0.0
        %2156 = vmatpush1.msra.mxu0 0.0
        %2157 = vmatprep.subr.mxu0 0.0
        %2158 = vmatpush1.msra.mxu0 0.0
        %2159 = vmatprep.subr.mxu0 0.0
        %2160 = vmatpush1.msra.mxu0 0.0
        %2161 = vmatprep.subr.mxu0 0.0
        %2162 = vmatpush1.msra.mxu0 0.0
        %2163 = vmatprep.subr.mxu0 0.0
        %2164 = vmatpush1.msra.mxu0 0.0
        %2165 = vmatprep.subr.mxu0 0.0
        %2166 = vmatpush1.msra.mxu0 0.0
        %2167 = vmatprep.subr.mxu0 0.0
        %2168 = vmatpush1.msra.mxu0 0.0
        %2169 = vmatprep.subr.mxu0 0.0
        %2170 = vmatpush1.msra.mxu0 0.0
        %2171 = vmatprep.subr.mxu0 0.0
        %2172 = vmatpush1.msra.mxu0 0.0
        %2173 = vmatprep.subr.mxu0 0.0
        %2174 = vmatpush1.msra.mxu0 1.0
        %2175 = vmatprep.subr.mxu0 0.0
        %2176 = vmatpush2.msra.mxu0 0.0
        %2177 = vmatprep.subr.mxu0 0.0
        %2178 = vmatpush2.msra.mxu0 0.0
        %2179 = vmatprep.subr.mxu0 0.0
        %2180 = vmatpush2.msra.mxu0 0.0
        %2181 = vmatprep.subr.mxu0 0.0
        %2182 = vmatpush2.msra.mxu0 0.0
        %2183 = vmatprep.subr.mxu0 0.0
        %2184 = vmatpush2.msra.mxu0 0.0
        %2185 = vmatprep.subr.mxu0 0.0
        %2186 = vmatpush2.msra.mxu0 0.0
        %2187 = vmatprep.subr.mxu0 0.0
        %2188 = vmatpush2.msra.mxu0 0.0
        %2189 = vmatprep.subr.mxu0 0.0
        %2190 = vmatpush2.msra.mxu0 0.0
        %2191 = vmatprep.subr.mxu0 0.0
        %2192 = vmatpush2.msra.mxu0 0.0
        %2193 = vmatprep.subr.mxu0 0.0
        %2194 = vmatpush2.msra.mxu0 0.0
        %2195 = vmatprep.subr.mxu0 0.0
        %2196 = vmatpush2.msra.mxu0 0.0
        %2197 = vmatprep.subr.mxu0 0.0
        %2198 = vmatpush2.msra.mxu0 0.0
        %2199 = vmatprep.subr.mxu0 0.0
        %2200 = vmatpush2.msra.mxu0 0.0
        %2201 = vmatprep.subr.mxu0 0.0
        %2202 = vmatpush2.msra.mxu0 0.0
        %2203 = vmatprep.subr.mxu0 0.0
        %2204 = vmatpush2.msra.mxu0 0.0
        %2205 = vmatprep.subr.mxu0 0.0
        %2206 = vmatpush2.msra.mxu0 0.0
        %2207 = vmatprep.mubr.f32.mxu0 0.0
        %2208 = vmatmul.mubr.f32.gmra.mxu0 %v2141
        %v2209 = vpop.f32.mrf.mxu0
        %v2210 = vadd.f32 0.0, %v2209
        %v2211 = vpop.f32.mrf.mxu0
        %2212 = vdwg.mxu0
        %v2213 = vsel %vm521, %v2210, 0.0
        %v2214 = vrot.slane %v2213, 4
        %v2215 = vadd.f32 %v2213, %v2214
        %v2216 = vrot.slane %v2215, 2
        %v2217 = vadd.f32 %v2215, %v2216
        %v2218 = vrot.slane %v2217, 1
        %v2219 = vadd.f32 %v2217, %v2218
        %vm2220 = vcmp.le.f32.partialorder %v2219, 31.0
        %v2221 = vsel %vm2220, %v2133, %v2132
        %v2222 = vor.u32 %v2221, 1024
        %2223 = vset.pattern.permute.xlu0 0
        %2224 = vperm.xlu0 %2223, %v2222
        %v2225 = vpop.permute.xlu0 %2224
        %vm2226 = vcmp.lt.s32.totalorder %v441, %v2225
        %v2227 = vsel %vm2226, 1, 0
        %v2228 = vcvt.s32.f32 %v2227
        %v2230 = vsel %vm442, %v2228, 0
        %2232 = vmatprep.subr.mxu0 0.0
        %2233 = vmatpush1.msra.mxu0 0.0
        %2234 = vmatprep.subr.mxu0 0.0
        %2235 = vmatpush1.msra.mxu0 0.0
        %2236 = vmatprep.subr.mxu0 0.0
        %2237 = vmatpush1.msra.mxu0 0.0
        %2238 = vmatprep.subr.mxu0 0.0
        %2239 = vmatpush1.msra.mxu0 0.0
        %2240 = vmatprep.subr.mxu0 0.0
        %2241 = vmatpush1.msra.mxu0 0.0
        %2242 = vmatprep.subr.mxu0 0.0
        %2243 = vmatpush1.msra.mxu0 0.0
        %2244 = vmatprep.subr.mxu0 0.0
        %2245 = vmatpush1.msra.mxu0 0.0
        %2246 = vmatprep.subr.mxu0 0.0
        %2247 = vmatpush1.msra.mxu0 0.0
        %2248 = vmatprep.subr.mxu0 0.0
        %2249 = vmatpush1.msra.mxu0 0.0
        %2250 = vmatprep.subr.mxu0 0.0
        %2251 = vmatpush1.msra.mxu0 0.0
        %2252 = vmatprep.subr.mxu0 0.0
        %2253 = vmatpush1.msra.mxu0 0.0
        %2254 = vmatprep.subr.mxu0 0.0
        %2255 = vmatpush1.msra.mxu0 0.0
        %2256 = vmatprep.subr.mxu0 0.0
        %2257 = vmatpush1.msra.mxu0 0.0
        %2258 = vmatprep.subr.mxu0 0.0
        %2259 = vmatpush1.msra.mxu0 0.0
        %2260 = vmatprep.subr.mxu0 0.0
        %2261 = vmatpush1.msra.mxu0 0.0
        %2262 = vmatprep.subr.mxu0 0.0
        %2263 = vmatpush1.msra.mxu0 1.0
        %2264 = vmatprep.subr.mxu0 0.0
        %2265 = vmatpush2.msra.mxu0 0.0
        %2266 = vmatprep.subr.mxu0 0.0
        %2267 = vmatpush2.msra.mxu0 0.0
        %2268 = vmatprep.subr.mxu0 0.0
        %2269 = vmatpush2.msra.mxu0 0.0
        %2270 = vmatprep.subr.mxu0 0.0
        %2271 = vmatpush2.msra.mxu0 0.0
        %2272 = vmatprep.subr.mxu0 0.0
        %2273 = vmatpush2.msra.mxu0 0.0
        %2274 = vmatprep.subr.mxu0 0.0
        %2275 = vmatpush2.msra.mxu0 0.0
        %2276 = vmatprep.subr.mxu0 0.0
        %2277 = vmatpush2.msra.mxu0 0.0
        %2278 = vmatprep.subr.mxu0 0.0
        %2279 = vmatpush2.msra.mxu0 0.0
        %2280 = vmatprep.subr.mxu0 0.0
        %2281 = vmatpush2.msra.mxu0 0.0
        %2282 = vmatprep.subr.mxu0 0.0
        %2283 = vmatpush2.msra.mxu0 0.0
        %2284 = vmatprep.subr.mxu0 0.0
        %2285 = vmatpush2.msra.mxu0 0.0
        %2286 = vmatprep.subr.mxu0 0.0
        %2287 = vmatpush2.msra.mxu0 0.0
        %2288 = vmatprep.subr.mxu0 0.0
        %2289 = vmatpush2.msra.mxu0 0.0
        %2290 = vmatprep.subr.mxu0 0.0
        %2291 = vmatpush2.msra.mxu0 0.0
        %2292 = vmatprep.subr.mxu0 0.0
        %2293 = vmatpush2.msra.mxu0 0.0
        %2294 = vmatprep.subr.mxu0 0.0
        %2295 = vmatpush2.msra.mxu0 0.0
        %2296 = vmatprep.mubr.f32.mxu0 0.0
        %2297 = vmatmul.mubr.f32.gmra.mxu0 %v2230
        %v2298 = vpop.f32.mrf.mxu0
        %v2299 = vadd.f32 0.0, %v2298
        %v2300 = vpop.f32.mrf.mxu0
        %2301 = vdwg.mxu0
        %v2302 = vsel %vm521, %v2299, 0.0
        %v2303 = vrot.slane %v2302, 4
        %v2304 = vadd.f32 %v2302, %v2303
        %v2305 = vrot.slane %v2304, 2
        %v2306 = vadd.f32 %v2304, %v2305
        %v2307 = vrot.slane %v2306, 1
        %v2308 = vadd.f32 %v2306, %v2307
        %vm2309 = vcmp.le.f32.partialorder %v2308, 31.0
        %v2310 = vsel %vm2309, %v2222, %v2221
        %v2311 = vor.u32 %v2310, 512
        %2312 = vset.pattern.permute.xlu0 0
        %2313 = vperm.xlu0 %2312, %v2311
        %v2314 = vpop.permute.xlu0 %2313
        %vm2315 = vcmp.lt.s32.totalorder %v441, %v2314
        %v2316 = vsel %vm2315, 1, 0
        %v2317 = vcvt.s32.f32 %v2316
        %v2319 = vsel %vm442, %v2317, 0
        %2321 = vmatprep.subr.mxu0 0.0
        %2322 = vmatpush1.msra.mxu0 0.0
        %2323 = vmatprep.subr.mxu0 0.0
        %2324 = vmatpush1.msra.mxu0 0.0
        %2325 = vmatprep.subr.mxu0 0.0
        %2326 = vmatpush1.msra.mxu0 0.0
        %2327 = vmatprep.subr.mxu0 0.0
        %2328 = vmatpush1.msra.mxu0 0.0
        %2329 = vmatprep.subr.mxu0 0.0
        %2330 = vmatpush1.msra.mxu0 0.0
        %2331 = vmatprep.subr.mxu0 0.0
        %2332 = vmatpush1.msra.mxu0 0.0
        %2333 = vmatprep.subr.mxu0 0.0
        %2334 = vmatpush1.msra.mxu0 0.0
        %2335 = vmatprep.subr.mxu0 0.0
        %2336 = vmatpush1.msra.mxu0 0.0
        %2337 = vmatprep.subr.mxu0 0.0
        %2338 = vmatpush1.msra.mxu0 0.0
        %2339 = vmatprep.subr.mxu0 0.0
        %2340 = vmatpush1.msra.mxu0 0.0
        %2341 = vmatprep.subr.mxu0 0.0
        %2342 = vmatpush1.msra.mxu0 0.0
        %2343 = vmatprep.subr.mxu0 0.0
        %2344 = vmatpush1.msra.mxu0 0.0
        %2345 = vmatprep.subr.mxu0 0.0
        %2346 = vmatpush1.msra.mxu0 0.0
        %2347 = vmatprep.subr.mxu0 0.0
        %2348 = vmatpush1.msra.mxu0 0.0
        %2349 = vmatprep.subr.mxu0 0.0
        %2350 = vmatpush1.msra.mxu0 0.0
        %2351 = vmatprep.subr.mxu0 0.0
        %2352 = vmatpush1.msra.mxu0 1.0
        %2353 = vmatprep.subr.mxu0 0.0
        %2354 = vmatpush2.msra.mxu0 0.0
        %2355 = vmatprep.subr.mxu0 0.0
        %2356 = vmatpush2.msra.mxu0 0.0
        %2357 = vmatprep.subr.mxu0 0.0
        %2358 = vmatpush2.msra.mxu0 0.0
        %2359 = vmatprep.subr.mxu0 0.0
        %2360 = vmatpush2.msra.mxu0 0.0
        %2361 = vmatprep.subr.mxu0 0.0
        %2362 = vmatpush2.msra.mxu0 0.0
        %2363 = vmatprep.subr.mxu0 0.0
        %2364 = vmatpush2.msra.mxu0 0.0
        %2365 = vmatprep.subr.mxu0 0.0
        %2366 = vmatpush2.msra.mxu0 0.0
        %2367 = vmatprep.subr.mxu0 0.0
        %2368 = vmatpush2.msra.mxu0 0.0
        %2369 = vmatprep.subr.mxu0 0.0
        %2370 = vmatpush2.msra.mxu0 0.0
        %2371 = vmatprep.subr.mxu0 0.0
        %2372 = vmatpush2.msra.mxu0 0.0
        %2373 = vmatprep.subr.mxu0 0.0
        %2374 = vmatpush2.msra.mxu0 0.0
        %2375 = vmatprep.subr.mxu0 0.0
        %2376 = vmatpush2.msra.mxu0 0.0
        %2377 = vmatprep.subr.mxu0 0.0
        %2378 = vmatpush2.msra.mxu0 0.0
        %2379 = vmatprep.subr.mxu0 0.0
        %2380 = vmatpush2.msra.mxu0 0.0
        %2381 = vmatprep.subr.mxu0 0.0
        %2382 = vmatpush2.msra.mxu0 0.0
        %2383 = vmatprep.subr.mxu0 0.0
        %2384 = vmatpush2.msra.mxu0 0.0
        %2385 = vmatprep.mubr.f32.mxu0 0.0
        %2386 = vmatmul.mubr.f32.gmra.mxu0 %v2319
        %v2387 = vpop.f32.mrf.mxu0
        %v2388 = vadd.f32 0.0, %v2387
        %v2389 = vpop.f32.mrf.mxu0
        %2390 = vdwg.mxu0
        %v2391 = vsel %vm521, %v2388, 0.0
        %v2392 = vrot.slane %v2391, 4
        %v2393 = vadd.f32 %v2391, %v2392
        %v2394 = vrot.slane %v2393, 2
        %v2395 = vadd.f32 %v2393, %v2394
        %v2396 = vrot.slane %v2395, 1
        %v2397 = vadd.f32 %v2395, %v2396
        %vm2398 = vcmp.le.f32.partialorder %v2397, 31.0
        %v2399 = vsel %vm2398, %v2311, %v2310
        %v2400 = vor.u32 %v2399, 256
        %2401 = vset.pattern.permute.xlu0 0
        %2402 = vperm.xlu0 %2401, %v2400
        %v2403 = vpop.permute.xlu0 %2402
        %vm2404 = vcmp.lt.s32.totalorder %v441, %v2403
        %v2405 = vsel %vm2404, 1, 0
        %v2406 = vcvt.s32.f32 %v2405
        %v2408 = vsel %vm442, %v2406, 0
        %2410 = vmatprep.subr.mxu0 0.0
        %2411 = vmatpush1.msra.mxu0 0.0
        %2412 = vmatprep.subr.mxu0 0.0
        %2413 = vmatpush1.msra.mxu0 0.0
        %2414 = vmatprep.subr.mxu0 0.0
        %2415 = vmatpush1.msra.mxu0 0.0
        %2416 = vmatprep.subr.mxu0 0.0
        %2417 = vmatpush1.msra.mxu0 0.0
        %2418 = vmatprep.subr.mxu0 0.0
        %2419 = vmatpush1.msra.mxu0 0.0
        %2420 = vmatprep.subr.mxu0 0.0
        %2421 = vmatpush1.msra.mxu0 0.0
        %2422 = vmatprep.subr.mxu0 0.0
        %2423 = vmatpush1.msra.mxu0 0.0
        %2424 = vmatprep.subr.mxu0 0.0
        %2425 = vmatpush1.msra.mxu0 0.0
        %2426 = vmatprep.subr.mxu0 0.0
        %2427 = vmatpush1.msra.mxu0 0.0
        %2428 = vmatprep.subr.mxu0 0.0
        %2429 = vmatpush1.msra.mxu0 0.0
        %2430 = vmatprep.subr.mxu0 0.0
        %2431 = vmatpush1.msra.mxu0 0.0
        %2432 = vmatprep.subr.mxu0 0.0
        %2433 = vmatpush1.msra.mxu0 0.0
        %2434 = vmatprep.subr.mxu0 0.0
        %2435 = vmatpush1.msra.mxu0 0.0
        %2436 = vmatprep.subr.mxu0 0.0
        %2437 = vmatpush1.msra.mxu0 0.0
        %2438 = vmatprep.subr.mxu0 0.0
        %2439 = vmatpush1.msra.mxu0 0.0
        %2440 = vmatprep.subr.mxu0 0.0
        %2441 = vmatpush1.msra.mxu0 1.0
        %2442 = vmatprep.subr.mxu0 0.0
        %2443 = vmatpush2.msra.mxu0 0.0
        %2444 = vmatprep.subr.mxu0 0.0
        %2445 = vmatpush2.msra.mxu0 0.0
        %2446 = vmatprep.subr.mxu0 0.0
        %2447 = vmatpush2.msra.mxu0 0.0
        %2448 = vmatprep.subr.mxu0 0.0
        %2449 = vmatpush2.msra.mxu0 0.0
        %2450 = vmatprep.subr.mxu0 0.0
        %2451 = vmatpush2.msra.mxu0 0.0
        %2452 = vmatprep.subr.mxu0 0.0
        %2453 = vmatpush2.msra.mxu0 0.0
        %2454 = vmatprep.subr.mxu0 0.0
        %2455 = vmatpush2.msra.mxu0 0.0
        %2456 = vmatprep.subr.mxu0 0.0
        %2457 = vmatpush2.msra.mxu0 0.0
        %2458 = vmatprep.subr.mxu0 0.0
        %2459 = vmatpush2.msra.mxu0 0.0
        %2460 = vmatprep.subr.mxu0 0.0
        %2461 = vmatpush2.msra.mxu0 0.0
        %2462 = vmatprep.subr.mxu0 0.0
        %2463 = vmatpush2.msra.mxu0 0.0
        %2464 = vmatprep.subr.mxu0 0.0
        %2465 = vmatpush2.msra.mxu0 0.0
        %2466 = vmatprep.subr.mxu0 0.0
        %2467 = vmatpush2.msra.mxu0 0.0
        %2468 = vmatprep.subr.mxu0 0.0
        %2469 = vmatpush2.msra.mxu0 0.0
        %2470 = vmatprep.subr.mxu0 0.0
        %2471 = vmatpush2.msra.mxu0 0.0
        %2472 = vmatprep.subr.mxu0 0.0
        %2473 = vmatpush2.msra.mxu0 0.0
        %2474 = vmatprep.mubr.f32.mxu0 0.0
        %2475 = vmatmul.mubr.f32.gmra.mxu0 %v2408
        %v2476 = vpop.f32.mrf.mxu0
        %v2477 = vadd.f32 0.0, %v2476
        %v2478 = vpop.f32.mrf.mxu0
        %2479 = vdwg.mxu0
        %v2480 = vsel %vm521, %v2477, 0.0
        %v2481 = vrot.slane %v2480, 4
        %v2482 = vadd.f32 %v2480, %v2481
        %v2483 = vrot.slane %v2482, 2
        %v2484 = vadd.f32 %v2482, %v2483
        %v2485 = vrot.slane %v2484, 1
        %v2486 = vadd.f32 %v2484, %v2485
        %vm2487 = vcmp.le.f32.partialorder %v2486, 31.0
        %v2488 = vsel %vm2487, %v2400, %v2399
        %v2489 = vor.u32 %v2488, 128
        %2490 = vset.pattern.permute.xlu0 0
        %2491 = vperm.xlu0 %2490, %v2489
        %v2492 = vpop.permute.xlu0 %2491
        %vm2493 = vcmp.lt.s32.totalorder %v441, %v2492
        %v2494 = vsel %vm2493, 1, 0
        %v2495 = vcvt.s32.f32 %v2494
        %v2497 = vsel %vm442, %v2495, 0
        %2499 = vmatprep.subr.mxu0 0.0
        %2500 = vmatpush1.msra.mxu0 0.0
        %2501 = vmatprep.subr.mxu0 0.0
        %2502 = vmatpush1.msra.mxu0 0.0
        %2503 = vmatprep.subr.mxu0 0.0
        %2504 = vmatpush1.msra.mxu0 0.0
        %2505 = vmatprep.subr.mxu0 0.0
        %2506 = vmatpush1.msra.mxu0 0.0
        %2507 = vmatprep.subr.mxu0 0.0
        %2508 = vmatpush1.msra.mxu0 0.0
        %2509 = vmatprep.subr.mxu0 0.0
        %2510 = vmatpush1.msra.mxu0 0.0
        %2511 = vmatprep.subr.mxu0 0.0
        %2512 = vmatpush1.msra.mxu0 0.0
        %2513 = vmatprep.subr.mxu0 0.0
        %2514 = vmatpush1.msra.mxu0 0.0
        %2515 = vmatprep.subr.mxu0 0.0
        %2516 = vmatpush1.msra.mxu0 0.0
        %2517 = vmatprep.subr.mxu0 0.0
        %2518 = vmatpush1.msra.mxu0 0.0
        %2519 = vmatprep.subr.mxu0 0.0
        %2520 = vmatpush1.msra.mxu0 0.0
        %2521 = vmatprep.subr.mxu0 0.0
        %2522 = vmatpush1.msra.mxu0 0.0
        %2523 = vmatprep.subr.mxu0 0.0
        %2524 = vmatpush1.msra.mxu0 0.0
        %2525 = vmatprep.subr.mxu0 0.0
        %2526 = vmatpush1.msra.mxu0 0.0
        %2527 = vmatprep.subr.mxu0 0.0
        %2528 = vmatpush1.msra.mxu0 0.0
        %2529 = vmatprep.subr.mxu0 0.0
        %2530 = vmatpush1.msra.mxu0 1.0
        %2531 = vmatprep.subr.mxu0 0.0
        %2532 = vmatpush2.msra.mxu0 0.0
        %2533 = vmatprep.subr.mxu0 0.0
        %2534 = vmatpush2.msra.mxu0 0.0
        %2535 = vmatprep.subr.mxu0 0.0
        %2536 = vmatpush2.msra.mxu0 0.0
        %2537 = vmatprep.subr.mxu0 0.0
        %2538 = vmatpush2.msra.mxu0 0.0
        %2539 = vmatprep.subr.mxu0 0.0
        %2540 = vmatpush2.msra.mxu0 0.0
        %2541 = vmatprep.subr.mxu0 0.0
        %2542 = vmatpush2.msra.mxu0 0.0
        %2543 = vmatprep.subr.mxu0 0.0
        %2544 = vmatpush2.msra.mxu0 0.0
        %2545 = vmatprep.subr.mxu0 0.0
        %2546 = vmatpush2.msra.mxu0 0.0
        %2547 = vmatprep.subr.mxu0 0.0
        %2548 = vmatpush2.msra.mxu0 0.0
        %2549 = vmatprep.subr.mxu0 0.0
        %2550 = vmatpush2.msra.mxu0 0.0
        %2551 = vmatprep.subr.mxu0 0.0
        %2552 = vmatpush2.msra.mxu0 0.0
        %2553 = vmatprep.subr.mxu0 0.0
        %2554 = vmatpush2.msra.mxu0 0.0
        %2555 = vmatprep.subr.mxu0 0.0
        %2556 = vmatpush2.msra.mxu0 0.0
        %2557 = vmatprep.subr.mxu0 0.0
        %2558 = vmatpush2.msra.mxu0 0.0
        %2559 = vmatprep.subr.mxu0 0.0
        %2560 = vmatpush2.msra.mxu0 0.0
        %2561 = vmatprep.subr.mxu0 0.0
        %2562 = vmatpush2.msra.mxu0 0.0
        %2563 = vmatprep.mubr.f32.mxu0 0.0
        %2564 = vmatmul.mubr.f32.gmra.mxu0 %v2497
        %v2565 = vpop.f32.mrf.mxu0
        %v2566 = vadd.f32 0.0, %v2565
        %v2567 = vpop.f32.mrf.mxu0
        %2568 = vdwg.mxu0
        %v2569 = vsel %vm521, %v2566, 0.0
        %v2570 = vrot.slane %v2569, 4
        %v2571 = vadd.f32 %v2569, %v2570
        %v2572 = vrot.slane %v2571, 2
        %v2573 = vadd.f32 %v2571, %v2572
        %v2574 = vrot.slane %v2573, 1
        %v2575 = vadd.f32 %v2573, %v2574
        %vm2576 = vcmp.le.f32.partialorder %v2575, 31.0
        %v2577 = vsel %vm2576, %v2489, %v2488
        %v2578 = vor.u32 %v2577, 64
        %2579 = vset.pattern.permute.xlu0 0
        %2580 = vperm.xlu0 %2579, %v2578
        %v2581 = vpop.permute.xlu0 %2580
        %vm2582 = vcmp.lt.s32.totalorder %v441, %v2581
        %v2583 = vsel %vm2582, 1, 0
        %v2584 = vcvt.s32.f32 %v2583
        %v2586 = vsel %vm442, %v2584, 0
        %2588 = vmatprep.subr.mxu0 0.0
        %2589 = vmatpush1.msra.mxu0 0.0
        %2590 = vmatprep.subr.mxu0 0.0
        %2591 = vmatpush1.msra.mxu0 0.0
        %2592 = vmatprep.subr.mxu0 0.0
        %2593 = vmatpush1.msra.mxu0 0.0
        %2594 = vmatprep.subr.mxu0 0.0
        %2595 = vmatpush1.msra.mxu0 0.0
        %2596 = vmatprep.subr.mxu0 0.0
        %2597 = vmatpush1.msra.mxu0 0.0
        %2598 = vmatprep.subr.mxu0 0.0
        %2599 = vmatpush1.msra.mxu0 0.0
        %2600 = vmatprep.subr.mxu0 0.0
        %2601 = vmatpush1.msra.mxu0 0.0
        %2602 = vmatprep.subr.mxu0 0.0
        %2603 = vmatpush1.msra.mxu0 0.0
        %2604 = vmatprep.subr.mxu0 0.0
        %2605 = vmatpush1.msra.mxu0 0.0
        %2606 = vmatprep.subr.mxu0 0.0
        %2607 = vmatpush1.msra.mxu0 0.0
        %2608 = vmatprep.subr.mxu0 0.0
        %2609 = vmatpush1.msra.mxu0 0.0
        %2610 = vmatprep.subr.mxu0 0.0
        %2611 = vmatpush1.msra.mxu0 0.0
        %2612 = vmatprep.subr.mxu0 0.0
        %2613 = vmatpush1.msra.mxu0 0.0
        %2614 = vmatprep.subr.mxu0 0.0
        %2615 = vmatpush1.msra.mxu0 0.0
        %2616 = vmatprep.subr.mxu0 0.0
        %2617 = vmatpush1.msra.mxu0 0.0
        %2618 = vmatprep.subr.mxu0 0.0
        %2619 = vmatpush1.msra.mxu0 1.0
        %2620 = vmatprep.subr.mxu0 0.0
        %2621 = vmatpush2.msra.mxu0 0.0
        %2622 = vmatprep.subr.mxu0 0.0
        %2623 = vmatpush2.msra.mxu0 0.0
        %2624 = vmatprep.subr.mxu0 0.0
        %2625 = vmatpush2.msra.mxu0 0.0
        %2626 = vmatprep.subr.mxu0 0.0
        %2627 = vmatpush2.msra.mxu0 0.0
        %2628 = vmatprep.subr.mxu0 0.0
        %2629 = vmatpush2.msra.mxu0 0.0
        %2630 = vmatprep.subr.mxu0 0.0
        %2631 = vmatpush2.msra.mxu0 0.0
        %2632 = vmatprep.subr.mxu0 0.0
        %2633 = vmatpush2.msra.mxu0 0.0
        %2634 = vmatprep.subr.mxu0 0.0
        %2635 = vmatpush2.msra.mxu0 0.0
        %2636 = vmatprep.subr.mxu0 0.0
        %2637 = vmatpush2.msra.mxu0 0.0
        %2638 = vmatprep.subr.mxu0 0.0
        %2639 = vmatpush2.msra.mxu0 0.0
        %2640 = vmatprep.subr.mxu0 0.0
        %2641 = vmatpush2.msra.mxu0 0.0
        %2642 = vmatprep.subr.mxu0 0.0
        %2643 = vmatpush2.msra.mxu0 0.0
        %2644 = vmatprep.subr.mxu0 0.0
        %2645 = vmatpush2.msra.mxu0 0.0
        %2646 = vmatprep.subr.mxu0 0.0
        %2647 = vmatpush2.msra.mxu0 0.0
        %2648 = vmatprep.subr.mxu0 0.0
        %2649 = vmatpush2.msra.mxu0 0.0
        %2650 = vmatprep.subr.mxu0 0.0
        %2651 = vmatpush2.msra.mxu0 0.0
        %2652 = vmatprep.mubr.f32.mxu0 0.0
        %2653 = vmatmul.mubr.f32.gmra.mxu0 %v2586
        %v2654 = vpop.f32.mrf.mxu0
        %v2655 = vadd.f32 0.0, %v2654
        %v2656 = vpop.f32.mrf.mxu0
        %2657 = vdwg.mxu0
        %v2658 = vsel %vm521, %v2655, 0.0
        %v2659 = vrot.slane %v2658, 4
        %v2660 = vadd.f32 %v2658, %v2659
        %v2661 = vrot.slane %v2660, 2
        %v2662 = vadd.f32 %v2660, %v2661
        %v2663 = vrot.slane %v2662, 1
        %v2664 = vadd.f32 %v2662, %v2663
        %vm2665 = vcmp.le.f32.partialorder %v2664, 31.0
        %v2666 = vsel %vm2665, %v2578, %v2577
        %v2667 = vor.u32 %v2666, 32
        %2668 = vset.pattern.permute.xlu0 0
        %2669 = vperm.xlu0 %2668, %v2667
        %v2670 = vpop.permute.xlu0 %2669
        %vm2671 = vcmp.lt.s32.totalorder %v441, %v2670
        %v2672 = vsel %vm2671, 1, 0
        %v2673 = vcvt.s32.f32 %v2672
        %v2675 = vsel %vm442, %v2673, 0
        %2677 = vmatprep.subr.mxu0 0.0
        %2678 = vmatpush1.msra.mxu0 0.0
        %2679 = vmatprep.subr.mxu0 0.0
        %2680 = vmatpush1.msra.mxu0 0.0
        %2681 = vmatprep.subr.mxu0 0.0
        %2682 = vmatpush1.msra.mxu0 0.0
        %2683 = vmatprep.subr.mxu0 0.0
        %2684 = vmatpush1.msra.mxu0 0.0
        %2685 = vmatprep.subr.mxu0 0.0
        %2686 = vmatpush1.msra.mxu0 0.0
        %2687 = vmatprep.subr.mxu0 0.0
        %2688 = vmatpush1.msra.mxu0 0.0
        %2689 = vmatprep.subr.mxu0 0.0
        %2690 = vmatpush1.msra.mxu0 0.0
        %2691 = vmatprep.subr.mxu0 0.0
        %2692 = vmatpush1.msra.mxu0 0.0
        %2693 = vmatprep.subr.mxu0 0.0
        %2694 = vmatpush1.msra.mxu0 0.0
        %2695 = vmatprep.subr.mxu0 0.0
        %2696 = vmatpush1.msra.mxu0 0.0
        %2697 = vmatprep.subr.mxu0 0.0
        %2698 = vmatpush1.msra.mxu0 0.0
        %2699 = vmatprep.subr.mxu0 0.0
        %2700 = vmatpush1.msra.mxu0 0.0
        %2701 = vmatprep.subr.mxu0 0.0
        %2702 = vmatpush1.msra.mxu0 0.0
        %2703 = vmatprep.subr.mxu0 0.0
        %2704 = vmatpush1.msra.mxu0 0.0
        %2705 = vmatprep.subr.mxu0 0.0
        %2706 = vmatpush1.msra.mxu0 0.0
        %2707 = vmatprep.subr.mxu0 0.0
        %2708 = vmatpush1.msra.mxu0 1.0
        %2709 = vmatprep.subr.mxu0 0.0
        %2710 = vmatpush2.msra.mxu0 0.0
        %2711 = vmatprep.subr.mxu0 0.0
        %2712 = vmatpush2.msra.mxu0 0.0
        %2713 = vmatprep.subr.mxu0 0.0
        %2714 = vmatpush2.msra.mxu0 0.0
        %2715 = vmatprep.subr.mxu0 0.0
        %2716 = vmatpush2.msra.mxu0 0.0
        %2717 = vmatprep.subr.mxu0 0.0
        %2718 = vmatpush2.msra.mxu0 0.0
        %2719 = vmatprep.subr.mxu0 0.0
        %2720 = vmatpush2.msra.mxu0 0.0
        %2721 = vmatprep.subr.mxu0 0.0
        %2722 = vmatpush2.msra.mxu0 0.0
        %2723 = vmatprep.subr.mxu0 0.0
        %2724 = vmatpush2.msra.mxu0 0.0
        %2725 = vmatprep.subr.mxu0 0.0
        %2726 = vmatpush2.msra.mxu0 0.0
        %2727 = vmatprep.subr.mxu0 0.0
        %2728 = vmatpush2.msra.mxu0 0.0
        %2729 = vmatprep.subr.mxu0 0.0
        %2730 = vmatpush2.msra.mxu0 0.0
        %2731 = vmatprep.subr.mxu0 0.0
        %2732 = vmatpush2.msra.mxu0 0.0
        %2733 = vmatprep.subr.mxu0 0.0
        %2734 = vmatpush2.msra.mxu0 0.0
        %2735 = vmatprep.subr.mxu0 0.0
        %2736 = vmatpush2.msra.mxu0 0.0
        %2737 = vmatprep.subr.mxu0 0.0
        %2738 = vmatpush2.msra.mxu0 0.0
        %2739 = vmatprep.subr.mxu0 0.0
        %2740 = vmatpush2.msra.mxu0 0.0
        %2741 = vmatprep.mubr.f32.mxu0 0.0
        %2742 = vmatmul.mubr.f32.gmra.mxu0 %v2675
        %v2743 = vpop.f32.mrf.mxu0
        %v2744 = vadd.f32 0.0, %v2743
        %v2745 = vpop.f32.mrf.mxu0
        %2746 = vdwg.mxu0
        %v2747 = vsel %vm521, %v2744, 0.0
        %v2748 = vrot.slane %v2747, 4
        %v2749 = vadd.f32 %v2747, %v2748
        %v2750 = vrot.slane %v2749, 2
        %v2751 = vadd.f32 %v2749, %v2750
        %v2752 = vrot.slane %v2751, 1
        %v2753 = vadd.f32 %v2751, %v2752
        %vm2754 = vcmp.le.f32.partialorder %v2753, 31.0
        %v2755 = vsel %vm2754, %v2667, %v2666
        %v2756 = vor.u32 %v2755, 16
        %2757 = vset.pattern.permute.xlu0 0
        %2758 = vperm.xlu0 %2757, %v2756
        %v2759 = vpop.permute.xlu0 %2758
        %vm2760 = vcmp.lt.s32.totalorder %v441, %v2759
        %v2761 = vsel %vm2760, 1, 0
        %v2762 = vcvt.s32.f32 %v2761
        %v2764 = vsel %vm442, %v2762, 0
        %2766 = vmatprep.subr.mxu0 0.0
        %2767 = vmatpush1.msra.mxu0 0.0
        %2768 = vmatprep.subr.mxu0 0.0
        %2769 = vmatpush1.msra.mxu0 0.0
        %2770 = vmatprep.subr.mxu0 0.0
        %2771 = vmatpush1.msra.mxu0 0.0
        %2772 = vmatprep.subr.mxu0 0.0
        %2773 = vmatpush1.msra.mxu0 0.0
        %2774 = vmatprep.subr.mxu0 0.0
        %2775 = vmatpush1.msra.mxu0 0.0
        %2776 = vmatprep.subr.mxu0 0.0
        %2777 = vmatpush1.msra.mxu0 0.0
        %2778 = vmatprep.subr.mxu0 0.0
        %2779 = vmatpush1.msra.mxu0 0.0
        %2780 = vmatprep.subr.mxu0 0.0
        %2781 = vmatpush1.msra.mxu0 0.0
        %2782 = vmatprep.subr.mxu0 0.0
        %2783 = vmatpush1.msra.mxu0 0.0
        %2784 = vmatprep.subr.mxu0 0.0
        %2785 = vmatpush1.msra.mxu0 0.0
        %2786 = vmatprep.subr.mxu0 0.0
        %2787 = vmatpush1.msra.mxu0 0.0
        %2788 = vmatprep.subr.mxu0 0.0
        %2789 = vmatpush1.msra.mxu0 0.0
        %2790 = vmatprep.subr.mxu0 0.0
        %2791 = vmatpush1.msra.mxu0 0.0
        %2792 = vmatprep.subr.mxu0 0.0
        %2793 = vmatpush1.msra.mxu0 0.0
        %2794 = vmatprep.subr.mxu0 0.0
        %2795 = vmatpush1.msra.mxu0 0.0
        %2796 = vmatprep.subr.mxu0 0.0
        %2797 = vmatpush1.msra.mxu0 1.0
        %2798 = vmatprep.subr.mxu0 0.0
        %2799 = vmatpush2.msra.mxu0 0.0
        %2800 = vmatprep.subr.mxu0 0.0
        %2801 = vmatpush2.msra.mxu0 0.0
        %2802 = vmatprep.subr.mxu0 0.0
        %2803 = vmatpush2.msra.mxu0 0.0
        %2804 = vmatprep.subr.mxu0 0.0
        %2805 = vmatpush2.msra.mxu0 0.0
        %2806 = vmatprep.subr.mxu0 0.0
        %2807 = vmatpush2.msra.mxu0 0.0
        %2808 = vmatprep.subr.mxu0 0.0
        %2809 = vmatpush2.msra.mxu0 0.0
        %2810 = vmatprep.subr.mxu0 0.0
        %2811 = vmatpush2.msra.mxu0 0.0
        %2812 = vmatprep.subr.mxu0 0.0
        %2813 = vmatpush2.msra.mxu0 0.0
        %2814 = vmatprep.subr.mxu0 0.0
        %2815 = vmatpush2.msra.mxu0 0.0
        %2816 = vmatprep.subr.mxu0 0.0
        %2817 = vmatpush2.msra.mxu0 0.0
        %2818 = vmatprep.subr.mxu0 0.0
        %2819 = vmatpush2.msra.mxu0 0.0
        %2820 = vmatprep.subr.mxu0 0.0
        %2821 = vmatpush2.msra.mxu0 0.0
        %2822 = vmatprep.subr.mxu0 0.0
        %2823 = vmatpush2.msra.mxu0 0.0
        %2824 = vmatprep.subr.mxu0 0.0
        %2825 = vmatpush2.msra.mxu0 0.0
        %2826 = vmatprep.subr.mxu0 0.0
        %2827 = vmatpush2.msra.mxu0 0.0
        %2828 = vmatprep.subr.mxu0 0.0
        %2829 = vmatpush2.msra.mxu0 0.0
        %2830 = vmatprep.mubr.f32.mxu0 0.0
        %2831 = vmatmul.mubr.f32.gmra.mxu0 %v2764
        %v2832 = vpop.f32.mrf.mxu0
        %v2833 = vadd.f32 0.0, %v2832
        %v2834 = vpop.f32.mrf.mxu0
        %2835 = vdwg.mxu0
        %v2836 = vsel %vm521, %v2833, 0.0
        %v2837 = vrot.slane %v2836, 4
        %v2838 = vadd.f32 %v2836, %v2837
        %v2839 = vrot.slane %v2838, 2
        %v2840 = vadd.f32 %v2838, %v2839
        %v2841 = vrot.slane %v2840, 1
        %v2842 = vadd.f32 %v2840, %v2841
        %vm2843 = vcmp.le.f32.partialorder %v2842, 31.0
        %v2844 = vsel %vm2843, %v2756, %v2755
        %v2845 = vor.u32 %v2844, 8
        %2846 = vset.pattern.permute.xlu0 0
        %2847 = vperm.xlu0 %2846, %v2845
        %v2848 = vpop.permute.xlu0 %2847
        %vm2849 = vcmp.lt.s32.totalorder %v441, %v2848
        %v2850 = vsel %vm2849, 1, 0
        %v2851 = vcvt.s32.f32 %v2850
        %v2853 = vsel %vm442, %v2851, 0
        %2855 = vmatprep.subr.mxu0 0.0
        %2856 = vmatpush1.msra.mxu0 0.0
        %2857 = vmatprep.subr.mxu0 0.0
        %2858 = vmatpush1.msra.mxu0 0.0
        %2859 = vmatprep.subr.mxu0 0.0
        %2860 = vmatpush1.msra.mxu0 0.0
        %2861 = vmatprep.subr.mxu0 0.0
        %2862 = vmatpush1.msra.mxu0 0.0
        %2863 = vmatprep.subr.mxu0 0.0
        %2864 = vmatpush1.msra.mxu0 0.0
        %2865 = vmatprep.subr.mxu0 0.0
        %2866 = vmatpush1.msra.mxu0 0.0
        %2867 = vmatprep.subr.mxu0 0.0
        %2868 = vmatpush1.msra.mxu0 0.0
        %2869 = vmatprep.subr.mxu0 0.0
        %2870 = vmatpush1.msra.mxu0 0.0
        %2871 = vmatprep.subr.mxu0 0.0
        %2872 = vmatpush1.msra.mxu0 0.0
        %2873 = vmatprep.subr.mxu0 0.0
        %2874 = vmatpush1.msra.mxu0 0.0
        %2875 = vmatprep.subr.mxu0 0.0
        %2876 = vmatpush1.msra.mxu0 0.0
        %2877 = vmatprep.subr.mxu0 0.0
        %2878 = vmatpush1.msra.mxu0 0.0
        %2879 = vmatprep.subr.mxu0 0.0
        %2880 = vmatpush1.msra.mxu0 0.0
        %2881 = vmatprep.subr.mxu0 0.0
        %2882 = vmatpush1.msra.mxu0 0.0
        %2883 = vmatprep.subr.mxu0 0.0
        %2884 = vmatpush1.msra.mxu0 0.0
        %2885 = vmatprep.subr.mxu0 0.0
        %2886 = vmatpush1.msra.mxu0 1.0
        %2887 = vmatprep.subr.mxu0 0.0
        %2888 = vmatpush2.msra.mxu0 0.0
        %2889 = vmatprep.subr.mxu0 0.0
        %2890 = vmatpush2.msra.mxu0 0.0
        %2891 = vmatprep.subr.mxu0 0.0
        %2892 = vmatpush2.msra.mxu0 0.0
        %2893 = vmatprep.subr.mxu0 0.0
        %2894 = vmatpush2.msra.mxu0 0.0
        %2895 = vmatprep.subr.mxu0 0.0
        %2896 = vmatpush2.msra.mxu0 0.0
        %2897 = vmatprep.subr.mxu0 0.0
        %2898 = vmatpush2.msra.mxu0 0.0
        %2899 = vmatprep.subr.mxu0 0.0
        %2900 = vmatpush2.msra.mxu0 0.0
        %2901 = vmatprep.subr.mxu0 0.0
        %2902 = vmatpush2.msra.mxu0 0.0
        %2903 = vmatprep.subr.mxu0 0.0
        %2904 = vmatpush2.msra.mxu0 0.0
        %2905 = vmatprep.subr.mxu0 0.0
        %2906 = vmatpush2.msra.mxu0 0.0
        %2907 = vmatprep.subr.mxu0 0.0
        %2908 = vmatpush2.msra.mxu0 0.0
        %2909 = vmatprep.subr.mxu0 0.0
        %2910 = vmatpush2.msra.mxu0 0.0
        %2911 = vmatprep.subr.mxu0 0.0
        %2912 = vmatpush2.msra.mxu0 0.0
        %2913 = vmatprep.subr.mxu0 0.0
        %2914 = vmatpush2.msra.mxu0 0.0
        %2915 = vmatprep.subr.mxu0 0.0
        %2916 = vmatpush2.msra.mxu0 0.0
        %2917 = vmatprep.subr.mxu0 0.0
        %2918 = vmatpush2.msra.mxu0 0.0
        %2919 = vmatprep.mubr.f32.mxu0 0.0
        %2920 = vmatmul.mubr.f32.gmra.mxu0 %v2853
        %v2921 = vpop.f32.mrf.mxu0
        %v2922 = vadd.f32 0.0, %v2921
        %v2923 = vpop.f32.mrf.mxu0
        %2924 = vdwg.mxu0
        %v2925 = vsel %vm521, %v2922, 0.0
        %v2926 = vrot.slane %v2925, 4
        %v2927 = vadd.f32 %v2925, %v2926
        %v2928 = vrot.slane %v2927, 2
        %v2929 = vadd.f32 %v2927, %v2928
        %v2930 = vrot.slane %v2929, 1
        %v2931 = vadd.f32 %v2929, %v2930
        %vm2932 = vcmp.le.f32.partialorder %v2931, 31.0
        %v2933 = vsel %vm2932, %v2845, %v2844
        %v2934 = vor.u32 %v2933, 4
        %2935 = vset.pattern.permute.xlu0 0
        %2936 = vperm.xlu0 %2935, %v2934
        %v2937 = vpop.permute.xlu0 %2936
        %vm2938 = vcmp.lt.s32.totalorder %v441, %v2937
        %v2939 = vsel %vm2938, 1, 0
        %v2940 = vcvt.s32.f32 %v2939
        %v2942 = vsel %vm442, %v2940, 0
        %2944 = vmatprep.subr.mxu0 0.0
        %2945 = vmatpush1.msra.mxu0 0.0
        %2946 = vmatprep.subr.mxu0 0.0
        %2947 = vmatpush1.msra.mxu0 0.0
        %2948 = vmatprep.subr.mxu0 0.0
        %2949 = vmatpush1.msra.mxu0 0.0
        %2950 = vmatprep.subr.mxu0 0.0
        %2951 = vmatpush1.msra.mxu0 0.0
        %2952 = vmatprep.subr.mxu0 0.0
        %2953 = vmatpush1.msra.mxu0 0.0
        %2954 = vmatprep.subr.mxu0 0.0
        %2955 = vmatpush1.msra.mxu0 0.0
        %2956 = vmatprep.subr.mxu0 0.0
        %2957 = vmatpush1.msra.mxu0 0.0
        %2958 = vmatprep.subr.mxu0 0.0
        %2959 = vmatpush1.msra.mxu0 0.0
        %2960 = vmatprep.subr.mxu0 0.0
        %2961 = vmatpush1.msra.mxu0 0.0
        %2962 = vmatprep.subr.mxu0 0.0
        %2963 = vmatpush1.msra.mxu0 0.0
        %2964 = vmatprep.subr.mxu0 0.0
        %2965 = vmatpush1.msra.mxu0 0.0
        %2966 = vmatprep.subr.mxu0 0.0
        %2967 = vmatpush1.msra.mxu0 0.0
        %2968 = vmatprep.subr.mxu0 0.0
        %2969 = vmatpush1.msra.mxu0 0.0
        %2970 = vmatprep.subr.mxu0 0.0
        %2971 = vmatpush1.msra.mxu0 0.0
        %2972 = vmatprep.subr.mxu0 0.0
        %2973 = vmatpush1.msra.mxu0 0.0
        %2974 = vmatprep.subr.mxu0 0.0
        %2975 = vmatpush1.msra.mxu0 1.0
        %2976 = vmatprep.subr.mxu0 0.0
        %2977 = vmatpush2.msra.mxu0 0.0
        %2978 = vmatprep.subr.mxu0 0.0
        %2979 = vmatpush2.msra.mxu0 0.0
        %2980 = vmatprep.subr.mxu0 0.0
        %2981 = vmatpush2.msra.mxu0 0.0
        %2982 = vmatprep.subr.mxu0 0.0
        %2983 = vmatpush2.msra.mxu0 0.0
        %2984 = vmatprep.subr.mxu0 0.0
        %2985 = vmatpush2.msra.mxu0 0.0
        %2986 = vmatprep.subr.mxu0 0.0
        %2987 = vmatpush2.msra.mxu0 0.0
        %2988 = vmatprep.subr.mxu0 0.0
        %2989 = vmatpush2.msra.mxu0 0.0
        %2990 = vmatprep.subr.mxu0 0.0
        %2991 = vmatpush2.msra.mxu0 0.0
        %2992 = vmatprep.subr.mxu0 0.0
        %2993 = vmatpush2.msra.mxu0 0.0
        %2994 = vmatprep.subr.mxu0 0.0
        %2995 = vmatpush2.msra.mxu0 0.0
        %2996 = vmatprep.subr.mxu0 0.0
        %2997 = vmatpush2.msra.mxu0 0.0
        %2998 = vmatprep.subr.mxu0 0.0
        %2999 = vmatpush2.msra.mxu0 0.0
        %3000 = vmatprep.subr.mxu0 0.0
        %3001 = vmatpush2.msra.mxu0 0.0
        %3002 = vmatprep.subr.mxu0 0.0
        %3003 = vmatpush2.msra.mxu0 0.0
        %3004 = vmatprep.subr.mxu0 0.0
        %3005 = vmatpush2.msra.mxu0 0.0
        %3006 = vmatprep.subr.mxu0 0.0
        %3007 = vmatpush2.msra.mxu0 0.0
        %3008 = vmatprep.mubr.f32.mxu0 0.0
        %3009 = vmatmul.mubr.f32.gmra.mxu0 %v2942
        %v3010 = vpop.f32.mrf.mxu0
        %v3011 = vadd.f32 0.0, %v3010
        %v3012 = vpop.f32.mrf.mxu0
        %3013 = vdwg.mxu0
        %v3014 = vsel %vm521, %v3011, 0.0
        %v3015 = vrot.slane %v3014, 4
        %v3016 = vadd.f32 %v3014, %v3015
        %v3017 = vrot.slane %v3016, 2
        %v3018 = vadd.f32 %v3016, %v3017
        %v3019 = vrot.slane %v3018, 1
        %v3020 = vadd.f32 %v3018, %v3019
        %vm3021 = vcmp.le.f32.partialorder %v3020, 31.0
        %v3022 = vsel %vm3021, %v2934, %v2933
        %v3023 = vor.u32 %v3022, 2
        %3024 = vset.pattern.permute.xlu0 0
        %3025 = vperm.xlu0 %3024, %v3023
        %v3026 = vpop.permute.xlu0 %3025
        %vm3027 = vcmp.lt.s32.totalorder %v441, %v3026
        %v3028 = vsel %vm3027, 1, 0
        %v3029 = vcvt.s32.f32 %v3028
        %v3031 = vsel %vm442, %v3029, 0
        %3033 = vmatprep.subr.mxu0 0.0
        %3034 = vmatpush1.msra.mxu0 0.0
        %3035 = vmatprep.subr.mxu0 0.0
        %3036 = vmatpush1.msra.mxu0 0.0
        %3037 = vmatprep.subr.mxu0 0.0
        %3038 = vmatpush1.msra.mxu0 0.0
        %3039 = vmatprep.subr.mxu0 0.0
        %3040 = vmatpush1.msra.mxu0 0.0
        %3041 = vmatprep.subr.mxu0 0.0
        %3042 = vmatpush1.msra.mxu0 0.0
        %3043 = vmatprep.subr.mxu0 0.0
        %3044 = vmatpush1.msra.mxu0 0.0
        %3045 = vmatprep.subr.mxu0 0.0
        %3046 = vmatpush1.msra.mxu0 0.0
        %3047 = vmatprep.subr.mxu0 0.0
        %3048 = vmatpush1.msra.mxu0 0.0
        %3049 = vmatprep.subr.mxu0 0.0
        %3050 = vmatpush1.msra.mxu0 0.0
        %3051 = vmatprep.subr.mxu0 0.0
        %3052 = vmatpush1.msra.mxu0 0.0
        %3053 = vmatprep.subr.mxu0 0.0
        %3054 = vmatpush1.msra.mxu0 0.0
        %3055 = vmatprep.subr.mxu0 0.0
        %3056 = vmatpush1.msra.mxu0 0.0
        %3057 = vmatprep.subr.mxu0 0.0
        %3058 = vmatpush1.msra.mxu0 0.0
        %3059 = vmatprep.subr.mxu0 0.0
        %3060 = vmatpush1.msra.mxu0 0.0
        %3061 = vmatprep.subr.mxu0 0.0
        %3062 = vmatpush1.msra.mxu0 0.0
        %3063 = vmatprep.subr.mxu0 0.0
        %3064 = vmatpush1.msra.mxu0 1.0
        %3065 = vmatprep.subr.mxu0 0.0
        %3066 = vmatpush2.msra.mxu0 0.0
        %3067 = vmatprep.subr.mxu0 0.0
        %3068 = vmatpush2.msra.mxu0 0.0
        %3069 = vmatprep.subr.mxu0 0.0
        %3070 = vmatpush2.msra.mxu0 0.0
        %3071 = vmatprep.subr.mxu0 0.0
        %3072 = vmatpush2.msra.mxu0 0.0
        %3073 = vmatprep.subr.mxu0 0.0
        %3074 = vmatpush2.msra.mxu0 0.0
        %3075 = vmatprep.subr.mxu0 0.0
        %3076 = vmatpush2.msra.mxu0 0.0
        %3077 = vmatprep.subr.mxu0 0.0
        %3078 = vmatpush2.msra.mxu0 0.0
        %3079 = vmatprep.subr.mxu0 0.0
        %3080 = vmatpush2.msra.mxu0 0.0
        %3081 = vmatprep.subr.mxu0 0.0
        %3082 = vmatpush2.msra.mxu0 0.0
        %3083 = vmatprep.subr.mxu0 0.0
        %3084 = vmatpush2.msra.mxu0 0.0
        %3085 = vmatprep.subr.mxu0 0.0
        %3086 = vmatpush2.msra.mxu0 0.0
        %3087 = vmatprep.subr.mxu0 0.0
        %3088 = vmatpush2.msra.mxu0 0.0
        %3089 = vmatprep.subr.mxu0 0.0
        %3090 = vmatpush2.msra.mxu0 0.0
        %3091 = vmatprep.subr.mxu0 0.0
        %3092 = vmatpush2.msra.mxu0 0.0
        %3093 = vmatprep.subr.mxu0 0.0
        %3094 = vmatpush2.msra.mxu0 0.0
        %3095 = vmatprep.subr.mxu0 0.0
        %3096 = vmatpush2.msra.mxu0 0.0
        %3097 = vmatprep.mubr.f32.mxu0 0.0
        %3098 = vmatmul.mubr.f32.gmra.mxu0 %v3031
        %v3099 = vpop.f32.mrf.mxu0
        %v3100 = vadd.f32 0.0, %v3099
        %v3101 = vpop.f32.mrf.mxu0
        %3102 = vdwg.mxu0
        %v3103 = vsel %vm521, %v3100, 0.0
        %v3104 = vrot.slane %v3103, 4
        %v3105 = vadd.f32 %v3103, %v3104
        %v3106 = vrot.slane %v3105, 2
        %v3107 = vadd.f32 %v3105, %v3106
        %v3108 = vrot.slane %v3107, 1
        %v3109 = vadd.f32 %v3107, %v3108
        %vm3110 = vcmp.le.f32.partialorder %v3109, 31.0
        %v3111 = vsel %vm3110, %v3023, %v3022
        %v3112 = vor.u32 %v3111, 1
        %3113 = vset.pattern.permute.xlu0 0
        %3114 = vperm.xlu0 %3113, %v3112
        %v3115 = vpop.permute.xlu0 %3114
        %vm3116 = vcmp.lt.s32.totalorder %v441, %v3115
        %v3117 = vsel %vm3116, 1, 0
        %v3118 = vcvt.s32.f32 %v3117
        %v3120 = vsel %vm442, %v3118, 0
        %3122 = vmatprep.subr.mxu0 0.0
        %3123 = vmatpush1.msra.mxu0 0.0
        %3124 = vmatprep.subr.mxu0 0.0
        %3125 = vmatpush1.msra.mxu0 0.0
        %3126 = vmatprep.subr.mxu0 0.0
        %3127 = vmatpush1.msra.mxu0 0.0
        %3128 = vmatprep.subr.mxu0 0.0
        %3129 = vmatpush1.msra.mxu0 0.0
        %3130 = vmatprep.subr.mxu0 0.0
        %3131 = vmatpush1.msra.mxu0 0.0
        %3132 = vmatprep.subr.mxu0 0.0
        %3133 = vmatpush1.msra.mxu0 0.0
        %3134 = vmatprep.subr.mxu0 0.0
        %3135 = vmatpush1.msra.mxu0 0.0
        %3136 = vmatprep.subr.mxu0 0.0
        %3137 = vmatpush1.msra.mxu0 0.0
        %3138 = vmatprep.subr.mxu0 0.0
        %3139 = vmatpush1.msra.mxu0 0.0
        %3140 = vmatprep.subr.mxu0 0.0
        %3141 = vmatpush1.msra.mxu0 0.0
        %3142 = vmatprep.subr.mxu0 0.0
        %3143 = vmatpush1.msra.mxu0 0.0
        %3144 = vmatprep.subr.mxu0 0.0
        %3145 = vmatpush1.msra.mxu0 0.0
        %3146 = vmatprep.subr.mxu0 0.0
        %3147 = vmatpush1.msra.mxu0 0.0
        %3148 = vmatprep.subr.mxu0 0.0
        %3149 = vmatpush1.msra.mxu0 0.0
        %3150 = vmatprep.subr.mxu0 0.0
        %3151 = vmatpush1.msra.mxu0 0.0
        %3152 = vmatprep.subr.mxu0 0.0
        %3153 = vmatpush1.msra.mxu0 1.0
        %3154 = vmatprep.subr.mxu0 0.0
        %3155 = vmatpush2.msra.mxu0 0.0
        %3156 = vmatprep.subr.mxu0 0.0
        %3157 = vmatpush2.msra.mxu0 0.0
        %3158 = vmatprep.subr.mxu0 0.0
        %3159 = vmatpush2.msra.mxu0 0.0
        %3160 = vmatprep.subr.mxu0 0.0
        %3161 = vmatpush2.msra.mxu0 0.0
        %3162 = vmatprep.subr.mxu0 0.0
        %3163 = vmatpush2.msra.mxu0 0.0
        %3164 = vmatprep.subr.mxu0 0.0
        %3165 = vmatpush2.msra.mxu0 0.0
        %3166 = vmatprep.subr.mxu0 0.0
        %3167 = vmatpush2.msra.mxu0 0.0
        %3168 = vmatprep.subr.mxu0 0.0
        %3169 = vmatpush2.msra.mxu0 0.0
        %3170 = vmatprep.subr.mxu0 0.0
        %3171 = vmatpush2.msra.mxu0 0.0
        %3172 = vmatprep.subr.mxu0 0.0
        %3173 = vmatpush2.msra.mxu0 0.0
        %3174 = vmatprep.subr.mxu0 0.0
        %3175 = vmatpush2.msra.mxu0 0.0
        %3176 = vmatprep.subr.mxu0 0.0
        %3177 = vmatpush2.msra.mxu0 0.0
        %3178 = vmatprep.subr.mxu0 0.0
        %3179 = vmatpush2.msra.mxu0 0.0
        %3180 = vmatprep.subr.mxu0 0.0
        %3181 = vmatpush2.msra.mxu0 0.0
        %3182 = vmatprep.subr.mxu0 0.0
        %3183 = vmatpush2.msra.mxu0 0.0
        %3184 = vmatprep.subr.mxu0 0.0
        %3185 = vmatpush2.msra.mxu0 0.0
        %3186 = vmatprep.mubr.f32.mxu0 0.0
        %3187 = vmatmul.mubr.f32.gmra.mxu0 %v3120
        %v3188 = vpop.f32.mrf.mxu0
        %v3189 = vadd.f32 0.0, %v3188
        %v3190 = vpop.f32.mrf.mxu0
        %3191 = vdwg.mxu0
        %v3192 = vsel %vm521, %v3189, 0.0
        %v3193 = vrot.slane %v3192, 4
        %v3194 = vadd.f32 %v3192, %v3193
        %v3195 = vrot.slane %v3194, 2
        %v3196 = vadd.f32 %v3194, %v3195
        %v3197 = vrot.slane %v3196, 1
        %v3198 = vadd.f32 %v3196, %v3197
        %vm3199 = vcmp.le.f32.partialorder %v3198, 31.0
        %v3200 = vsel %vm3199, %v3112, %v3111
        %v3202 = vrcp.pop 4.394449
        %v3203 = vmul.f32 %v3200, %v3202
        %v3204 = vrsqrt.pop %v3203
        %v3205 = vmul.f32 %v3203, %v3204
        %vm3206 = vcmp.eq.f32.partialorder %v3203, inf
        %v3207 = vsel %vm3206, %v3203, %v3205
        %vm3208 = vcmp.eq.f32.partialorder %v3203, 0.0
        %v3209 = vand.u32 %v3203, 2147483648
        %v3210 = vsel %vm3208, %v3209, %v3207
        %v3211 = vmul.f32 %v3210, 2.0
        %v3212 = vmul.f32 %v3211, %v3210
        %v3213 = vadd.f32 %v3212, 1e-08
        %v3214 = vrcp.pop %v3213
        %v3215 = vmul.f32 1.0, %v3214
        %vm3216 = vcmask 0
        %3217 = vst.msk [vmem:[%s394] sm:$0x1] %vm3216, %v3215
        %v3218 = vld [vmem:[%s361] sm:$0xff]
        %v3219 = vsub.f32 0.0, %v3215
        %3221 = vset.pattern.permute.xlu0 0
        %3222 = vperm.xlu0 %3221, %v3219
        %v3223 = vpop.permute.xlu0 %3222
        %v3225 = vmul.f32 %v3223, %v3218
        %v3226 = vmul.f32 %v3225, 1.442695
        %v3227 = vpow.pop %v3226
        %3228 = vst.msk [vmem:[%s354] sm:$0xff] %vm442, %v3227
        %v3229 = vld [vmem:[%s3] sm:$0xf]
        %v3230 = vlaneseq
        %v3231 = vshrl.u32 %v3230, 7
        %v3232 = vsub.s32 0, %v3231
        %v3233 = vrot.slane %v3229, %v3232
        %v3234 = vmul.f32 %v400, %v3233
        %v3235 = vadd.f32 %v3234, 0.0
        %v3236 = vlaneseq
        %v3237 = vshrl.u32 %v3236, 7
        %v3238 = vsub.s32 1, %v3237
        %v3239 = vrot.slane %v3229, %v3238
        %v3240 = vmul.f32 %v411, %v3239
        %v3241 = vadd.f32 %v3235, %v3240
        %v3242 = vlaneseq
        %v3243 = vshrl.u32 %v3242, 7
        %v3244 = vsub.s32 2, %v3243
        %v3245 = vrot.slane %v3229, %v3244
        %v3246 = vmul.f32 %v422, %v3245
        %v3247 = vadd.f32 %v3241, %v3246
        %v3248 = vlaneseq
        %v3249 = vshrl.u32 %v3248, 7
        %v3250 = vsub.s32 3, %v3249
        %v3251 = vrot.slane %v3229, %v3250
        %v3252 = vmul.f32 %v433, %v3251
        %v3253 = vadd.f32 %v3247, %v3252
        %v3254 = vld [vmem:[%s391] sm:$0x1]
        %v3256 = vlaneseq
        %v3257 = vshrl.u32 %v3256, 7
        %v3258 = vsub.s32 0, %v3257
        %v3259 = vrot.slane %v3254, %v3258
        %v3261 = vsub.f32 %v3253, %v3259
        %vm3262 = vcmask 261120
        %3263 = vst.msk [vmem:[%s373] sm:$0xff] %vm3262, %v3261
        %v3264 = vld [vmem:[%s4] sm:$0xff]
        %v3265 = vmul.f32 %v3215, -2.0
        %3267 = vset.pattern.permute.xlu0 0
        %3268 = vperm.xlu0 %3267, %v3265
        %v3269 = vpop.permute.xlu0 %3268
        %v3271 = vmul.f32 %v3269, %v3227
        %v3272 = vpack.c.bf16 %v3271, %v3271
        %v3273 = vunpack.c.l.bf16 %v3272
        %v3274 = vsub.f32 %v3271, %v3273
        %v3276 = vsel %vm442, %v3274, 0
        %3278 = vmatprep.subr.mxu0 0.0
        %3279 = vmatpush1.msra.mxu0 0.0
        %3280 = vmatprep.subr.mxu0 0.0
        %3281 = vmatpush1.msra.mxu0 0.0
        %3282 = vmatprep.subr.mxu0 0.0
        %3283 = vmatpush1.msra.mxu0 0.0
        %3284 = vmatprep.subr.mxu0 0.0
        %3285 = vmatpush1.msra.mxu0 0.0
        %3286 = vmatprep.subr.mxu0 0.0
        %3287 = vmatpush1.msra.mxu0 0.0
        %3288 = vmatprep.subr.mxu0 0.0
        %3289 = vmatpush1.msra.mxu0 0.0
        %3290 = vmatprep.subr.mxu0 0.0
        %3291 = vmatpush1.msra.mxu0 0.0
        %3292 = vmatprep.subr.mxu0 0.0
        %3293 = vmatpush1.msra.mxu0 0.0
        %3294 = vmatprep.subr.mxu0 0.0
        %3295 = vmatpush1.msra.mxu0 0.0
        %3296 = vmatprep.subr.mxu0 0.0
        %3297 = vmatpush1.msra.mxu0 0.0
        %3298 = vmatprep.subr.mxu0 0.0
        %3299 = vmatpush1.msra.mxu0 0.0
        %3300 = vmatprep.subr.mxu0 0.0
        %3301 = vmatpush1.msra.mxu0 0.0
        %3302 = vmatprep.subr.mxu0 0.0
        %3303 = vmatpush1.msra.mxu0 0.0
        %3304 = vmatprep.subr.mxu0 0.0
        %3305 = vmatpush1.msra.mxu0 0.0
        %3306 = vmatprep.subr.mxu0 0.0
        %3307 = vmatpush1.msra.mxu0 0.0
        %3308 = vmatprep.subr.mxu0 0.0
        %3309 = vmatpush1.msra.mxu0 %v3264
        %3310 = vmatprep.subr.mxu0 0.0
        %3311 = vmatpush2.msra.mxu0 0.0
        %3312 = vmatprep.subr.mxu0 0.0
        %3313 = vmatpush2.msra.mxu0 0.0
        %3314 = vmatprep.subr.mxu0 0.0
        %3315 = vmatpush2.msra.mxu0 0.0
        %3316 = vmatprep.subr.mxu0 0.0
        %3317 = vmatpush2.msra.mxu0 0.0
        %3318 = vmatprep.subr.mxu0 0.0
        %3319 = vmatpush2.msra.mxu0 0.0
        %3320 = vmatprep.subr.mxu0 0.0
        %3321 = vmatpush2.msra.mxu0 0.0
        %3322 = vmatprep.subr.mxu0 0.0
        %3323 = vmatpush2.msra.mxu0 0.0
        %3324 = vmatprep.subr.mxu0 0.0
        %3325 = vmatpush2.msra.mxu0 0.0
        %3326 = vmatprep.subr.mxu0 0.0
        %3327 = vmatpush2.msra.mxu0 0.0
        %3328 = vmatprep.subr.mxu0 0.0
        %3329 = vmatpush2.msra.mxu0 0.0
        %3330 = vmatprep.subr.mxu0 0.0
        %3331 = vmatpush2.msra.mxu0 0.0
        %3332 = vmatprep.subr.mxu0 0.0
        %3333 = vmatpush2.msra.mxu0 0.0
        %3334 = vmatprep.subr.mxu0 0.0
        %3335 = vmatpush2.msra.mxu0 0.0
        %3336 = vmatprep.subr.mxu0 0.0
        %3337 = vmatpush2.msra.mxu0 0.0
        %3338 = vmatprep.subr.mxu0 0.0
        %3339 = vmatpush2.msra.mxu0 0.0
        %3340 = vmatprep.subr.mxu0 0.0
        %3341 = vmatpush2.msra.mxu0 0.0
        %3342 = vmatprep.mubr.f32.mxu0 0.0
        %3343 = vmatmul.mubr.f32.gmra.mxu0 %v3276
        %v3344 = vpop.f32.mrf.mxu0
        %v3345 = vadd.f32 0.0, %v3344
        %v3346 = vpop.f32.mrf.mxu0
        %3347 = vdwg.mxu0
        %v3349 = vsel %vm442, %v3273, 0
        %3351 = vmatprep.subr.mxu0 0.0
        %3352 = vmatpush1.msra.mxu0 0.0
        %3353 = vmatprep.subr.mxu0 0.0
        %3354 = vmatpush1.msra.mxu0 0.0
        %3355 = vmatprep.subr.mxu0 0.0
        %3356 = vmatpush1.msra.mxu0 0.0
        %3357 = vmatprep.subr.mxu0 0.0
        %3358 = vmatpush1.msra.mxu0 0.0
        %3359 = vmatprep.subr.mxu0 0.0
        %3360 = vmatpush1.msra.mxu0 0.0
        %3361 = vmatprep.subr.mxu0 0.0
        %3362 = vmatpush1.msra.mxu0 0.0
        %3363 = vmatprep.subr.mxu0 0.0
        %3364 = vmatpush1.msra.mxu0 0.0
        %3365 = vmatprep.subr.mxu0 0.0
        %3366 = vmatpush1.msra.mxu0 0.0
        %3367 = vmatprep.subr.mxu0 0.0
        %3368 = vmatpush1.msra.mxu0 0.0
        %3369 = vmatprep.subr.mxu0 0.0
        %3370 = vmatpush1.msra.mxu0 0.0
        %3371 = vmatprep.subr.mxu0 0.0
        %3372 = vmatpush1.msra.mxu0 0.0
        %3373 = vmatprep.subr.mxu0 0.0
        %3374 = vmatpush1.msra.mxu0 0.0
        %3375 = vmatprep.subr.mxu0 0.0
        %3376 = vmatpush1.msra.mxu0 0.0
        %3377 = vmatprep.subr.mxu0 0.0
        %3378 = vmatpush1.msra.mxu0 0.0
        %3379 = vmatprep.subr.mxu0 0.0
        %3380 = vmatpush1.msra.mxu0 0.0
        %3381 = vmatprep.subr.mxu0 0.0
        %3382 = vmatpush1.msra.mxu0 %v3264
        %3383 = vmatprep.subr.mxu0 0.0
        %3384 = vmatpush2.msra.mxu0 0.0
        %3385 = vmatprep.subr.mxu0 0.0
        %3386 = vmatpush2.msra.mxu0 0.0
        %3387 = vmatprep.subr.mxu0 0.0
        %3388 = vmatpush2.msra.mxu0 0.0
        %3389 = vmatprep.subr.mxu0 0.0
        %3390 = vmatpush2.msra.mxu0 0.0
        %3391 = vmatprep.subr.mxu0 0.0
        %3392 = vmatpush2.msra.mxu0 0.0
        %3393 = vmatprep.subr.mxu0 0.0
        %3394 = vmatpush2.msra.mxu0 0.0
        %3395 = vmatprep.subr.mxu0 0.0
        %3396 = vmatpush2.msra.mxu0 0.0
        %3397 = vmatprep.subr.mxu0 0.0
        %3398 = vmatpush2.msra.mxu0 0.0
        %3399 = vmatprep.subr.mxu0 0.0
        %3400 = vmatpush2.msra.mxu0 0.0
        %3401 = vmatprep.subr.mxu0 0.0
        %3402 = vmatpush2.msra.mxu0 0.0
        %3403 = vmatprep.subr.mxu0 0.0
        %3404 = vmatpush2.msra.mxu0 0.0
        %3405 = vmatprep.subr.mxu0 0.0
        %3406 = vmatpush2.msra.mxu0 0.0
        %3407 = vmatprep.subr.mxu0 0.0
        %3408 = vmatpush2.msra.mxu0 0.0
        %3409 = vmatprep.subr.mxu0 0.0
        %3410 = vmatpush2.msra.mxu0 0.0
        %3411 = vmatprep.subr.mxu0 0.0
        %3412 = vmatpush2.msra.mxu0 0.0
        %3413 = vmatprep.subr.mxu0 0.0
        %3414 = vmatpush2.msra.mxu0 0.0
        %3415 = vmatprep.mubr.f32.mxu0 0.0
        %3416 = vmatmul.mubr.f32.gmra.mxu0 %v3349
        %v3417 = vpop.f32.mrf.mxu0
        %v3418 = vadd.f32 %v3345, %v3417
        %v3419 = vpop.f32.mrf.mxu0
        %3420 = vdwg.mxu0
        %v3421 = vmul.f32 %v3261, %v3418
        %3422 = vst.msk [vmem:[%s380] sm:$0xff] %vm3262, %v3421
        %s3423 = sand.u32 %s158, 1
        %s3424 = scalar_lea.sflag [#allocation3], %s3423
        %s3425 = sand.u32 %s158, 1
        %s3426 = smul.addr %s3425, 8
        %s3427 = scalar_lea.vmem [#allocation2], %s3426
        %s3428 = sand.u32 %s30, 1
        %s3429 = scalar_lea.sflag [#allocation5], %s3428
        %s3430 = sand.u32 %s184, 1
        %s3431 = smul.addr %s3430, 8
        %s3432 = scalar_lea.vmem [#allocation4], %s3431
        %p3433 = scmp.lt.s32.totalorder %s30, 1
        %s3434 = scalar_select %p3433, %s30, 1
        %s3435 = scalar_lea.vmem %s7, %s3434
        %s3436 = sand.u32 %s30, 1
        %s3437 = scalar_lea.sflag [#allocation5], %s3436
        %s3438 = sand.u32 %s236, 1
        %s3439 = smul.addr %s3438, 8
        %s3440 = scalar_lea.vmem [#allocation6], %s3439
        %s3441 = sand.u32 %s262, 1
        %s3442 = scalar_lea.sflag [#allocation8], %s3441
        %s3443 = sand.u32 %s262, 1
        %s3444 = smul.addr %s3443, 8
        %s3445 = scalar_lea.vmem [#allocation7], %s3444
        // Predicated region
        $region41: #{tpu_custom_call.1} parent=39 // pred_check
          %p3446 = pneg %p168
        $region42: #{tpu_custom_call.1} parent=39 // pred_check_branch
          %3448 = sbr.rel (%p3446) target = $region44
        $region43: #{tpu_custom_call.1} parent=39 // pred_region
          %s3450 = ssub.s32 128, 128
          %3451 = vsyncadd %s3424, %s3450
          %s3452 = smul.addr %s30, 128
          %s3453 = scalar_lea.hbm %s5, %s3452
          %s3455 = sshll.u32 %s3427, 4
          %s3456 = int_to_ptr.vmem [resolvable:$true] %s3455
          %3458 = dma.vmem_to_hbm [thread:$0]  %s3456, 128, %s3453, %s3424
        $region44: #{tpu_custom_call.1} parent=39 // pred_fallthru
          _
        // Predicated region
        $region45: #{tpu_custom_call.1} parent=39 // pred_check
          %p3459 = pneg %p194
        $region46: #{tpu_custom_call.1} parent=39 // pred_check_branch
          %3461 = sbr.rel (%p3459) target = $region48
        $region47: #{tpu_custom_call.1} parent=39 // pred_region
          %s3463 = ssub.s32 128, 128
          %3464 = vsyncadd %s3429, %s3463
          %s3465 = smul.addr %s30, 128
          %s3466 = scalar_lea.hbm %s6, %s3465
          %s3468 = sshll.u32 %s3432, 4
          %s3469 = int_to_ptr.vmem [resolvable:$true] %s3468
          %3471 = dma.vmem_to_hbm [thread:$0]  %s3469, 128, %s3466, %s3429
        $region48: #{tpu_custom_call.1} parent=39 // pred_fallthru
          _
        // Predicated region
        $region49: #{tpu_custom_call.1} parent=39 // pred_check
          %p3472 = pneg %p220
        $region50: #{tpu_custom_call.1} parent=39 // pred_check_branch
          %3474 = sbr.rel (%p3472) target = $region52
        $region51: #{tpu_custom_call.1} parent=39 // pred_region
          _
        $region52: #{tpu_custom_call.1} parent=39 // pred_fallthru
          _
        // Predicated region
        $region53: #{tpu_custom_call.1} parent=39 // pred_check
          %p3475 = pneg %p246
        $region54: #{tpu_custom_call.1} parent=39 // pred_check_branch
          %3477 = sbr.rel (%p3475) target = $region56
        $region55: #{tpu_custom_call.1} parent=39 // pred_region
          %s3479 = ssub.s32 128, 128
          %3480 = vsyncadd %s3437, %s3479
          %s3481 = smul.addr %s30, 128
          %s3482 = scalar_lea.hbm %s8, %s3481
          %s3484 = sshll.u32 %s3440, 4
          %s3485 = int_to_ptr.vmem [resolvable:$true] %s3484
          %3487 = dma.vmem_to_hbm [thread:$0]  %s3485, 128, %s3482, %s3437
        $region56: #{tpu_custom_call.1} parent=39 // pred_fallthru
          _
        // Predicated region
        $region57: #{tpu_custom_call.1} parent=39 // pred_check
          %p3488 = pneg %p272
        $region58: #{tpu_custom_call.1} parent=39 // pred_check_branch
          %3490 = sbr.rel (%p3488) target = $region60
        $region59: #{tpu_custom_call.1} parent=39 // pred_region
          %s3492 = ssub.s32 128, 128
          %3493 = vsyncadd %s3442, %s3492
          %s3494 = smul.addr %s30, 128
          %s3495 = scalar_lea.hbm %s9, %s3494
          %s3497 = sshll.u32 %s3445, 4
          %s3498 = int_to_ptr.vmem [resolvable:$true] %s3497
          %3500 = dma.vmem_to_hbm [thread:$0]  %s3498, 128, %s3495, %s3442
        $region60: #{tpu_custom_call.1} parent=39 // pred_fallthru
          _
      $region40: #{tpu_custom_call.1} parent=5 // pred_fallthru
        _
      %p3501 = scmp.le.s32.totalorder 2, %s25
      // Predicated region
      $region61: #{tpu_custom_call.1} parent=5 // pred_check
        %p3502 = pneg %p3501
      $region62: #{tpu_custom_call.1} parent=5 // pred_check_branch
        %3504 = sbr.rel (%p3502) target = $region64
      $region63: #{tpu_custom_call.1} parent=5 // pred_region
        %s3505 = ssub.s32 %s25, 2
        // Predicated region
        $region65: #{tpu_custom_call.1} parent=63 // pred_check
          %p3506 = pneg %p174
        $region66: #{tpu_custom_call.1} parent=63 // pred_check_branch
          %3508 = sbr.rel (%p3506) target = $region68
        $region67: #{tpu_custom_call.1} parent=63 // pred_region
          %s3509 = sand.u32 %s159, 1
          %s3510 = scalar_lea.sflag [#allocation3], %s3509
          %s3511 = sand.u32 %s159, 1
          %s3512 = smul.addr %s3511, 8
          %s3513 = scalar_lea.vmem [#allocation2], %s3512
          %3514 = dma.done %s3510, 128
        $region68: #{tpu_custom_call.1} parent=63 // pred_fallthru
          _
        // Predicated region
        $region69: #{tpu_custom_call.1} parent=63 // pred_check
          %p3515 = pneg %p200
        $region70: #{tpu_custom_call.1} parent=63 // pred_check_branch
          %3517 = sbr.rel (%p3515) target = $region72
        $region71: #{tpu_custom_call.1} parent=63 // pred_region
          %s3518 = sand.u32 %s31, 1
          %s3519 = scalar_lea.sflag [#allocation5], %s3518
          %s3520 = sand.u32 %s185, 1
          %s3521 = smul.addr %s3520, 8
          %s3522 = scalar_lea.vmem [#allocation4], %s3521
          %3523 = dma.done %s3519, 128
        $region72: #{tpu_custom_call.1} parent=63 // pred_fallthru
          _
        // Predicated region
        $region73: #{tpu_custom_call.1} parent=63 // pred_check
          %p3524 = pneg %p226
        $region74: #{tpu_custom_call.1} parent=63 // pred_check_branch
          %3526 = sbr.rel (%p3524) target = $region76
        $region75: #{tpu_custom_call.1} parent=63 // pred_region
          %p3527 = scmp.lt.s32.totalorder %s31, 1
          %s3528 = scalar_select %p3527, %s31, 1
          %s3529 = scalar_lea.vmem %s7, %s3528
        $region76: #{tpu_custom_call.1} parent=63 // pred_fallthru
          _
        // Predicated region
        $region77: #{tpu_custom_call.1} parent=63 // pred_check
          %p3530 = pneg %p252
        $region78: #{tpu_custom_call.1} parent=63 // pred_check_branch
          %3532 = sbr.rel (%p3530) target = $region80
        $region79: #{tpu_custom_call.1} parent=63 // pred_region
          %s3533 = sand.u32 %s31, 1
          %s3534 = scalar_lea.sflag [#allocation5], %s3533
          %s3535 = sand.u32 %s237, 1
          %s3536 = smul.addr %s3535, 8
          %s3537 = scalar_lea.vmem [#allocation6], %s3536
          %3538 = dma.done %s3534, 128
        $region80: #{tpu_custom_call.1} parent=63 // pred_fallthru
          _
        // Predicated region
        $region81: #{tpu_custom_call.1} parent=63 // pred_check
          %p3539 = pneg %p278
        $region82: #{tpu_custom_call.1} parent=63 // pred_check_branch
          %3541 = sbr.rel (%p3539) target = $region84
        $region83: #{tpu_custom_call.1} parent=63 // pred_region
          %s3542 = sand.u32 %s263, 1
          %s3543 = scalar_lea.sflag [#allocation8], %s3542
          %s3544 = sand.u32 %s263, 1
          %s3545 = smul.addr %s3544, 8
          %s3546 = scalar_lea.vmem [#allocation7], %s3545
          %3547 = dma.done %s3543, 128
        $region84: #{tpu_custom_call.1} parent=63 // pred_fallthru
          _
      $region64: #{tpu_custom_call.1} parent=5 // pred_fallthru
        _
    $region6: #{tpu_custom_call.1} parent=1 // loop_footer
      %s29 = sadd.s32 1, %s25
    $region7: #{tpu_custom_call.1} parent=1 // loop_footer_branch
      %24 = sbr.rel target = $region3
    $region8: #{tpu_custom_call.1} parent=1 // loop_exit
      _
    %3548 = vsyncpa [#allocation3], 1
    %s3549 = scalar_lea.sflag [#allocation3], 1
    %3550 = vsyncpa %s3549, 1
    %3551 = vsyncpa [#allocation5], 1
    %s3552 = scalar_lea.sflag [#allocation5], 1
    %3553 = vsyncpa %s3552, 1
    %3554 = vsyncpa [#allocation8], 1
    %s3555 = scalar_lea.sflag [#allocation8], 1
    %3556 = vsyncpa %s3555, 1

</llo_original>
